<compile_context>
chip_gen: v6e
topology: v6e:2x2x1
jax: 0.10.0
libtpu: 0.0.40
codegen_flags: <defaults>
</compile_context>

<pallas_src>
import functools
import math

import jax
import jax.numpy as jnp
from jax.experimental import pallas as pl
from jax.experimental.pallas import tpu as pltpu

# ---------------- synthetic "small BERT" config ----------------
PAD_ID = 0
VOCAB = 64
HIDDEN = 32
N_HEADS = 4
HEAD_DIM = HIDDEN // N_HEADS
INTER = 64
N_LAYERS = 2
MAX_POS = 16
SEQ = 8
BATCH = 2
MAX_SEG_LEN = 3
LN_EPS = 1e-12
NEG_BIAS = -1e30     # safe large-negative mask bias (finfo.min risks -inf -> NaN rows)


# ---------------- in-kernel math helpers ----------------
def _layernorm(x, gamma, beta):
    mean = jnp.mean(x, axis=-1, keepdims=True)
    var = jnp.mean((x - mean) ** 2, axis=-1, keepdims=True)
    return (x - mean) * jax.lax.rsqrt(var + LN_EPS) * gamma + beta


def _gelu(x):
    # tanh-approximate GELU: single EUP op (jnp.tanh) instead of the erf
    # polynomial's ~10 VPU mul/add/select ops.  |delta| vs exact erf-GELU ~1e-3.
    c = math.sqrt(2.0 / math.pi)
    return 0.5 * x * (1.0 + jnp.tanh(c * (x + 0.044715 * x * x * x)))


# ---------------- fused Pallas kernel ----------------
def fused_encoder_kernel(max_seg_len,
                         x_ref, emb_ref, pos_ref, tt_ref, eg_ref, eb_ref,
                         wq_ref, wk_ref, wv_ref, bq_ref, bk_ref, bv_ref,
                         wo_ref, bo_ref, g1_ref, be1_ref,
                         w1_ref, b1_ref, w2_ref, b2_ref, g2_ref, be2_ref,
                         out_ref):
    B, S = x_ref.shape
    T = B * S
    H, NH, D = HIDDEN, N_HEADS, HEAD_DIM

    # ---- additive attention bias: built once, reused by every layer ----
    pad_ok = x_ref[...] != PAD_ID                                    # (B, S): key j valid
    if max_seg_len:
        ii = jax.lax.broadcasted_iota(jnp.int32, (S, S), 0)          # query index
        jj = jax.lax.broadcasted_iota(jnp.int32, (S, S), 1)          # key index
        d = jj - ii
        seg_ok = jnp.logical_not(jnp.logical_and(d >= 1, d <= max_seg_len))   # (S, S)
        mask = jnp.logical_and(pad_ok[:, None, :], seg_ok[None, :, :])        # (B, S, S)
    else:
        mask = jnp.broadcast_to(pad_ok[:, None, :], (B, S, S))
    bias = jnp.where(mask, 0.0, NEG_BIAS).astype(jnp.float32)        # (B, S, S)
    bias_all = jnp.concatenate([bias] * NH, axis=0)                  # (NH*B, S, S), built once

    # ---- per-head lane masks (replace lane slicing / head concatenation) ----
    lane = jax.lax.broadcasted_iota(jnp.int32, (1, 1, H), 2)
    head_masks = [jnp.logical_and(lane >= n * D, lane < (n + 1) * D) for n in range(NH)]

    # ---- embedding sum + LayerNorm ----
    pe = pos_ref[...] + tt_ref[...]                                  # (S, H)
    h = emb_ref[...].reshape(B, S, H) + pe[None, :, :]               # (B, S, H)
    h2 = _layernorm(h.reshape(T, H), eg_ref[...], eb_ref[...])       # (T, H)

    scale = 1.0 / math.sqrt(D)
    for li in range(N_LAYERS):              # static layer loop (fully unrolled)
        # ----- full-width Q/K/V projections: 3 wide MXU pushes -----
        q = jnp.dot(h2, wq_ref[li], preferred_element_type=jnp.float32) + bq_ref[li]
        k = jnp.dot(h2, wk_ref[li], preferred_element_type=jnp.float32) + bk_ref[li]
        v = jnp.dot(h2, wv_ref[li], preferred_element_type=jnp.float32) + bv_ref[li]
        q3 = q.reshape(B, S, H)             # leading-dim split only
        k3 = k.reshape(B, S, H)
        v3 = v.reshape(B, S, H)

        # ----- per-head scores via full-H contraction against lane-masked K -----
        # zeros outside head n's columns contribute 0, so this equals q_h @ k_h^T.
        s_list = [
            jnp.einsum('bqh,bkh->bqk', q3, jnp.where(head_masks[n], k3, 0.0),
                       preferred_element_type=jnp.float32)
            for n in range(NH)
        ]
        # ----- bias add + softmax hoisted over all heads at once -----
        s_all = jnp.concatenate(s_list, axis=0) * scale + bias_all   # (NH*B, S, S)
        s_all = s_all - jnp.max(s_all, axis=-1, keepdims=True)
        e = jnp.exp(s_all)
        p_all = e / jnp.sum(e, axis=-1, keepdims=True)               # exact divide

        # ----- per-head context lands directly in its own lane columns -----
        ctx = jnp.einsum('bqk,bkh->bqh', p_all[0:B],
                         jnp.where(head_masks[0], v3, 0.0),
                         preferred_element_type=jnp.float32)
        for n in range(1, NH):
            ctx = ctx + jnp.einsum('bqk,bkh->bqh', p_all[n * B:(n + 1) * B],
                                   jnp.where(head_masks[n], v3, 0.0),
                                   preferred_element_type=jnp.float32)

        # ----- single full-width output projection -----
        attn = jnp.dot(ctx.reshape(T, H), wo_ref[li],
                       preferred_element_type=jnp.float32) + bo_ref[li]
        h2 = _layernorm(h2 + attn, g1_ref[li], be1_ref[li])

        # ----- GELU feed-forward -----
        ff = _gelu(jnp.dot(h2, w1_ref[li], preferred_element_type=jnp.float32) + b1_ref[li])
        ff2 = jnp.dot(ff, w2_ref[li], preferred_element_type=jnp.float32) + b2_ref[li]
        h2 = _layernorm(h2 + ff2, g2_ref[li], be2_ref[li])

    out_ref[...] = h2


# ---------------- params: standard layout + kernel packing ----------------
def init_params(key):
    ks = jax.random.split(key, 4 + N_LAYERS)
    std = 0.02
    p = {
        "word_emb": std * jax.random.normal(ks[0], (VOCAB, HIDDEN), jnp.float32),
        "pos_emb": std * jax.random.normal(ks[1], (MAX_POS, HIDDEN), jnp.float32),
        "tok_type_emb": std * jax.random.normal(ks[2], (2, HIDDEN), jnp.float32),
        "emb_ln_g": jnp.ones((1, HIDDEN), jnp.float32),
        "emb_ln_b": jnp.zeros((1, HIDDEN), jnp.float32),
        "layers": [],
    }
    for li in range(N_LAYERS):
        lk = jax.random.split(ks[4 + li], 4)
        p["layers"].append({
            "wqkv": std * jax.random.normal(lk[0], (HIDDEN, 3 * HIDDEN), jnp.float32),
            "bqkv": jnp.zeros((1, 3 * HIDDEN), jnp.float32),
            "wo": std * jax.random.normal(lk[1], (HIDDEN, HIDDEN), jnp.float32),
            "bo": jnp.zeros((1, HIDDEN), jnp.float32),
            "ln1_g": jnp.ones((1, HIDDEN), jnp.float32),
            "ln1_b": jnp.zeros((1, HIDDEN), jnp.float32),
            "w1": std * jax.random.normal(lk[2], (HIDDEN, INTER), jnp.float32),
            "b1": jnp.zeros((1, INTER), jnp.float32),
            "w2": std * jax.random.normal(lk[3], (INTER, HIDDEN), jnp.float32),
            "b2": jnp.zeros((1, HIDDEN), jnp.float32),
            "ln2_g": jnp.ones((1, HIDDEN), jnp.float32),
            "ln2_b": jnp.zeros((1, HIDDEN), jnp.float32),
        })
    p["packed"] = pack_params(p)
    return p


def pack_params(params):
    """Stack the per-layer weights along a leading layer axis.  Q/K/V and Wo
    stay full-width (H, H); column/row ordering is the standard head-major
    BERT layout, matching the per-head lane masks in the kernel."""
    H = HIDDEN

    def stk(fn):
        return jnp.stack([fn(lp) for lp in params["layers"]])

    return {
        "wq": stk(lambda lp: lp["wqkv"][:, 0 * H:1 * H]),
        "wk": stk(lambda lp: lp["wqkv"][:, 1 * H:2 * H]),
        "wv": stk(lambda lp: lp["wqkv"][:, 2 * H:3 * H]),
        "bq": stk(lambda lp: lp["bqkv"][:, 0 * H:1 * H]),
        "bk": stk(lambda lp: lp["bqkv"][:, 1 * H:2 * H]),
        "bv": stk(lambda lp: lp["bqkv"][:, 2 * H:3 * H]),
        "wo": stk(lambda lp: lp["wo"]),
        "bo": stk(lambda lp: lp["bo"]),
        "ln1_g": stk(lambda lp: lp["ln1_g"]),
        "ln1_b": stk(lambda lp: lp["ln1_b"]),
        "w1": stk(lambda lp: lp["w1"]),
        "b1": stk(lambda lp: lp["b1"]),
        "w2": stk(lambda lp: lp["w2"]),
        "b2": stk(lambda lp: lp["b2"]),
        "ln2_g": stk(lambda lp: lp["ln2_g"]),
        "ln2_b": stk(lambda lp: lp["ln2_b"]),
    }


# ---------------- cost model for the scheduler hint ----------------
def _flop_estimate(B, S):
    T = B * S
    per_layer = (
        3 * 2 * T * HIDDEN * HIDDEN                # Q/K/V projections
        + 2 * N_HEADS * 2 * B * S * S * HIDDEN     # scores + context (full-H contraction)
        + 2 * T * HIDDEN * HIDDEN                  # Wo
        + 2 * 2 * T * HIDDEN * INTER               # FFN up + down
        + 30 * T * HIDDEN + 10 * T * INTER         # LN / residual / GELU poly (rough)
    )
    flops = N_LAYERS * per_layer + 12 * T * HIDDEN
    transcendentals = N_LAYERS * (N_HEADS * B * S * S + T * INTER + 3 * T) + T
    return int(flops), int(transcendentals)


# ---------------- forward ----------------
def segment_bert_forward(x, params, max_seg_len=MAX_SEG_LEN):
    B, S = x.shape
    # Embedding lookup (data-dependent gather) kept in XLA glue; it is also a
    # returned output of the module.
    embeds = jnp.take(params["word_emb"], x, axis=0)            # (B, S, H)
    pk = params["packed"]

    operands = (
        x,
        embeds.reshape(B * S, HIDDEN),
        params["pos_emb"][:S],            # position ids 0..S-1
        params["tok_type_emb"][0:1],      # token_type_ids = 0
        params["emb_ln_g"], params["emb_ln_b"],
        pk["wq"], pk["wk"], pk["wv"], pk["bq"], pk["bk"], pk["bv"],
        pk["wo"], pk["bo"], pk["ln1_g"], pk["ln1_b"],
        pk["w1"], pk["b1"], pk["w2"], pk["b2"], pk["ln2_g"], pk["ln2_b"],
    )

    vmem_spec = pl.BlockSpec(memory_space=pltpu.MemorySpace.VMEM)
    flops, transcendentals = _flop_estimate(B, S)
    bytes_accessed = sum(int(a.size) * a.dtype.itemsize for a in operands) \
        + B * S * HIDDEN * 4

    kernel = functools.partial(fused_encoder_kernel, max_seg_len)
    h2 = pl.pallas_call(
        kernel,
        out_shape=jax.ShapeDtypeStruct((B * S, HIDDEN), jnp.float32),
        # No grid: a single invocation with every (tiny) operand resident in
        # VMEM for the whole fused forward pass.
        in_specs=[vmem_spec] * len(operands),
        out_specs=vmem_spec,
        cost_estimate=pl.CostEstimate(flops=flops,
                                      transcendentals=transcendentals,
                                      bytes_accessed=int(bytes_accessed)),
    )(*operands)
    h = h2.reshape(B, S, HIDDEN)

    # SegmentOutput(logits=None, embeds=embeds, decoder_hidden=last_hidden_state)
    return {"logits": None, "embeds": embeds, "decoder_hidden": h}


if __name__ == "__main__":
    key = jax.random.PRNGKey(0)
    pkey, xkey = jax.random.split(key)
    params = init_params(pkey)

    # deterministic token ids in [1, VOCAB), with some trailing PAD tokens
    x = jax.random.randint(xkey, (BATCH, SEQ), 1, VOCAB, dtype=jnp.int32)
    x = x.at[0, -2:].set(PAD_ID)
    x = x.at[1, -1:].set(PAD_ID)

    out = segment_bert_forward(x, params, max_seg_len=MAX_SEG_LEN)
    jax.block_until_ready(out["decoder_hidden"])
    jax.block_until_ready(out["embeds"])

    assert out["embeds"].shape == (BATCH, SEQ, HIDDEN)
    assert out["decoder_hidden"].shape == (BATCH, SEQ, HIDDEN)
    assert bool(jnp.all(jnp.isfinite(out["decoder_hidden"])))
    print("KERNEL_OK")
</pallas_src>

<mosaic_0001>
module attributes {stable_mosaic.version = 11 : i64} {
  func.func @fused_encoder_kernel(%arg0: memref<2x8xi32, #tpu.memory_space<vmem>>, %arg1: memref<16x32xf32, #tpu.memory_space<vmem>>, %arg2: memref<8x32xf32, #tpu.memory_space<vmem>>, %arg3: memref<1x32xf32, #tpu.memory_space<vmem>>, %arg4: memref<1x32xf32, #tpu.memory_space<vmem>>, %arg5: memref<1x32xf32, #tpu.memory_space<vmem>>, %arg6: memref<2x32x32xf32, #tpu.memory_space<vmem>>, %arg7: memref<2x32x32xf32, #tpu.memory_space<vmem>>, %arg8: memref<2x32x32xf32, #tpu.memory_space<vmem>>, %arg9: memref<2x1x32xf32, #tpu.memory_space<vmem>>, %arg10: memref<2x1x32xf32, #tpu.memory_space<vmem>>, %arg11: memref<2x1x32xf32, #tpu.memory_space<vmem>>, %arg12: memref<2x32x32xf32, #tpu.memory_space<vmem>>, %arg13: memref<2x1x32xf32, #tpu.memory_space<vmem>>, %arg14: memref<2x1x32xf32, #tpu.memory_space<vmem>>, %arg15: memref<2x1x32xf32, #tpu.memory_space<vmem>>, %arg16: memref<2x32x64xf32, #tpu.memory_space<vmem>>, %arg17: memref<2x1x64xf32, #tpu.memory_space<vmem>>, %arg18: memref<2x64x32xf32, #tpu.memory_space<vmem>>, %arg19: memref<2x1x32xf32, #tpu.memory_space<vmem>>, %arg20: memref<2x1x32xf32, #tpu.memory_space<vmem>>, %arg21: memref<2x1x32xf32, #tpu.memory_space<vmem>>, %arg22: memref<16x32xf32, #tpu.memory_space<vmem>>) attributes {dimension_semantics = [], scalar_prefetch = 0 : i64, scratch_operands = 0 : i64, tpu.core_type = #tpu.core_type<tc>} {
    %c0 = arith.constant 0 : index
    %c0_0 = arith.constant 0 : index
    %0 = vector.load %arg0[%c0, %c0_0] : memref<2x8xi32, #tpu.memory_space<vmem>>, vector<2x8xi32>
    %c0_i32 = arith.constant 0 : i32
    %1 = vector.broadcast %c0_i32 : i32 to vector<2x8xi32>
    %2 = arith.cmpi ne, %0, %1 : vector<2x8xi32>
    %3 = tpu.iota {dimensions = array<i32: 0>} : vector<8x8xi32>
    %4 = tpu.iota {dimensions = array<i32: 1>} : vector<8x8xi32>
    %5 = arith.subi %4, %3 : vector<8x8xi32>
    %c1_i32 = arith.constant 1 : i32
    %6 = vector.broadcast %c1_i32 : i32 to vector<8x8xi32>
    %7 = arith.cmpi sge, %5, %6 : vector<8x8xi32>
    %c3_i32 = arith.constant 3 : i32
    %8 = vector.broadcast %c3_i32 : i32 to vector<8x8xi32>
    %9 = arith.cmpi sle, %5, %8 : vector<8x8xi32>
    %10 = arith.andi %7, %9 : vector<8x8xi1>
    %cst = arith.constant dense<true> : vector<8x8xi1>
    %11 = arith.xori %10, %cst : vector<8x8xi1>
    %12 = vector.shape_cast %2 : vector<2x8xi1> to vector<2x1x8xi1>
    %13 = vector.shape_cast %11 : vector<8x8xi1> to vector<1x8x8xi1>
    %14 = vector.broadcast %12 : vector<2x1x8xi1> to vector<2x8x8xi1>
    %15 = vector.broadcast %13 : vector<1x8x8xi1> to vector<2x8x8xi1>
    %16 = arith.andi %14, %15 : vector<2x8x8xi1>
    %cst_1 = arith.constant 0.000000e+00 : f32
    %cst_2 = arith.constant -1.000000e+30 : f32
    %17 = vector.broadcast %cst_1 : f32 to vector<2x8x8xf32>
    %18 = vector.broadcast %cst_2 : f32 to vector<2x8x8xf32>
    %19 = arith.select %16, %17, %18 : vector<2x8x8xi1>, vector<2x8x8xf32>
    %20 = tpu.concatenate %19, %19, %19, %19 in 0 : vector<2x8x8xf32>, vector<2x8x8xf32>, vector<2x8x8xf32>, vector<2x8x8xf32> -> vector<8x8x8xf32>
    %21 = tpu.iota {dimensions = array<i32: 2>} : vector<1x1x32xi32>
    %c0_i32_3 = arith.constant 0 : i32
    %22 = vector.broadcast %c0_i32_3 : i32 to vector<1x1x32xi32>
    %23 = arith.cmpi sge, %21, %22 : vector<1x1x32xi32>
    %c8_i32 = arith.constant 8 : i32
    %24 = vector.broadcast %c8_i32 : i32 to vector<1x1x32xi32>
    %25 = arith.cmpi slt, %21, %24 : vector<1x1x32xi32>
    %26 = arith.andi %23, %25 : vector<1x1x32xi1>
    %c8_i32_4 = arith.constant 8 : i32
    %27 = vector.broadcast %c8_i32_4 : i32 to vector<1x1x32xi32>
    %28 = arith.cmpi sge, %21, %27 : vector<1x1x32xi32>
    %c16_i32 = arith.constant 16 : i32
    %29 = vector.broadcast %c16_i32 : i32 to vector<1x1x32xi32>
    %30 = arith.cmpi slt, %21, %29 : vector<1x1x32xi32>
    %31 = arith.andi %28, %30 : vector<1x1x32xi1>
    %c16_i32_5 = arith.constant 16 : i32
    %32 = vector.broadcast %c16_i32_5 : i32 to vector<1x1x32xi32>
    %33 = arith.cmpi sge, %21, %32 : vector<1x1x32xi32>
    %c24_i32 = arith.constant 24 : i32
    %34 = vector.broadcast %c24_i32 : i32 to vector<1x1x32xi32>
    %35 = arith.cmpi slt, %21, %34 : vector<1x1x32xi32>
    %36 = arith.andi %33, %35 : vector<1x1x32xi1>
    %c24_i32_6 = arith.constant 24 : i32
    %37 = vector.broadcast %c24_i32_6 : i32 to vector<1x1x32xi32>
    %38 = arith.cmpi sge, %21, %37 : vector<1x1x32xi32>
    %c32_i32 = arith.constant 32 : i32
    %39 = vector.broadcast %c32_i32 : i32 to vector<1x1x32xi32>
    %40 = arith.cmpi slt, %21, %39 : vector<1x1x32xi32>
    %41 = arith.andi %38, %40 : vector<1x1x32xi1>
    %c0_7 = arith.constant 0 : index
    %c0_8 = arith.constant 0 : index
    %42 = vector.load %arg2[%c0_7, %c0_8] : memref<8x32xf32, #tpu.memory_space<vmem>>, vector<8x32xf32>
    %c0_9 = arith.constant 0 : index
    %c0_10 = arith.constant 0 : index
    %43 = vector.load %arg3[%c0_9, %c0_10] : memref<1x32xf32, #tpu.memory_space<vmem>>, vector<1x32xf32>
    %44 = vector.broadcast %43 : vector<1x32xf32> to vector<8x32xf32>
    %45 = arith.addf %42, %44 : vector<8x32xf32>
    %c0_11 = arith.constant 0 : index
    %c0_12 = arith.constant 0 : index
    %46 = vector.load %arg1[%c0_11, %c0_12] : memref<16x32xf32, #tpu.memory_space<vmem>>, vector<16x32xf32>
    %47 = vector.shape_cast %46 : vector<16x32xf32> to vector<2x8x32xf32>
    %48 = vector.shape_cast %45 : vector<8x32xf32> to vector<1x8x32xf32>
    %49 = vector.broadcast %48 : vector<1x8x32xf32> to vector<2x8x32xf32>
    %50 = arith.addf %47, %49 : vector<2x8x32xf32>
    %51 = vector.shape_cast %50 : vector<2x8x32xf32> to vector<16x32xf32>
    %c0_13 = arith.constant 0 : index
    %c0_14 = arith.constant 0 : index
    %52 = vector.load %arg4[%c0_13, %c0_14] : memref<1x32xf32, #tpu.memory_space<vmem>>, vector<1x32xf32>
    %c0_15 = arith.constant 0 : index
    %c0_16 = arith.constant 0 : index
    %53 = vector.load %arg5[%c0_15, %c0_16] : memref<1x32xf32, #tpu.memory_space<vmem>>, vector<1x32xf32>
    %cst_17 = arith.constant dense<0.000000e+00> : vector<16xf32>
    %54 = vector.multi_reduction <add>, %51, %cst_17 [1] : vector<16x32xf32> to vector<16xf32>
    %55 = vector.shape_cast %54 : vector<16xf32> to vector<16x1xf32>
    %cst_18 = arith.constant 3.200000e+01 : f32
    %56 = vector.broadcast %cst_18 : f32 to vector<16x1xf32>
    %57 = arith.divf %55, %56 : vector<16x1xf32>
    %58 = vector.broadcast %57 : vector<16x1xf32> to vector<16x32xf32>
    %59 = arith.subf %51, %58 : vector<16x32xf32>
    %60 = arith.mulf %59, %59 : vector<16x32xf32>
    %cst_19 = arith.constant dense<0.000000e+00> : vector<16xf32>
    %61 = vector.multi_reduction <add>, %60, %cst_19 [1] : vector<16x32xf32> to vector<16xf32>
    %62 = vector.shape_cast %61 : vector<16xf32> to vector<16x1xf32>
    %cst_20 = arith.constant 3.200000e+01 : f32
    %63 = vector.broadcast %cst_20 : f32 to vector<16x1xf32>
    %64 = arith.divf %62, %63 : vector<16x1xf32>
    %65 = vector.broadcast %57 : vector<16x1xf32> to vector<16x32xf32>
    %66 = arith.subf %51, %65 : vector<16x32xf32>
    %cst_21 = arith.constant 9.99999996E-13 : f32
    %67 = vector.broadcast %cst_21 : f32 to vector<16x1xf32>
    %68 = arith.addf %64, %67 : vector<16x1xf32>
    %69 = math.rsqrt %68 : vector<16x1xf32>
    %70 = vector.broadcast %69 : vector<16x1xf32> to vector<16x32xf32>
    %71 = arith.mulf %66, %70 : vector<16x32xf32>
    %72 = vector.broadcast %52 : vector<1x32xf32> to vector<16x32xf32>
    %73 = arith.mulf %71, %72 : vector<16x32xf32>
    %74 = vector.broadcast %53 : vector<1x32xf32> to vector<16x32xf32>
    %75 = arith.addf %73, %74 : vector<16x32xf32>
    %c0_22 = arith.constant 0 : index
    %c0_23 = arith.constant 0 : index
    %c0_24 = arith.constant 0 : index
    %76 = vector.load %arg6[%c0_22, %c0_23, %c0_24] : memref<2x32x32xf32, #tpu.memory_space<vmem>>, vector<1x32x32xf32>
    %77 = vector.shape_cast %76 : vector<1x32x32xf32> to vector<32x32xf32>
    %cst_25 = arith.constant dense<0.000000e+00> : vector<16x32xf32>
    %78 = tpu.matmul %75, %77, %cst_25 {dimension_numbers = #tpu.dot_dimension_numbers<[1], [0], [0], [1], [0, 0, 1, 1], [], []>} : vector<16x32xf32>, vector<32x32xf32>, vector<16x32xf32> -> vector<16x32xf32>
    %c0_26 = arith.constant 0 : index
    %c0_27 = arith.constant 0 : index
    %c0_28 = arith.constant 0 : index
    %79 = vector.load %arg9[%c0_26, %c0_27, %c0_28] : memref<2x1x32xf32, #tpu.memory_space<vmem>>, vector<1x1x32xf32>
    %80 = vector.shape_cast %79 : vector<1x1x32xf32> to vector<1x32xf32>
    %81 = vector.broadcast %80 : vector<1x32xf32> to vector<16x32xf32>
    %82 = arith.addf %78, %81 : vector<16x32xf32>
    %c0_29 = arith.constant 0 : index
    %c0_30 = arith.constant 0 : index
    %c0_31 = arith.constant 0 : index
    %83 = vector.load %arg7[%c0_29, %c0_30, %c0_31] : memref<2x32x32xf32, #tpu.memory_space<vmem>>, vector<1x32x32xf32>
    %84 = vector.shape_cast %83 : vector<1x32x32xf32> to vector<32x32xf32>
    %cst_32 = arith.constant dense<0.000000e+00> : vector<16x32xf32>
    %85 = tpu.matmul %75, %84, %cst_32 {dimension_numbers = #tpu.dot_dimension_numbers<[1], [0], [0], [1], [0, 0, 1, 1], [], []>} : vector<16x32xf32>, vector<32x32xf32>, vector<16x32xf32> -> vector<16x32xf32>
    %c0_33 = arith.constant 0 : index
    %c0_34 = arith.constant 0 : index
    %c0_35 = arith.constant 0 : index
    %86 = vector.load %arg10[%c0_33, %c0_34, %c0_35] : memref<2x1x32xf32, #tpu.memory_space<vmem>>, vector<1x1x32xf32>
    %87 = vector.shape_cast %86 : vector<1x1x32xf32> to vector<1x32xf32>
    %88 = vector.broadcast %87 : vector<1x32xf32> to vector<16x32xf32>
    %89 = arith.addf %85, %88 : vector<16x32xf32>
    %c0_36 = arith.constant 0 : index
    %c0_37 = arith.constant 0 : index
    %c0_38 = arith.constant 0 : index
    %90 = vector.load %arg8[%c0_36, %c0_37, %c0_38] : memref<2x32x32xf32, #tpu.memory_space<vmem>>, vector<1x32x32xf32>
    %91 = vector.shape_cast %90 : vector<1x32x32xf32> to vector<32x32xf32>
    %cst_39 = arith.constant dense<0.000000e+00> : vector<16x32xf32>
    %92 = tpu.matmul %75, %91, %cst_39 {dimension_numbers = #tpu.dot_dimension_numbers<[1], [0], [0], [1], [0, 0, 1, 1], [], []>} : vector<16x32xf32>, vector<32x32xf32>, vector<16x32xf32> -> vector<16x32xf32>
    %c0_40 = arith.constant 0 : index
    %c0_41 = arith.constant 0 : index
    %c0_42 = arith.constant 0 : index
    %93 = vector.load %arg11[%c0_40, %c0_41, %c0_42] : memref<2x1x32xf32, #tpu.memory_space<vmem>>, vector<1x1x32xf32>
    %94 = vector.shape_cast %93 : vector<1x1x32xf32> to vector<1x32xf32>
    %95 = vector.broadcast %94 : vector<1x32xf32> to vector<16x32xf32>
    %96 = arith.addf %92, %95 : vector<16x32xf32>
    %97 = vector.shape_cast %82 : vector<16x32xf32> to vector<2x8x32xf32>
    %98 = vector.shape_cast %89 : vector<16x32xf32> to vector<2x8x32xf32>
    %99 = vector.shape_cast %96 : vector<16x32xf32> to vector<2x8x32xf32>
    %cst_43 = arith.constant 0.000000e+00 : f32
    %100 = vector.shape_cast %26 : vector<1x1x32xi1> to vector<1x1x32xi1>
    %101 = vector.broadcast %100 : vector<1x1x32xi1> to vector<2x8x32xi1>
    %102 = vector.broadcast %cst_43 : f32 to vector<2x8x32xf32>
    %103 = arith.select %101, %98, %102 : vector<2x8x32xi1>, vector<2x8x32xf32>
    "tpu.trace_start"() <{level = 10 : i32, message = "bqh,bkh->bqk"}> : () -> ()
    %cst_44 = arith.constant dense<0.000000e+00> : vector<2x8x8xf32>
    %104 = tpu.matmul %97, %103, %cst_44 {dimension_numbers = #tpu.dot_dimension_numbers<[2], [2], [1], [1], [0, 0, 0, 1, 1, 1], [0], [0]>} : vector<2x8x32xf32>, vector<2x8x32xf32>, vector<2x8x8xf32> -> vector<2x8x8xf32>
    %cst_45 = arith.constant 0.000000e+00 : f32
    "tpu.trace_stop"() : () -> ()
    %105 = vector.shape_cast %31 : vector<1x1x32xi1> to vector<1x1x32xi1>
    %106 = vector.broadcast %105 : vector<1x1x32xi1> to vector<2x8x32xi1>
    %107 = vector.broadcast %cst_45 : f32 to vector<2x8x32xf32>
    %108 = arith.select %106, %98, %107 : vector<2x8x32xi1>, vector<2x8x32xf32>
    "tpu.trace_start"() <{level = 10 : i32, message = "bqh,bkh->bqk"}> : () -> ()
    %cst_46 = arith.constant dense<0.000000e+00> : vector<2x8x8xf32>
    %109 = tpu.matmul %97, %108, %cst_46 {dimension_numbers = #tpu.dot_dimension_numbers<[2], [2], [1], [1], [0, 0, 0, 1, 1, 1], [0], [0]>} : vector<2x8x32xf32>, vector<2x8x32xf32>, vector<2x8x8xf32> -> vector<2x8x8xf32>
    %cst_47 = arith.constant 0.000000e+00 : f32
    "tpu.trace_stop"() : () -> ()
    %110 = vector.shape_cast %36 : vector<1x1x32xi1> to vector<1x1x32xi1>
    %111 = vector.broadcast %110 : vector<1x1x32xi1> to vector<2x8x32xi1>
    %112 = vector.broadcast %cst_47 : f32 to vector<2x8x32xf32>
    %113 = arith.select %111, %98, %112 : vector<2x8x32xi1>, vector<2x8x32xf32>
    "tpu.trace_start"() <{level = 10 : i32, message = "bqh,bkh->bqk"}> : () -> ()
    %cst_48 = arith.constant dense<0.000000e+00> : vector<2x8x8xf32>
    %114 = tpu.matmul %97, %113, %cst_48 {dimension_numbers = #tpu.dot_dimension_numbers<[2], [2], [1], [1], [0, 0, 0, 1, 1, 1], [0], [0]>} : vector<2x8x32xf32>, vector<2x8x32xf32>, vector<2x8x8xf32> -> vector<2x8x8xf32>
    %cst_49 = arith.constant 0.000000e+00 : f32
    "tpu.trace_stop"() : () -> ()
    %115 = vector.shape_cast %41 : vector<1x1x32xi1> to vector<1x1x32xi1>
    %116 = vector.broadcast %115 : vector<1x1x32xi1> to vector<2x8x32xi1>
    %117 = vector.broadcast %cst_49 : f32 to vector<2x8x32xf32>
    %118 = arith.select %116, %98, %117 : vector<2x8x32xi1>, vector<2x8x32xf32>
    "tpu.trace_start"() <{level = 10 : i32, message = "bqh,bkh->bqk"}> : () -> ()
    %cst_50 = arith.constant dense<0.000000e+00> : vector<2x8x8xf32>
    %119 = tpu.matmul %97, %118, %cst_50 {dimension_numbers = #tpu.dot_dimension_numbers<[2], [2], [1], [1], [0, 0, 0, 1, 1, 1], [0], [0]>} : vector<2x8x32xf32>, vector<2x8x32xf32>, vector<2x8x8xf32> -> vector<2x8x8xf32>
    "tpu.trace_stop"() : () -> ()
    %120 = tpu.concatenate %104, %109, %114, %119 in 0 : vector<2x8x8xf32>, vector<2x8x8xf32>, vector<2x8x8xf32>, vector<2x8x8xf32> -> vector<8x8x8xf32>
    %cst_51 = arith.constant 0.353553385 : f32
    %121 = vector.broadcast %cst_51 : f32 to vector<8x8x8xf32>
    %122 = arith.mulf %120, %121 : vector<8x8x8xf32>
    %123 = arith.addf %122, %20 : vector<8x8x8xf32>
    %cst_52 = arith.constant dense<0xFF800000> : vector<8x8xf32>
    %124 = vector.multi_reduction <maximumf>, %123, %cst_52 [2] : vector<8x8x8xf32> to vector<8x8xf32>
    %125 = vector.shape_cast %124 : vector<8x8xf32> to vector<8x8x1xf32>
    %126 = vector.broadcast %125 : vector<8x8x1xf32> to vector<8x8x8xf32>
    %127 = arith.subf %123, %126 : vector<8x8x8xf32>
    %128 = math.exp %127 : vector<8x8x8xf32>
    %cst_53 = arith.constant dense<0.000000e+00> : vector<8x8xf32>
    %129 = vector.multi_reduction <add>, %128, %cst_53 [2] : vector<8x8x8xf32> to vector<8x8xf32>
    %130 = vector.shape_cast %129 : vector<8x8xf32> to vector<8x8x1xf32>
    %131 = vector.broadcast %130 : vector<8x8x1xf32> to vector<8x8x8xf32>
    %132 = arith.divf %128, %131 : vector<8x8x8xf32>
    %133 = vector.extract_strided_slice %132 {offsets = [0, 0, 0], sizes = [2, 8, 8], strides = [1, 1, 1]} : vector<8x8x8xf32> to vector<2x8x8xf32>
    %cst_54 = arith.constant 0.000000e+00 : f32
    %134 = vector.shape_cast %26 : vector<1x1x32xi1> to vector<1x1x32xi1>
    %135 = vector.broadcast %134 : vector<1x1x32xi1> to vector<2x8x32xi1>
    %136 = vector.broadcast %cst_54 : f32 to vector<2x8x32xf32>
    %137 = arith.select %135, %99, %136 : vector<2x8x32xi1>, vector<2x8x32xf32>
    "tpu.trace_start"() <{level = 10 : i32, message = "bqk,bkh->bqh"}> : () -> ()
    %cst_55 = arith.constant dense<0.000000e+00> : vector<2x8x32xf32>
    %138 = tpu.matmul %133, %137, %cst_55 {dimension_numbers = #tpu.dot_dimension_numbers<[2], [1], [1], [2], [0, 0, 0, 1, 1, 2], [0], [0]>} : vector<2x8x8xf32>, vector<2x8x32xf32>, vector<2x8x32xf32> -> vector<2x8x32xf32>
    "tpu.trace_stop"() : () -> ()
    %139 = vector.extract_strided_slice %132 {offsets = [2, 0, 0], sizes = [2, 8, 8], strides = [1, 1, 1]} : vector<8x8x8xf32> to vector<2x8x8xf32>
    %cst_56 = arith.constant 0.000000e+00 : f32
    %140 = vector.shape_cast %31 : vector<1x1x32xi1> to vector<1x1x32xi1>
    %141 = vector.broadcast %140 : vector<1x1x32xi1> to vector<2x8x32xi1>
    %142 = vector.broadcast %cst_56 : f32 to vector<2x8x32xf32>
    %143 = arith.select %141, %99, %142 : vector<2x8x32xi1>, vector<2x8x32xf32>
    "tpu.trace_start"() <{level = 10 : i32, message = "bqk,bkh->bqh"}> : () -> ()
    %cst_57 = arith.constant dense<0.000000e+00> : vector<2x8x32xf32>
    %144 = tpu.matmul %139, %143, %cst_57 {dimension_numbers = #tpu.dot_dimension_numbers<[2], [1], [1], [2], [0, 0, 0, 1, 1, 2], [0], [0]>} : vector<2x8x8xf32>, vector<2x8x32xf32>, vector<2x8x32xf32> -> vector<2x8x32xf32>
    "tpu.trace_stop"() : () -> ()
    %145 = arith.addf %138, %144 : vector<2x8x32xf32>
    %146 = vector.extract_strided_slice %132 {offsets = [4, 0, 0], sizes = [2, 8, 8], strides = [1, 1, 1]} : vector<8x8x8xf32> to vector<2x8x8xf32>
    %cst_58 = arith.constant 0.000000e+00 : f32
    %147 = vector.shape_cast %36 : vector<1x1x32xi1> to vector<1x1x32xi1>
    %148 = vector.broadcast %147 : vector<1x1x32xi1> to vector<2x8x32xi1>
    %149 = vector.broadcast %cst_58 : f32 to vector<2x8x32xf32>
    %150 = arith.select %148, %99, %149 : vector<2x8x32xi1>, vector<2x8x32xf32>
    "tpu.trace_start"() <{level = 10 : i32, message = "bqk,bkh->bqh"}> : () -> ()
    %cst_59 = arith.constant dense<0.000000e+00> : vector<2x8x32xf32>
    %151 = tpu.matmul %146, %150, %cst_59 {dimension_numbers = #tpu.dot_dimension_numbers<[2], [1], [1], [2], [0, 0, 0, 1, 1, 2], [0], [0]>} : vector<2x8x8xf32>, vector<2x8x32xf32>, vector<2x8x32xf32> -> vector<2x8x32xf32>
    "tpu.trace_stop"() : () -> ()
    %152 = arith.addf %145, %151 : vector<2x8x32xf32>
    %153 = vector.extract_strided_slice %132 {offsets = [6, 0, 0], sizes = [2, 8, 8], strides = [1, 1, 1]} : vector<8x8x8xf32> to vector<2x8x8xf32>
    %cst_60 = arith.constant 0.000000e+00 : f32
    %154 = vector.shape_cast %41 : vector<1x1x32xi1> to vector<1x1x32xi1>
    %155 = vector.broadcast %154 : vector<1x1x32xi1> to vector<2x8x32xi1>
    %156 = vector.broadcast %cst_60 : f32 to vector<2x8x32xf32>
    %157 = arith.select %155, %99, %156 : vector<2x8x32xi1>, vector<2x8x32xf32>
    "tpu.trace_start"() <{level = 10 : i32, message = "bqk,bkh->bqh"}> : () -> ()
    %cst_61 = arith.constant dense<0.000000e+00> : vector<2x8x32xf32>
    %158 = tpu.matmul %153, %157, %cst_61 {dimension_numbers = #tpu.dot_dimension_numbers<[2], [1], [1], [2], [0, 0, 0, 1, 1, 2], [0], [0]>} : vector<2x8x8xf32>, vector<2x8x32xf32>, vector<2x8x32xf32> -> vector<2x8x32xf32>
    "tpu.trace_stop"() : () -> ()
    %159 = arith.addf %152, %158 : vector<2x8x32xf32>
    %160 = vector.shape_cast %159 : vector<2x8x32xf32> to vector<16x32xf32>
    %c0_62 = arith.constant 0 : index
    %c0_63 = arith.constant 0 : index
    %c0_64 = arith.constant 0 : index
    %161 = vector.load %arg12[%c0_62, %c0_63, %c0_64] : memref<2x32x32xf32, #tpu.memory_space<vmem>>, vector<1x32x32xf32>
    %162 = vector.shape_cast %161 : vector<1x32x32xf32> to vector<32x32xf32>
    %cst_65 = arith.constant dense<0.000000e+00> : vector<16x32xf32>
    %163 = tpu.matmul %160, %162, %cst_65 {dimension_numbers = #tpu.dot_dimension_numbers<[1], [0], [0], [1], [0, 0, 1, 1], [], []>} : vector<16x32xf32>, vector<32x32xf32>, vector<16x32xf32> -> vector<16x32xf32>
    %c0_66 = arith.constant 0 : index
    %c0_67 = arith.constant 0 : index
    %c0_68 = arith.constant 0 : index
    %164 = vector.load %arg13[%c0_66, %c0_67, %c0_68] : memref<2x1x32xf32, #tpu.memory_space<vmem>>, vector<1x1x32xf32>
    %165 = vector.shape_cast %164 : vector<1x1x32xf32> to vector<1x32xf32>
    %166 = vector.broadcast %165 : vector<1x32xf32> to vector<16x32xf32>
    %167 = arith.addf %163, %166 : vector<16x32xf32>
    %168 = arith.addf %75, %167 : vector<16x32xf32>
    %c0_69 = arith.constant 0 : index
    %c0_70 = arith.constant 0 : index
    %c0_71 = arith.constant 0 : index
    %169 = vector.load %arg14[%c0_69, %c0_70, %c0_71] : memref<2x1x32xf32, #tpu.memory_space<vmem>>, vector<1x1x32xf32>
    %170 = vector.shape_cast %169 : vector<1x1x32xf32> to vector<1x32xf32>
    %c0_72 = arith.constant 0 : index
    %c0_73 = arith.constant 0 : index
    %c0_74 = arith.constant 0 : index
    %171 = vector.load %arg15[%c0_72, %c0_73, %c0_74] : memref<2x1x32xf32, #tpu.memory_space<vmem>>, vector<1x1x32xf32>
    %172 = vector.shape_cast %171 : vector<1x1x32xf32> to vector<1x32xf32>
    %cst_75 = arith.constant dense<0.000000e+00> : vector<16xf32>
    %173 = vector.multi_reduction <add>, %168, %cst_75 [1] : vector<16x32xf32> to vector<16xf32>
    %174 = vector.shape_cast %173 : vector<16xf32> to vector<16x1xf32>
    %cst_76 = arith.constant 3.200000e+01 : f32
    %175 = vector.broadcast %cst_76 : f32 to vector<16x1xf32>
    %176 = arith.divf %174, %175 : vector<16x1xf32>
    %177 = vector.broadcast %176 : vector<16x1xf32> to vector<16x32xf32>
    %178 = arith.subf %168, %177 : vector<16x32xf32>
    %179 = arith.mulf %178, %178 : vector<16x32xf32>
    %cst_77 = arith.constant dense<0.000000e+00> : vector<16xf32>
    %180 = vector.multi_reduction <add>, %179, %cst_77 [1] : vector<16x32xf32> to vector<16xf32>
    %181 = vector.shape_cast %180 : vector<16xf32> to vector<16x1xf32>
    %cst_78 = arith.constant 3.200000e+01 : f32
    %182 = vector.broadcast %cst_78 : f32 to vector<16x1xf32>
    %183 = arith.divf %181, %182 : vector<16x1xf32>
    %184 = vector.broadcast %176 : vector<16x1xf32> to vector<16x32xf32>
    %185 = arith.subf %168, %184 : vector<16x32xf32>
    %cst_79 = arith.constant 9.99999996E-13 : f32
    %186 = vector.broadcast %cst_79 : f32 to vector<16x1xf32>
    %187 = arith.addf %183, %186 : vector<16x1xf32>
    %188 = math.rsqrt %187 : vector<16x1xf32>
    %189 = vector.broadcast %188 : vector<16x1xf32> to vector<16x32xf32>
    %190 = arith.mulf %185, %189 : vector<16x32xf32>
    %191 = vector.broadcast %170 : vector<1x32xf32> to vector<16x32xf32>
    %192 = arith.mulf %190, %191 : vector<16x32xf32>
    %193 = vector.broadcast %172 : vector<1x32xf32> to vector<16x32xf32>
    %194 = arith.addf %192, %193 : vector<16x32xf32>
    %c0_80 = arith.constant 0 : index
    %c0_81 = arith.constant 0 : index
    %c0_82 = arith.constant 0 : index
    %195 = vector.load %arg16[%c0_80, %c0_81, %c0_82] : memref<2x32x64xf32, #tpu.memory_space<vmem>>, vector<1x32x64xf32>
    %196 = vector.shape_cast %195 : vector<1x32x64xf32> to vector<32x64xf32>
    %cst_83 = arith.constant dense<0.000000e+00> : vector<16x64xf32>
    %197 = tpu.matmul %194, %196, %cst_83 {dimension_numbers = #tpu.dot_dimension_numbers<[1], [0], [0], [1], [0, 0, 1, 1], [], []>} : vector<16x32xf32>, vector<32x64xf32>, vector<16x64xf32> -> vector<16x64xf32>
    %c0_84 = arith.constant 0 : index
    %c0_85 = arith.constant 0 : index
    %c0_86 = arith.constant 0 : index
    %198 = vector.load %arg17[%c0_84, %c0_85, %c0_86] : memref<2x1x64xf32, #tpu.memory_space<vmem>>, vector<1x1x64xf32>
    %199 = vector.shape_cast %198 : vector<1x1x64xf32> to vector<1x64xf32>
    %200 = vector.broadcast %199 : vector<1x64xf32> to vector<16x64xf32>
    %201 = arith.addf %197, %200 : vector<16x64xf32>
    %cst_87 = arith.constant 5.000000e-01 : f32
    %202 = vector.broadcast %cst_87 : f32 to vector<16x64xf32>
    %203 = arith.mulf %202, %201 : vector<16x64xf32>
    %cst_88 = arith.constant 4.471500e-02 : f32
    %204 = vector.broadcast %cst_88 : f32 to vector<16x64xf32>
    %205 = arith.mulf %204, %201 : vector<16x64xf32>
    %206 = arith.mulf %205, %201 : vector<16x64xf32>
    %207 = arith.mulf %206, %201 : vector<16x64xf32>
    %208 = arith.addf %201, %207 : vector<16x64xf32>
    %cst_89 = arith.constant 0.797884583 : f32
    %209 = vector.broadcast %cst_89 : f32 to vector<16x64xf32>
    %210 = arith.mulf %209, %208 : vector<16x64xf32>
    %211 = math.tanh %210 : vector<16x64xf32>
    %cst_90 = arith.constant 1.000000e+00 : f32
    %212 = vector.broadcast %cst_90 : f32 to vector<16x64xf32>
    %213 = arith.addf %212, %211 : vector<16x64xf32>
    %214 = arith.mulf %203, %213 : vector<16x64xf32>
    %c0_91 = arith.constant 0 : index
    %c0_92 = arith.constant 0 : index
    %c0_93 = arith.constant 0 : index
    %215 = vector.load %arg18[%c0_91, %c0_92, %c0_93] : memref<2x64x32xf32, #tpu.memory_space<vmem>>, vector<1x64x32xf32>
    %216 = vector.shape_cast %215 : vector<1x64x32xf32> to vector<64x32xf32>
    %cst_94 = arith.constant dense<0.000000e+00> : vector<16x32xf32>
    %217 = tpu.matmul %214, %216, %cst_94 {dimension_numbers = #tpu.dot_dimension_numbers<[1], [0], [0], [1], [0, 0, 1, 1], [], []>} : vector<16x64xf32>, vector<64x32xf32>, vector<16x32xf32> -> vector<16x32xf32>
    %c0_95 = arith.constant 0 : index
    %c0_96 = arith.constant 0 : index
    %c0_97 = arith.constant 0 : index
    %218 = vector.load %arg19[%c0_95, %c0_96, %c0_97] : memref<2x1x32xf32, #tpu.memory_space<vmem>>, vector<1x1x32xf32>
    %219 = vector.shape_cast %218 : vector<1x1x32xf32> to vector<1x32xf32>
    %220 = vector.broadcast %219 : vector<1x32xf32> to vector<16x32xf32>
    %221 = arith.addf %217, %220 : vector<16x32xf32>
    %222 = arith.addf %194, %221 : vector<16x32xf32>
    %c0_98 = arith.constant 0 : index
    %c0_99 = arith.constant 0 : index
    %c0_100 = arith.constant 0 : index
    %223 = vector.load %arg20[%c0_98, %c0_99, %c0_100] : memref<2x1x32xf32, #tpu.memory_space<vmem>>, vector<1x1x32xf32>
    %224 = vector.shape_cast %223 : vector<1x1x32xf32> to vector<1x32xf32>
    %c0_101 = arith.constant 0 : index
    %c0_102 = arith.constant 0 : index
    %c0_103 = arith.constant 0 : index
    %225 = vector.load %arg21[%c0_101, %c0_102, %c0_103] : memref<2x1x32xf32, #tpu.memory_space<vmem>>, vector<1x1x32xf32>
    %226 = vector.shape_cast %225 : vector<1x1x32xf32> to vector<1x32xf32>
    %cst_104 = arith.constant dense<0.000000e+00> : vector<16xf32>
    %227 = vector.multi_reduction <add>, %222, %cst_104 [1] : vector<16x32xf32> to vector<16xf32>
    %228 = vector.shape_cast %227 : vector<16xf32> to vector<16x1xf32>
    %cst_105 = arith.constant 3.200000e+01 : f32
    %229 = vector.broadcast %cst_105 : f32 to vector<16x1xf32>
    %230 = arith.divf %228, %229 : vector<16x1xf32>
    %231 = vector.broadcast %230 : vector<16x1xf32> to vector<16x32xf32>
    %232 = arith.subf %222, %231 : vector<16x32xf32>
    %233 = arith.mulf %232, %232 : vector<16x32xf32>
    %cst_106 = arith.constant dense<0.000000e+00> : vector<16xf32>
    %234 = vector.multi_reduction <add>, %233, %cst_106 [1] : vector<16x32xf32> to vector<16xf32>
    %235 = vector.shape_cast %234 : vector<16xf32> to vector<16x1xf32>
    %cst_107 = arith.constant 3.200000e+01 : f32
    %236 = vector.broadcast %cst_107 : f32 to vector<16x1xf32>
    %237 = arith.divf %235, %236 : vector<16x1xf32>
    %238 = vector.broadcast %230 : vector<16x1xf32> to vector<16x32xf32>
    %239 = arith.subf %222, %238 : vector<16x32xf32>
    %cst_108 = arith.constant 9.99999996E-13 : f32
    %240 = vector.broadcast %cst_108 : f32 to vector<16x1xf32>
    %241 = arith.addf %237, %240 : vector<16x1xf32>
    %242 = math.rsqrt %241 : vector<16x1xf32>
    %243 = vector.broadcast %242 : vector<16x1xf32> to vector<16x32xf32>
    %244 = arith.mulf %239, %243 : vector<16x32xf32>
    %245 = vector.broadcast %224 : vector<1x32xf32> to vector<16x32xf32>
    %246 = arith.mulf %244, %245 : vector<16x32xf32>
    %247 = vector.broadcast %226 : vector<1x32xf32> to vector<16x32xf32>
    %248 = arith.addf %246, %247 : vector<16x32xf32>
    %c1 = arith.constant 1 : index
    %c0_109 = arith.constant 0 : index
    %c0_110 = arith.constant 0 : index
    %249 = vector.load %arg6[%c1, %c0_109, %c0_110] : memref<2x32x32xf32, #tpu.memory_space<vmem>>, vector<1x32x32xf32>
    %250 = vector.shape_cast %249 : vector<1x32x32xf32> to vector<32x32xf32>
    %cst_111 = arith.constant dense<0.000000e+00> : vector<16x32xf32>
    %251 = tpu.matmul %248, %250, %cst_111 {dimension_numbers = #tpu.dot_dimension_numbers<[1], [0], [0], [1], [0, 0, 1, 1], [], []>} : vector<16x32xf32>, vector<32x32xf32>, vector<16x32xf32> -> vector<16x32xf32>
    %c1_112 = arith.constant 1 : index
    %c0_113 = arith.constant 0 : index
    %c0_114 = arith.constant 0 : index
    %252 = vector.load %arg9[%c1_112, %c0_113, %c0_114] : memref<2x1x32xf32, #tpu.memory_space<vmem>>, vector<1x1x32xf32>
    %253 = vector.shape_cast %252 : vector<1x1x32xf32> to vector<1x32xf32>
    %254 = vector.broadcast %253 : vector<1x32xf32> to vector<16x32xf32>
    %255 = arith.addf %251, %254 : vector<16x32xf32>
    %c1_115 = arith.constant 1 : index
    %c0_116 = arith.constant 0 : index
    %c0_117 = arith.constant 0 : index
    %256 = vector.load %arg7[%c1_115, %c0_116, %c0_117] : memref<2x32x32xf32, #tpu.memory_space<vmem>>, vector<1x32x32xf32>
    %257 = vector.shape_cast %256 : vector<1x32x32xf32> to vector<32x32xf32>
    %cst_118 = arith.constant dense<0.000000e+00> : vector<16x32xf32>
    %258 = tpu.matmul %248, %257, %cst_118 {dimension_numbers = #tpu.dot_dimension_numbers<[1], [0], [0], [1], [0, 0, 1, 1], [], []>} : vector<16x32xf32>, vector<32x32xf32>, vector<16x32xf32> -> vector<16x32xf32>
    %c1_119 = arith.constant 1 : index
    %c0_120 = arith.constant 0 : index
    %c0_121 = arith.constant 0 : index
    %259 = vector.load %arg10[%c1_119, %c0_120, %c0_121] : memref<2x1x32xf32, #tpu.memory_space<vmem>>, vector<1x1x32xf32>
    %260 = vector.shape_cast %259 : vector<1x1x32xf32> to vector<1x32xf32>
    %261 = vector.broadcast %260 : vector<1x32xf32> to vector<16x32xf32>
    %262 = arith.addf %258, %261 : vector<16x32xf32>
    %c1_122 = arith.constant 1 : index
    %c0_123 = arith.constant 0 : index
    %c0_124 = arith.constant 0 : index
    %263 = vector.load %arg8[%c1_122, %c0_123, %c0_124] : memref<2x32x32xf32, #tpu.memory_space<vmem>>, vector<1x32x32xf32>
    %264 = vector.shape_cast %263 : vector<1x32x32xf32> to vector<32x32xf32>
    %cst_125 = arith.constant dense<0.000000e+00> : vector<16x32xf32>
    %265 = tpu.matmul %248, %264, %cst_125 {dimension_numbers = #tpu.dot_dimension_numbers<[1], [0], [0], [1], [0, 0, 1, 1], [], []>} : vector<16x32xf32>, vector<32x32xf32>, vector<16x32xf32> -> vector<16x32xf32>
    %c1_126 = arith.constant 1 : index
    %c0_127 = arith.constant 0 : index
    %c0_128 = arith.constant 0 : index
    %266 = vector.load %arg11[%c1_126, %c0_127, %c0_128] : memref<2x1x32xf32, #tpu.memory_space<vmem>>, vector<1x1x32xf32>
    %267 = vector.shape_cast %266 : vector<1x1x32xf32> to vector<1x32xf32>
    %268 = vector.broadcast %267 : vector<1x32xf32> to vector<16x32xf32>
    %269 = arith.addf %265, %268 : vector<16x32xf32>
    %270 = vector.shape_cast %255 : vector<16x32xf32> to vector<2x8x32xf32>
    %271 = vector.shape_cast %262 : vector<16x32xf32> to vector<2x8x32xf32>
    %272 = vector.shape_cast %269 : vector<16x32xf32> to vector<2x8x32xf32>
    %cst_129 = arith.constant 0.000000e+00 : f32
    %273 = vector.shape_cast %26 : vector<1x1x32xi1> to vector<1x1x32xi1>
    %274 = vector.broadcast %273 : vector<1x1x32xi1> to vector<2x8x32xi1>
    %275 = vector.broadcast %cst_129 : f32 to vector<2x8x32xf32>
    %276 = arith.select %274, %271, %275 : vector<2x8x32xi1>, vector<2x8x32xf32>
    "tpu.trace_start"() <{level = 10 : i32, message = "bqh,bkh->bqk"}> : () -> ()
    %cst_130 = arith.constant dense<0.000000e+00> : vector<2x8x8xf32>
    %277 = tpu.matmul %270, %276, %cst_130 {dimension_numbers = #tpu.dot_dimension_numbers<[2], [2], [1], [1], [0, 0, 0, 1, 1, 1], [0], [0]>} : vector<2x8x32xf32>, vector<2x8x32xf32>, vector<2x8x8xf32> -> vector<2x8x8xf32>
    %cst_131 = arith.constant 0.000000e+00 : f32
    "tpu.trace_stop"() : () -> ()
    %278 = vector.shape_cast %31 : vector<1x1x32xi1> to vector<1x1x32xi1>
    %279 = vector.broadcast %278 : vector<1x1x32xi1> to vector<2x8x32xi1>
    %280 = vector.broadcast %cst_131 : f32 to vector<2x8x32xf32>
    %281 = arith.select %279, %271, %280 : vector<2x8x32xi1>, vector<2x8x32xf32>
    "tpu.trace_start"() <{level = 10 : i32, message = "bqh,bkh->bqk"}> : () -> ()
    %cst_132 = arith.constant dense<0.000000e+00> : vector<2x8x8xf32>
    %282 = tpu.matmul %270, %281, %cst_132 {dimension_numbers = #tpu.dot_dimension_numbers<[2], [2], [1], [1], [0, 0, 0, 1, 1, 1], [0], [0]>} : vector<2x8x32xf32>, vector<2x8x32xf32>, vector<2x8x8xf32> -> vector<2x8x8xf32>
    %cst_133 = arith.constant 0.000000e+00 : f32
    "tpu.trace_stop"() : () -> ()
    %283 = vector.shape_cast %36 : vector<1x1x32xi1> to vector<1x1x32xi1>
    %284 = vector.broadcast %283 : vector<1x1x32xi1> to vector<2x8x32xi1>
    %285 = vector.broadcast %cst_133 : f32 to vector<2x8x32xf32>
    %286 = arith.select %284, %271, %285 : vector<2x8x32xi1>, vector<2x8x32xf32>
    "tpu.trace_start"() <{level = 10 : i32, message = "bqh,bkh->bqk"}> : () -> ()
    %cst_134 = arith.constant dense<0.000000e+00> : vector<2x8x8xf32>
    %287 = tpu.matmul %270, %286, %cst_134 {dimension_numbers = #tpu.dot_dimension_numbers<[2], [2], [1], [1], [0, 0, 0, 1, 1, 1], [0], [0]>} : vector<2x8x32xf32>, vector<2x8x32xf32>, vector<2x8x8xf32> -> vector<2x8x8xf32>
    %cst_135 = arith.constant 0.000000e+00 : f32
    "tpu.trace_stop"() : () -> ()
    %288 = vector.shape_cast %41 : vector<1x1x32xi1> to vector<1x1x32xi1>
    %289 = vector.broadcast %288 : vector<1x1x32xi1> to vector<2x8x32xi1>
    %290 = vector.broadcast %cst_135 : f32 to vector<2x8x32xf32>
    %291 = arith.select %289, %271, %290 : vector<2x8x32xi1>, vector<2x8x32xf32>
    "tpu.trace_start"() <{level = 10 : i32, message = "bqh,bkh->bqk"}> : () -> ()
    %cst_136 = arith.constant dense<0.000000e+00> : vector<2x8x8xf32>
    %292 = tpu.matmul %270, %291, %cst_136 {dimension_numbers = #tpu.dot_dimension_numbers<[2], [2], [1], [1], [0, 0, 0, 1, 1, 1], [0], [0]>} : vector<2x8x32xf32>, vector<2x8x32xf32>, vector<2x8x8xf32> -> vector<2x8x8xf32>
    "tpu.trace_stop"() : () -> ()
    %293 = tpu.concatenate %277, %282, %287, %292 in 0 : vector<2x8x8xf32>, vector<2x8x8xf32>, vector<2x8x8xf32>, vector<2x8x8xf32> -> vector<8x8x8xf32>
    %cst_137 = arith.constant 0.353553385 : f32
    %294 = vector.broadcast %cst_137 : f32 to vector<8x8x8xf32>
    %295 = arith.mulf %293, %294 : vector<8x8x8xf32>
    %296 = arith.addf %295, %20 : vector<8x8x8xf32>
    %cst_138 = arith.constant dense<0xFF800000> : vector<8x8xf32>
    %297 = vector.multi_reduction <maximumf>, %296, %cst_138 [2] : vector<8x8x8xf32> to vector<8x8xf32>
    %298 = vector.shape_cast %297 : vector<8x8xf32> to vector<8x8x1xf32>
    %299 = vector.broadcast %298 : vector<8x8x1xf32> to vector<8x8x8xf32>
    %300 = arith.subf %296, %299 : vector<8x8x8xf32>
    %301 = math.exp %300 : vector<8x8x8xf32>
    %cst_139 = arith.constant dense<0.000000e+00> : vector<8x8xf32>
    %302 = vector.multi_reduction <add>, %301, %cst_139 [2] : vector<8x8x8xf32> to vector<8x8xf32>
    %303 = vector.shape_cast %302 : vector<8x8xf32> to vector<8x8x1xf32>
    %304 = vector.broadcast %303 : vector<8x8x1xf32> to vector<8x8x8xf32>
    %305 = arith.divf %301, %304 : vector<8x8x8xf32>
    %306 = vector.extract_strided_slice %305 {offsets = [0, 0, 0], sizes = [2, 8, 8], strides = [1, 1, 1]} : vector<8x8x8xf32> to vector<2x8x8xf32>
    %cst_140 = arith.constant 0.000000e+00 : f32
    %307 = vector.shape_cast %26 : vector<1x1x32xi1> to vector<1x1x32xi1>
    %308 = vector.broadcast %307 : vector<1x1x32xi1> to vector<2x8x32xi1>
    %309 = vector.broadcast %cst_140 : f32 to vector<2x8x32xf32>
    %310 = arith.select %308, %272, %309 : vector<2x8x32xi1>, vector<2x8x32xf32>
    "tpu.trace_start"() <{level = 10 : i32, message = "bqk,bkh->bqh"}> : () -> ()
    %cst_141 = arith.constant dense<0.000000e+00> : vector<2x8x32xf32>
    %311 = tpu.matmul %306, %310, %cst_141 {dimension_numbers = #tpu.dot_dimension_numbers<[2], [1], [1], [2], [0, 0, 0, 1, 1, 2], [0], [0]>} : vector<2x8x8xf32>, vector<2x8x32xf32>, vector<2x8x32xf32> -> vector<2x8x32xf32>
    "tpu.trace_stop"() : () -> ()
    %312 = vector.extract_strided_slice %305 {offsets = [2, 0, 0], sizes = [2, 8, 8], strides = [1, 1, 1]} : vector<8x8x8xf32> to vector<2x8x8xf32>
    %cst_142 = arith.constant 0.000000e+00 : f32
    %313 = vector.shape_cast %31 : vector<1x1x32xi1> to vector<1x1x32xi1>
    %314 = vector.broadcast %313 : vector<1x1x32xi1> to vector<2x8x32xi1>
    %315 = vector.broadcast %cst_142 : f32 to vector<2x8x32xf32>
    %316 = arith.select %314, %272, %315 : vector<2x8x32xi1>, vector<2x8x32xf32>
    "tpu.trace_start"() <{level = 10 : i32, message = "bqk,bkh->bqh"}> : () -> ()
    %cst_143 = arith.constant dense<0.000000e+00> : vector<2x8x32xf32>
    %317 = tpu.matmul %312, %316, %cst_143 {dimension_numbers = #tpu.dot_dimension_numbers<[2], [1], [1], [2], [0, 0, 0, 1, 1, 2], [0], [0]>} : vector<2x8x8xf32>, vector<2x8x32xf32>, vector<2x8x32xf32> -> vector<2x8x32xf32>
    "tpu.trace_stop"() : () -> ()
    %318 = arith.addf %311, %317 : vector<2x8x32xf32>
    %319 = vector.extract_strided_slice %305 {offsets = [4, 0, 0], sizes = [2, 8, 8], strides = [1, 1, 1]} : vector<8x8x8xf32> to vector<2x8x8xf32>
    %cst_144 = arith.constant 0.000000e+00 : f32
    %320 = vector.shape_cast %36 : vector<1x1x32xi1> to vector<1x1x32xi1>
    %321 = vector.broadcast %320 : vector<1x1x32xi1> to vector<2x8x32xi1>
    %322 = vector.broadcast %cst_144 : f32 to vector<2x8x32xf32>
    %323 = arith.select %321, %272, %322 : vector<2x8x32xi1>, vector<2x8x32xf32>
    "tpu.trace_start"() <{level = 10 : i32, message = "bqk,bkh->bqh"}> : () -> ()
    %cst_145 = arith.constant dense<0.000000e+00> : vector<2x8x32xf32>
    %324 = tpu.matmul %319, %323, %cst_145 {dimension_numbers = #tpu.dot_dimension_numbers<[2], [1], [1], [2], [0, 0, 0, 1, 1, 2], [0], [0]>} : vector<2x8x8xf32>, vector<2x8x32xf32>, vector<2x8x32xf32> -> vector<2x8x32xf32>
    "tpu.trace_stop"() : () -> ()
    %325 = arith.addf %318, %324 : vector<2x8x32xf32>
    %326 = vector.extract_strided_slice %305 {offsets = [6, 0, 0], sizes = [2, 8, 8], strides = [1, 1, 1]} : vector<8x8x8xf32> to vector<2x8x8xf32>
    %cst_146 = arith.constant 0.000000e+00 : f32
    %327 = vector.shape_cast %41 : vector<1x1x32xi1> to vector<1x1x32xi1>
    %328 = vector.broadcast %327 : vector<1x1x32xi1> to vector<2x8x32xi1>
    %329 = vector.broadcast %cst_146 : f32 to vector<2x8x32xf32>
    %330 = arith.select %328, %272, %329 : vector<2x8x32xi1>, vector<2x8x32xf32>
    "tpu.trace_start"() <{level = 10 : i32, message = "bqk,bkh->bqh"}> : () -> ()
    %cst_147 = arith.constant dense<0.000000e+00> : vector<2x8x32xf32>
    %331 = tpu.matmul %326, %330, %cst_147 {dimension_numbers = #tpu.dot_dimension_numbers<[2], [1], [1], [2], [0, 0, 0, 1, 1, 2], [0], [0]>} : vector<2x8x8xf32>, vector<2x8x32xf32>, vector<2x8x32xf32> -> vector<2x8x32xf32>
    "tpu.trace_stop"() : () -> ()
    %332 = arith.addf %325, %331 : vector<2x8x32xf32>
    %333 = vector.shape_cast %332 : vector<2x8x32xf32> to vector<16x32xf32>
    %c1_148 = arith.constant 1 : index
    %c0_149 = arith.constant 0 : index
    %c0_150 = arith.constant 0 : index
    %334 = vector.load %arg12[%c1_148, %c0_149, %c0_150] : memref<2x32x32xf32, #tpu.memory_space<vmem>>, vector<1x32x32xf32>
    %335 = vector.shape_cast %334 : vector<1x32x32xf32> to vector<32x32xf32>
    %cst_151 = arith.constant dense<0.000000e+00> : vector<16x32xf32>
    %336 = tpu.matmul %333, %335, %cst_151 {dimension_numbers = #tpu.dot_dimension_numbers<[1], [0], [0], [1], [0, 0, 1, 1], [], []>} : vector<16x32xf32>, vector<32x32xf32>, vector<16x32xf32> -> vector<16x32xf32>
    %c1_152 = arith.constant 1 : index
    %c0_153 = arith.constant 0 : index
    %c0_154 = arith.constant 0 : index
    %337 = vector.load %arg13[%c1_152, %c0_153, %c0_154] : memref<2x1x32xf32, #tpu.memory_space<vmem>>, vector<1x1x32xf32>
    %338 = vector.shape_cast %337 : vector<1x1x32xf32> to vector<1x32xf32>
    %339 = vector.broadcast %338 : vector<1x32xf32> to vector<16x32xf32>
    %340 = arith.addf %336, %339 : vector<16x32xf32>
    %341 = arith.addf %248, %340 : vector<16x32xf32>
    %c1_155 = arith.constant 1 : index
    %c0_156 = arith.constant 0 : index
    %c0_157 = arith.constant 0 : index
    %342 = vector.load %arg14[%c1_155, %c0_156, %c0_157] : memref<2x1x32xf32, #tpu.memory_space<vmem>>, vector<1x1x32xf32>
    %343 = vector.shape_cast %342 : vector<1x1x32xf32> to vector<1x32xf32>
    %c1_158 = arith.constant 1 : index
    %c0_159 = arith.constant 0 : index
    %c0_160 = arith.constant 0 : index
    %344 = vector.load %arg15[%c1_158, %c0_159, %c0_160] : memref<2x1x32xf32, #tpu.memory_space<vmem>>, vector<1x1x32xf32>
    %345 = vector.shape_cast %344 : vector<1x1x32xf32> to vector<1x32xf32>
    %cst_161 = arith.constant dense<0.000000e+00> : vector<16xf32>
    %346 = vector.multi_reduction <add>, %341, %cst_161 [1] : vector<16x32xf32> to vector<16xf32>
    %347 = vector.shape_cast %346 : vector<16xf32> to vector<16x1xf32>
    %cst_162 = arith.constant 3.200000e+01 : f32
    %348 = vector.broadcast %cst_162 : f32 to vector<16x1xf32>
    %349 = arith.divf %347, %348 : vector<16x1xf32>
    %350 = vector.broadcast %349 : vector<16x1xf32> to vector<16x32xf32>
    %351 = arith.subf %341, %350 : vector<16x32xf32>
    %352 = arith.mulf %351, %351 : vector<16x32xf32>
    %cst_163 = arith.constant dense<0.000000e+00> : vector<16xf32>
    %353 = vector.multi_reduction <add>, %352, %cst_163 [1] : vector<16x32xf32> to vector<16xf32>
    %354 = vector.shape_cast %353 : vector<16xf32> to vector<16x1xf32>
    %cst_164 = arith.constant 3.200000e+01 : f32
    %355 = vector.broadcast %cst_164 : f32 to vector<16x1xf32>
    %356 = arith.divf %354, %355 : vector<16x1xf32>
    %357 = vector.broadcast %349 : vector<16x1xf32> to vector<16x32xf32>
    %358 = arith.subf %341, %357 : vector<16x32xf32>
    %cst_165 = arith.constant 9.99999996E-13 : f32
    %359 = vector.broadcast %cst_165 : f32 to vector<16x1xf32>
    %360 = arith.addf %356, %359 : vector<16x1xf32>
    %361 = math.rsqrt %360 : vector<16x1xf32>
    %362 = vector.broadcast %361 : vector<16x1xf32> to vector<16x32xf32>
    %363 = arith.mulf %358, %362 : vector<16x32xf32>
    %364 = vector.broadcast %343 : vector<1x32xf32> to vector<16x32xf32>
    %365 = arith.mulf %363, %364 : vector<16x32xf32>
    %366 = vector.broadcast %345 : vector<1x32xf32> to vector<16x32xf32>
    %367 = arith.addf %365, %366 : vector<16x32xf32>
    %c1_166 = arith.constant 1 : index
    %c0_167 = arith.constant 0 : index
    %c0_168 = arith.constant 0 : index
    %368 = vector.load %arg16[%c1_166, %c0_167, %c0_168] : memref<2x32x64xf32, #tpu.memory_space<vmem>>, vector<1x32x64xf32>
    %369 = vector.shape_cast %368 : vector<1x32x64xf32> to vector<32x64xf32>
    %cst_169 = arith.constant dense<0.000000e+00> : vector<16x64xf32>
    %370 = tpu.matmul %367, %369, %cst_169 {dimension_numbers = #tpu.dot_dimension_numbers<[1], [0], [0], [1], [0, 0, 1, 1], [], []>} : vector<16x32xf32>, vector<32x64xf32>, vector<16x64xf32> -> vector<16x64xf32>
    %c1_170 = arith.constant 1 : index
    %c0_171 = arith.constant 0 : index
    %c0_172 = arith.constant 0 : index
    %371 = vector.load %arg17[%c1_170, %c0_171, %c0_172] : memref<2x1x64xf32, #tpu.memory_space<vmem>>, vector<1x1x64xf32>
    %372 = vector.shape_cast %371 : vector<1x1x64xf32> to vector<1x64xf32>
    %373 = vector.broadcast %372 : vector<1x64xf32> to vector<16x64xf32>
    %374 = arith.addf %370, %373 : vector<16x64xf32>
    %cst_173 = arith.constant 5.000000e-01 : f32
    %375 = vector.broadcast %cst_173 : f32 to vector<16x64xf32>
    %376 = arith.mulf %375, %374 : vector<16x64xf32>
    %cst_174 = arith.constant 4.471500e-02 : f32
    %377 = vector.broadcast %cst_174 : f32 to vector<16x64xf32>
    %378 = arith.mulf %377, %374 : vector<16x64xf32>
    %379 = arith.mulf %378, %374 : vector<16x64xf32>
    %380 = arith.mulf %379, %374 : vector<16x64xf32>
    %381 = arith.addf %374, %380 : vector<16x64xf32>
    %cst_175 = arith.constant 0.797884583 : f32
    %382 = vector.broadcast %cst_175 : f32 to vector<16x64xf32>
    %383 = arith.mulf %382, %381 : vector<16x64xf32>
    %384 = math.tanh %383 : vector<16x64xf32>
    %cst_176 = arith.constant 1.000000e+00 : f32
    %385 = vector.broadcast %cst_176 : f32 to vector<16x64xf32>
    %386 = arith.addf %385, %384 : vector<16x64xf32>
    %387 = arith.mulf %376, %386 : vector<16x64xf32>
    %c1_177 = arith.constant 1 : index
    %c0_178 = arith.constant 0 : index
    %c0_179 = arith.constant 0 : index
    %388 = vector.load %arg18[%c1_177, %c0_178, %c0_179] : memref<2x64x32xf32, #tpu.memory_space<vmem>>, vector<1x64x32xf32>
    %389 = vector.shape_cast %388 : vector<1x64x32xf32> to vector<64x32xf32>
    %cst_180 = arith.constant dense<0.000000e+00> : vector<16x32xf32>
    %390 = tpu.matmul %387, %389, %cst_180 {dimension_numbers = #tpu.dot_dimension_numbers<[1], [0], [0], [1], [0, 0, 1, 1], [], []>} : vector<16x64xf32>, vector<64x32xf32>, vector<16x32xf32> -> vector<16x32xf32>
    %c1_181 = arith.constant 1 : index
    %c0_182 = arith.constant 0 : index
    %c0_183 = arith.constant 0 : index
    %391 = vector.load %arg19[%c1_181, %c0_182, %c0_183] : memref<2x1x32xf32, #tpu.memory_space<vmem>>, vector<1x1x32xf32>
    %392 = vector.shape_cast %391 : vector<1x1x32xf32> to vector<1x32xf32>
    %393 = vector.broadcast %392 : vector<1x32xf32> to vector<16x32xf32>
    %394 = arith.addf %390, %393 : vector<16x32xf32>
    %395 = arith.addf %367, %394 : vector<16x32xf32>
    %c1_184 = arith.constant 1 : index
    %c0_185 = arith.constant 0 : index
    %c0_186 = arith.constant 0 : index
    %396 = vector.load %arg20[%c1_184, %c0_185, %c0_186] : memref<2x1x32xf32, #tpu.memory_space<vmem>>, vector<1x1x32xf32>
    %397 = vector.shape_cast %396 : vector<1x1x32xf32> to vector<1x32xf32>
    %c1_187 = arith.constant 1 : index
    %c0_188 = arith.constant 0 : index
    %c0_189 = arith.constant 0 : index
    %398 = vector.load %arg21[%c1_187, %c0_188, %c0_189] : memref<2x1x32xf32, #tpu.memory_space<vmem>>, vector<1x1x32xf32>
    %399 = vector.shape_cast %398 : vector<1x1x32xf32> to vector<1x32xf32>
    %cst_190 = arith.constant dense<0.000000e+00> : vector<16xf32>
    %400 = vector.multi_reduction <add>, %395, %cst_190 [1] : vector<16x32xf32> to vector<16xf32>
    %401 = vector.shape_cast %400 : vector<16xf32> to vector<16x1xf32>
    %cst_191 = arith.constant 3.200000e+01 : f32
    %402 = vector.broadcast %cst_191 : f32 to vector<16x1xf32>
    %403 = arith.divf %401, %402 : vector<16x1xf32>
    %404 = vector.broadcast %403 : vector<16x1xf32> to vector<16x32xf32>
    %405 = arith.subf %395, %404 : vector<16x32xf32>
    %406 = arith.mulf %405, %405 : vector<16x32xf32>
    %cst_192 = arith.constant dense<0.000000e+00> : vector<16xf32>
    %407 = vector.multi_reduction <add>, %406, %cst_192 [1] : vector<16x32xf32> to vector<16xf32>
    %408 = vector.shape_cast %407 : vector<16xf32> to vector<16x1xf32>
    %cst_193 = arith.constant 3.200000e+01 : f32
    %409 = vector.broadcast %cst_193 : f32 to vector<16x1xf32>
    %410 = arith.divf %408, %409 : vector<16x1xf32>
    %411 = vector.broadcast %403 : vector<16x1xf32> to vector<16x32xf32>
    %412 = arith.subf %395, %411 : vector<16x32xf32>
    %cst_194 = arith.constant 9.99999996E-13 : f32
    %413 = vector.broadcast %cst_194 : f32 to vector<16x1xf32>
    %414 = arith.addf %410, %413 : vector<16x1xf32>
    %415 = math.rsqrt %414 : vector<16x1xf32>
    %416 = vector.broadcast %415 : vector<16x1xf32> to vector<16x32xf32>
    %417 = arith.mulf %412, %416 : vector<16x32xf32>
    %418 = vector.broadcast %397 : vector<1x32xf32> to vector<16x32xf32>
    %419 = arith.mulf %417, %418 : vector<16x32xf32>
    %420 = vector.broadcast %399 : vector<1x32xf32> to vector<16x32xf32>
    %421 = arith.addf %419, %420 : vector<16x32xf32>
    %c0_195 = arith.constant 0 : index
    %c0_196 = arith.constant 0 : index
    %422 = vector.load %arg22[%c0_195, %c0_196] : memref<16x32xf32, #tpu.memory_space<vmem>>, vector<16x32xf32>
    tpu.vector_store %arg22[%c0_195, %c0_196], %421 {strides = array<i32>} : memref<16x32xf32, #tpu.memory_space<vmem>>, vector<16x32xf32>,
    return
  }
}

</mosaic_0001>

<llo_original>
// kernel: tpu_custom_call.1
$region0: #{tpu_custom_call.1}
  #allocation0 [shape = 'u32[]', space=smem, size = 0x4, offset = 0x4, fixed_abs, tag = 'smem constant byte address 0x4 - core index']
  #allocation1 [shape = 'u32[144,128]{1,0:T(1,128)}', space=vmem, size = 0x12000, scoped, tag = 'internal scratch']
  %s0 = inlined_call_operand.hbm [shape: s32[2,8], index: 0, kind: input, shape index: {}]
  %s1 = inlined_call_operand.hbm [shape: f32[16,32], index: 1, kind: input, shape index: {}]
  %s2 = inlined_call_operand.hbm [shape: f32[8,32], index: 2, kind: input, shape index: {}]
  %s3 = inlined_call_operand.hbm [shape: f32[1,32], index: 3, kind: input, shape index: {}]
  %s4 = inlined_call_operand.hbm [shape: f32[1,32], index: 4, kind: input, shape index: {}]
  %s5 = inlined_call_operand.hbm [shape: f32[1,32], index: 5, kind: input, shape index: {}]
  %s6 = inlined_call_operand.vmem [shape: f32[2,32,32], index: 6, kind: input, shape index: {}]
  %s7 = inlined_call_operand.vmem [shape: f32[2,32,32], index: 7, kind: input, shape index: {}]
  %s8 = inlined_call_operand.vmem [shape: f32[2,32,32], index: 8, kind: input, shape index: {}]
  %s9 = inlined_call_operand.vmem [shape: f32[2,1,32], index: 9, kind: input, shape index: {}]
  %s10 = inlined_call_operand.vmem [shape: f32[2,1,32], index: 10, kind: input, shape index: {}]
  %s11 = inlined_call_operand.vmem [shape: f32[2,1,32], index: 11, kind: input, shape index: {}]
  %s12 = inlined_call_operand.hbm [shape: f32[2,32,32], index: 12, kind: input, shape index: {}]
  %s13 = inlined_call_operand.vmem [shape: f32[2,1,32], index: 13, kind: input, shape index: {}]
  %s14 = inlined_call_operand.vmem [shape: f32[2,1,32], index: 14, kind: input, shape index: {}]
  %s15 = inlined_call_operand.vmem [shape: f32[2,1,32], index: 15, kind: input, shape index: {}]
  %s16 = inlined_call_operand.hbm [shape: f32[2,32,64], index: 16, kind: input, shape index: {}]
  %s17 = inlined_call_operand.vmem [shape: f32[2,1,64], index: 17, kind: input, shape index: {}]
  %s18 = inlined_call_operand.vmem [shape: f32[2,64,32], index: 18, kind: input, shape index: {}]
  %s19 = inlined_call_operand.vmem [shape: f32[2,1,32], index: 19, kind: input, shape index: {}]
  %s20 = inlined_call_operand.vmem [shape: f32[2,1,32], index: 20, kind: input, shape index: {}]
  %s21 = inlined_call_operand.vmem [shape: f32[2,1,32], index: 21, kind: input, shape index: {}]
  %s22 = inlined_call_operand.hbm [shape: f32[16,32], index: 22, kind: output, shape index: {}]
  %s23 = sld [smem:[#allocation0]]
  $region130: #{tpu_custom_call.1} parent=0
    _
  %s25 = ssub.s32 1, %s23
  %s26 = scalar_select 0, %s25, %s23
  $region1: #{tpu_custom_call.1} parent=0
    #allocation2 [shape = 'u8[1024]{0}', space=vmem, size = 0x400, scoped, tag = 'input window, operand 0, single buffered']
    #allocation3 [shape = 's32[1]{0}', space=sflag, size = 0x4, scoped, tag = 'scoped memory for tpu_custom_call.1']
    #allocation4 [shape = 's32[1]{0}', space=sflag, size = 0x4, scoped, tag = 'scoped memory for tpu_custom_call.1']
    #allocation5 [shape = 'u8[8192]{0}', space=vmem, size = 0x2000, scoped, tag = 'input window, operand 1, single buffered']
    #allocation6 [shape = 's32[1]{0}', space=sflag, size = 0x4, scoped, tag = 'scoped memory for tpu_custom_call.1']
    #allocation7 [shape = 'u8[4096]{0}', space=vmem, size = 0x1000, scoped, tag = 'input window, operand 2, single buffered']
    #allocation8 [shape = 'u8[512]{0}', space=vmem, size = 0x400, scoped, tag = 'input window, operand 3, single buffered']
    #allocation9 [shape = 's32[1]{0}', space=sflag, size = 0x4, scoped, tag = 'scoped memory for tpu_custom_call.1']
    #allocation10 [shape = 'u8[512]{0}', space=vmem, size = 0x400, scoped, tag = 'input window, operand 4, single buffered']
    #allocation11 [shape = 'u8[512]{0}', space=vmem, size = 0x400, scoped, tag = 'input window, operand 5, single buffered']
    #allocation12 [shape = 's32[1]{0}', space=sflag, size = 0x4, scoped, tag = 'scoped memory for tpu_custom_call.1']
    #allocation13 [shape = 'u8[32768]{0}', space=vmem, size = 0x8000, scoped, tag = 'input window, operand 12, single buffered']
    #allocation14 [shape = 'u8[32768]{0}', space=vmem, size = 0x8000, scoped, tag = 'input window, operand 16, single buffered']
    #allocation15 [shape = 's32[1]{0}', space=sflag, size = 0x4, scoped, tag = 'scoped memory for tpu_custom_call.1']
    #allocation16 [shape = 'u8[8192]{0}', space=vmem, size = 0x2000, scoped, tag = 'output window, operand 0, single buffered']
    %27 = vsyncpa [#allocation3], 0
    %28 = vsyncpa [#allocation6], 0
    %29 = vsyncpa [#allocation9], 0
    %30 = vsyncpa [#allocation12], 0
    %31 = vsyncpa [#allocation15], 0
    %32 = vsyncpa [#allocation4], 0
    // Predicated region
    $region2: #{tpu_custom_call.1} parent=1 // pred_check
      _
    $region3: #{tpu_custom_call.1} parent=1 // pred_check_branch
      %34 = sbr.rel (0) target = $region5
    $region4: #{tpu_custom_call.1} parent=1 // pred_region
      %s36 = ssub.s32 32, 32
      %37 = vsyncadd [#allocation3], %s36
      %s39 = sshll.u32 [#allocation2], 4
      %s40 = int_to_ptr.vmem [resolvable:$true] %s39
      %42 = dma.hbm_to_vmem [thread:$0]  %s0, 32, %s40, [#allocation3]
    $region5: #{tpu_custom_call.1} parent=1 // pred_fallthru
      _
    // Predicated region
    $region6: #{tpu_custom_call.1} parent=1 // pred_check
      _
    $region7: #{tpu_custom_call.1} parent=1 // pred_check_branch
      %44 = sbr.rel (0) target = $region9
    $region8: #{tpu_custom_call.1} parent=1 // pred_region
      %s46 = ssub.s32 256, 256
      %47 = vsyncadd [#allocation6], %s46
      %s48 = sshll.u32 [#allocation5], 4
      %s49 = int_to_ptr.vmem [resolvable:$true] %s48
      %54 = dma.hbm_to_vmem [thread:$0]  %s1, 256, %s49, [#allocation6], 128, 128, 8
    $region9: #{tpu_custom_call.1} parent=1 // pred_fallthru
      _
    // Predicated region
    $region10: #{tpu_custom_call.1} parent=1 // pred_check
      _
    $region11: #{tpu_custom_call.1} parent=1 // pred_check_branch
      %56 = sbr.rel (0) target = $region13
    $region12: #{tpu_custom_call.1} parent=1 // pred_region
      %s58 = ssub.s32 128, 128
      %59 = vsyncadd [#allocation6], %s58
      %s61 = sshll.u32 [#allocation7], 4
      %s62 = int_to_ptr.vmem [resolvable:$true] %s61
      %64 = dma.hbm_to_vmem [thread:$0]  %s2, 128, %s62, [#allocation6]
    $region13: #{tpu_custom_call.1} parent=1 // pred_fallthru
      _
    // Predicated region
    $region14: #{tpu_custom_call.1} parent=1 // pred_check
      _
    $region15: #{tpu_custom_call.1} parent=1 // pred_check_branch
      %66 = sbr.rel (0) target = $region17
    $region16: #{tpu_custom_call.1} parent=1 // pred_region
      %s68 = ssub.s32 16, 16
      %69 = vsyncadd [#allocation9], %s68
      %s71 = sshll.u32 [#allocation8], 4
      %s72 = int_to_ptr.vmem [resolvable:$true] %s71
      %74 = dma.hbm_to_vmem [thread:$0]  %s3, 16, %s72, [#allocation9]
    $region17: #{tpu_custom_call.1} parent=1 // pred_fallthru
      _
    // Predicated region
    $region18: #{tpu_custom_call.1} parent=1 // pred_check
      _
    $region19: #{tpu_custom_call.1} parent=1 // pred_check_branch
      %76 = sbr.rel (0) target = $region21
    $region20: #{tpu_custom_call.1} parent=1 // pred_region
      %s78 = ssub.s32 16, 16
      %79 = vsyncadd [#allocation9], %s78
      %s81 = sshll.u32 [#allocation10], 4
      %s82 = int_to_ptr.vmem [resolvable:$true] %s81
      %84 = dma.hbm_to_vmem [thread:$0]  %s4, 16, %s82, [#allocation9]
    $region21: #{tpu_custom_call.1} parent=1 // pred_fallthru
      _
    // Predicated region
    $region22: #{tpu_custom_call.1} parent=1 // pred_check
      _
    $region23: #{tpu_custom_call.1} parent=1 // pred_check_branch
      %86 = sbr.rel (0) target = $region25
    $region24: #{tpu_custom_call.1} parent=1 // pred_region
      %s88 = ssub.s32 16, 16
      %89 = vsyncadd [#allocation12], %s88
      %s91 = sshll.u32 [#allocation11], 4
      %s92 = int_to_ptr.vmem [resolvable:$true] %s91
      %94 = dma.hbm_to_vmem [thread:$0]  %s5, 16, %s92, [#allocation12]
    $region25: #{tpu_custom_call.1} parent=1 // pred_fallthru
      _
    // Predicated region
    $region26: #{tpu_custom_call.1} parent=1 // pred_check
      _
    $region27: #{tpu_custom_call.1} parent=1 // pred_check_branch
      %96 = sbr.rel (0) target = $region29
    $region28: #{tpu_custom_call.1} parent=1 // pred_region
      _
    $region29: #{tpu_custom_call.1} parent=1 // pred_fallthru
      _
    // Predicated region
    $region30: #{tpu_custom_call.1} parent=1 // pred_check
      _
    $region31: #{tpu_custom_call.1} parent=1 // pred_check_branch
      %98 = sbr.rel (0) target = $region33
    $region32: #{tpu_custom_call.1} parent=1 // pred_region
      _
    $region33: #{tpu_custom_call.1} parent=1 // pred_fallthru
      _
    // Predicated region
    $region34: #{tpu_custom_call.1} parent=1 // pred_check
      _
    $region35: #{tpu_custom_call.1} parent=1 // pred_check_branch
      %100 = sbr.rel (0) target = $region37
    $region36: #{tpu_custom_call.1} parent=1 // pred_region
      _
    $region37: #{tpu_custom_call.1} parent=1 // pred_fallthru
      _
    // Predicated region
    $region38: #{tpu_custom_call.1} parent=1 // pred_check
      _
    $region39: #{tpu_custom_call.1} parent=1 // pred_check_branch
      %102 = sbr.rel (0) target = $region41
    $region40: #{tpu_custom_call.1} parent=1 // pred_region
      _
    $region41: #{tpu_custom_call.1} parent=1 // pred_fallthru
      _
    // Predicated region
    $region42: #{tpu_custom_call.1} parent=1 // pred_check
      _
    $region43: #{tpu_custom_call.1} parent=1 // pred_check_branch
      %104 = sbr.rel (0) target = $region45
    $region44: #{tpu_custom_call.1} parent=1 // pred_region
      _
    $region45: #{tpu_custom_call.1} parent=1 // pred_fallthru
      _
    // Predicated region
    $region46: #{tpu_custom_call.1} parent=1 // pred_check
      _
    $region47: #{tpu_custom_call.1} parent=1 // pred_check_branch
      %106 = sbr.rel (0) target = $region49
    $region48: #{tpu_custom_call.1} parent=1 // pred_region
      _
    $region49: #{tpu_custom_call.1} parent=1 // pred_fallthru
      _
    // Predicated region
    $region50: #{tpu_custom_call.1} parent=1 // pred_check
      _
    $region51: #{tpu_custom_call.1} parent=1 // pred_check_branch
      %108 = sbr.rel (0) target = $region53
    $region52: #{tpu_custom_call.1} parent=1 // pred_region
      %s110 = ssub.s32 1024, 1024
      %111 = vsyncadd [#allocation12], %s110
      %s112 = sshll.u32 [#allocation13], 4
      %s113 = int_to_ptr.vmem [resolvable:$true] %s112
      %118 = dma.hbm_to_vmem [thread:$0]  %s12, 1024, %s113, [#allocation12], 128, 128, 8
    $region53: #{tpu_custom_call.1} parent=1 // pred_fallthru
      _
    // Predicated region
    $region54: #{tpu_custom_call.1} parent=1 // pred_check
      _
    $region55: #{tpu_custom_call.1} parent=1 // pred_check_branch
      %120 = sbr.rel (0) target = $region57
    $region56: #{tpu_custom_call.1} parent=1 // pred_region
      _
    $region57: #{tpu_custom_call.1} parent=1 // pred_fallthru
      _
    // Predicated region
    $region58: #{tpu_custom_call.1} parent=1 // pred_check
      _
    $region59: #{tpu_custom_call.1} parent=1 // pred_check_branch
      %122 = sbr.rel (0) target = $region61
    $region60: #{tpu_custom_call.1} parent=1 // pred_region
      _
    $region61: #{tpu_custom_call.1} parent=1 // pred_fallthru
      _
    // Predicated region
    $region62: #{tpu_custom_call.1} parent=1 // pred_check
      _
    $region63: #{tpu_custom_call.1} parent=1 // pred_check_branch
      %124 = sbr.rel (0) target = $region65
    $region64: #{tpu_custom_call.1} parent=1 // pred_region
      _
    $region65: #{tpu_custom_call.1} parent=1 // pred_fallthru
      _
    // Predicated region
    $region66: #{tpu_custom_call.1} parent=1 // pred_check
      _
    $region67: #{tpu_custom_call.1} parent=1 // pred_check_branch
      %126 = sbr.rel (0) target = $region69
    $region68: #{tpu_custom_call.1} parent=1 // pred_region
      %s128 = ssub.s32 1024, 1024
      %129 = vsyncadd [#allocation15], %s128
      %s130 = sshll.u32 [#allocation14], 4
      %s131 = int_to_ptr.vmem [resolvable:$true] %s130
      %136 = dma.hbm_to_vmem [thread:$0]  %s16, 1024, %s131, [#allocation15], 128, 128, 8
    $region69: #{tpu_custom_call.1} parent=1 // pred_fallthru
      _
    // Predicated region
    $region70: #{tpu_custom_call.1} parent=1 // pred_check
      _
    $region71: #{tpu_custom_call.1} parent=1 // pred_check_branch
      %138 = sbr.rel (0) target = $region73
    $region72: #{tpu_custom_call.1} parent=1 // pred_region
      _
    $region73: #{tpu_custom_call.1} parent=1 // pred_fallthru
      _
    // Predicated region
    $region74: #{tpu_custom_call.1} parent=1 // pred_check
      _
    $region75: #{tpu_custom_call.1} parent=1 // pred_check_branch
      %140 = sbr.rel (0) target = $region77
    $region76: #{tpu_custom_call.1} parent=1 // pred_region
      _
    $region77: #{tpu_custom_call.1} parent=1 // pred_fallthru
      _
    // Predicated region
    $region78: #{tpu_custom_call.1} parent=1 // pred_check
      _
    $region79: #{tpu_custom_call.1} parent=1 // pred_check_branch
      %142 = sbr.rel (0) target = $region81
    $region80: #{tpu_custom_call.1} parent=1 // pred_region
      _
    $region81: #{tpu_custom_call.1} parent=1 // pred_fallthru
      _
    // Predicated region
    $region82: #{tpu_custom_call.1} parent=1 // pred_check
      _
    $region83: #{tpu_custom_call.1} parent=1 // pred_check_branch
      %144 = sbr.rel (0) target = $region85
    $region84: #{tpu_custom_call.1} parent=1 // pred_region
      _
    $region85: #{tpu_custom_call.1} parent=1 // pred_fallthru
      _
    // Predicated region
    $region86: #{tpu_custom_call.1} parent=1 // pred_check
      _
    $region87: #{tpu_custom_call.1} parent=1 // pred_check_branch
      %146 = sbr.rel (0) target = $region89
    $region88: #{tpu_custom_call.1} parent=1 // pred_region
      _
    $region89: #{tpu_custom_call.1} parent=1 // pred_fallthru
      _
    // Predicated region
    $region90: #{tpu_custom_call.1} parent=1 // pred_check
      _
    $region91: #{tpu_custom_call.1} parent=1 // pred_check_branch
      %148 = sbr.rel (0) target = $region93
    $region92: #{tpu_custom_call.1} parent=1 // pred_region
      %149 = dma.done [#allocation3], 32
    $region93: #{tpu_custom_call.1} parent=1 // pred_fallthru
      _
    // Predicated region
    $region94: #{tpu_custom_call.1} parent=1 // pred_check
      _
    $region95: #{tpu_custom_call.1} parent=1 // pred_check_branch
      %151 = sbr.rel (0) target = $region97
    $region96: #{tpu_custom_call.1} parent=1 // pred_region
      %152 = dma.done [#allocation6], 256
    $region97: #{tpu_custom_call.1} parent=1 // pred_fallthru
      _
    // Predicated region
    $region98: #{tpu_custom_call.1} parent=1 // pred_check
      _
    $region99: #{tpu_custom_call.1} parent=1 // pred_check_branch
      %154 = sbr.rel (0) target = $region101
    $region100: #{tpu_custom_call.1} parent=1 // pred_region
      %155 = dma.done [#allocation6], 128
    $region101: #{tpu_custom_call.1} parent=1 // pred_fallthru
      _
    // Predicated region
    $region102: #{tpu_custom_call.1} parent=1 // pred_check
      _
    $region103: #{tpu_custom_call.1} parent=1 // pred_check_branch
      %157 = sbr.rel (0) target = $region105
    $region104: #{tpu_custom_call.1} parent=1 // pred_region
      %158 = dma.done [#allocation9], 16
    $region105: #{tpu_custom_call.1} parent=1 // pred_fallthru
      _
    // Predicated region
    $region106: #{tpu_custom_call.1} parent=1 // pred_check
      _
    $region107: #{tpu_custom_call.1} parent=1 // pred_check_branch
      %160 = sbr.rel (0) target = $region109
    $region108: #{tpu_custom_call.1} parent=1 // pred_region
      %161 = dma.done [#allocation9], 16
    $region109: #{tpu_custom_call.1} parent=1 // pred_fallthru
      _
    // Predicated region
    $region110: #{tpu_custom_call.1} parent=1 // pred_check
      _
    $region111: #{tpu_custom_call.1} parent=1 // pred_check_branch
      %163 = sbr.rel (0) target = $region113
    $region112: #{tpu_custom_call.1} parent=1 // pred_region
      %164 = dma.done [#allocation12], 16
    $region113: #{tpu_custom_call.1} parent=1 // pred_fallthru
      _
    // Predicated region
    $region114: #{tpu_custom_call.1} parent=1 // pred_check
      _
    $region115: #{tpu_custom_call.1} parent=1 // pred_check_branch
      %166 = sbr.rel (0) target = $region117
    $region116: #{tpu_custom_call.1} parent=1 // pred_region
      %167 = dma.done [#allocation12], 1024
    $region117: #{tpu_custom_call.1} parent=1 // pred_fallthru
      _
    // Predicated region
    $region118: #{tpu_custom_call.1} parent=1 // pred_check
      _
    $region119: #{tpu_custom_call.1} parent=1 // pred_check_branch
      %169 = sbr.rel (0) target = $region121
    $region120: #{tpu_custom_call.1} parent=1 // pred_region
      %170 = dma.done [#allocation15], 1024
    $region121: #{tpu_custom_call.1} parent=1 // pred_fallthru
      _
    %v171 = vld [vmem:[#allocation2] sm:$0x3]
    %vm172 = vcmp.ne.s32.totalorder %v171, 0
    %v173 = vlaneseq
    %v174 = vshrl.u32 %v173, 7
    %v175 = vlaneseq
    %v176 = vand.u32 %v175, 127
    %v177 = vsub.s32 %v176, %v174
    %vm178 = vcmp.ge.s32.totalorder %v177, 1
    %vm179 = vcmp.le.s32.totalorder %v177, 3
    %vm180 = vmand %vm178, %vm179
    %vm181 = vmxor %vm180, 1
    %v182 = vsel %vm172, 1, 0
    %v184 = vunpack.c.l.s4 1966171168
    %v185 = vunpack.c.0.s8 %v184
    %v186 = vlaneseq
    %v187 = vshrl.u32 %v186, 7
    %v188 = vsub.s32 %v185, %v187
    %v189 = vrot.slane %v182, %v188
    %v190 = vcombine.high %v189, %v189
    %v192 = vunpack.c.l.s4 1966171168
    %v193 = vunpack.c.0.s8 %v192
    %v194 = vlaneseq
    %v195 = vshrl.u32 %v194, 7
    %v196 = vsub.s32 %v193, %v195
    %v197 = vrot.slane %v189, %v196
    %v199 = vunpack.c.l.s4 1966171168
    %v200 = vunpack.c.0.s8 %v199
    %v201 = vlaneseq
    %v202 = vshrl.u32 %v201, 7
    %v203 = vsub.s32 %v200, %v202
    %v204 = vrot.slane %v190, %v203
    %vm205 = vcmp.ne.s32.totalorder %v197, 0
    %vm206 = vcmp.ne.s32.totalorder %v204, 0
    %v207 = vsel %vm205, 1, 0
    %v208 = vsel %vm206, 1, 0
    %v209 = vlaneseq
    %v210 = vshrl.u32 %v209, 7
    %v211 = vsub.s32 0, %v210
    %v212 = vrot.slane %v207, %v211
    %v213 = vlaneseq
    %v214 = vshrl.u32 %v213, 7
    %v215 = vsub.s32 0, %v214
    %v216 = vrot.slane %v208, %v215
    %vm217 = vcmp.eq.s32.totalorder %v212, 1
    %vm218 = vcmp.eq.s32.totalorder %v216, 1
    %v219 = vsel %vm181, 1, 0
    %vm220 = vcmp.eq.s32.totalorder %v219, 1
    %vm221 = vmand %vm217, %vm220
    %vm222 = vmand %vm218, %vm220
    %v223 = vsel %vm221, 0.0, -1e+30
    %v224 = vsel %vm222, 0.0, -1e+30
    %vm225 = vcmp.ge.s32.totalorder %v176, 0
    %vm226 = vcmp.lt.s32.totalorder %v176, 8
    %vm227 = vmand %vm225, %vm226
    %vm228 = vcmp.ge.s32.totalorder %v176, 8
    %vm229 = vcmp.lt.s32.totalorder %v176, 16
    %vm230 = vmand %vm228, %vm229
    %vm231 = vcmp.ge.s32.totalorder %v176, 16
    %vm232 = vcmp.lt.s32.totalorder %v176, 24
    %vm233 = vmand %vm231, %vm232
    %vm234 = vcmp.ge.s32.totalorder %v176, 24
    %vm235 = vcmp.lt.s32.totalorder %v176, 32
    %vm236 = vmand %vm234, %vm235
    %v237 = vld [vmem:[#allocation7] sm:$0xff]
    %v238 = vld [vmem:[#allocation8] sm:$0x1]
    %v240 = vlaneseq
    %v241 = vshrl.u32 %v240, 7
    %v242 = vsub.s32 0, %v241
    %v243 = vrot.slane %v238, %v242
    %v245 = vadd.f32 %v237, %v243
    %v246 = vld [vmem:[#allocation5] sm:$0xff]
    %v247 = vld [vmem:[#allocation5 + $0x8] sm:$0xff]
    %v248 = vadd.f32 %v246, %v245
    %v249 = vadd.f32 %v247, %v245
    %v250 = vld [vmem:[#allocation10] sm:$0x1]
    %v251 = vld [vmem:[#allocation11] sm:$0x1]
    %vm252 = vcmask 261120
    %v253 = vsel %vm252, %v248, 0.0
    %254 = vadd.xlane.f32.xlu0 %v253
    %v255 = vpop.xlane.xlu0 %254
    %v256 = vsel %vm252, %v249, 0.0
    %257 = vadd.xlane.f32.xlu0 %v256
    %v258 = vpop.xlane.xlu0 %257
    %v259 = vrcp.pop 32.0
    %v260 = vmul.f32 %v255, %v259
    %v261 = vmul.f32 %v258, %v259
    %v262 = vsub.f32 %v248, %v260
    %v263 = vsub.f32 %v249, %v261
    %v264 = vmul.f32 %v262, %v262
    %v265 = vmul.f32 %v263, %v263
    %v266 = vsel %vm252, %v264, 0.0
    %267 = vadd.xlane.f32.xlu0 %v266
    %v268 = vpop.xlane.xlu0 %267
    %v269 = vsel %vm252, %v265, 0.0
    %270 = vadd.xlane.f32.xlu0 %v269
    %v271 = vpop.xlane.xlu0 %270
    %v272 = vmul.f32 %v268, %v259
    %v273 = vmul.f32 %v271, %v259
    %v274 = vadd.f32 %v272, 1e-12
    %v275 = vadd.f32 %v273, 1e-12
    %v276 = vrsqrt.pop %v274
    %v277 = vrsqrt.pop %v275
    %v278 = vmul.f32 %v262, %v276
    %v279 = vmul.f32 %v263, %v277
    %v281 = vlaneseq
    %v282 = vshrl.u32 %v281, 7
    %v283 = vsub.s32 0, %v282
    %v284 = vrot.slane %v250, %v283
    %v286 = vmul.f32 %v278, %v284
    %v287 = vmul.f32 %v279, %v284
    %v289 = vlaneseq
    %v290 = vshrl.u32 %v289, 7
    %v291 = vsub.s32 0, %v290
    %v292 = vrot.slane %v251, %v291
    %v294 = vadd.f32 %v286, %v292
    %v295 = vadd.f32 %v287, %v292
    %v296 = vld [vmem:[%s6] sm:$0xff]
    %v297 = vld [vmem:[%s6 + $0x8] sm:$0xff]
    %v298 = vld [vmem:[%s6 + $0x10] sm:$0xff]
    %v299 = vld [vmem:[%s6 + $0x18] sm:$0xff]
    %v300 = vld [vmem:[%s9] sm:$0x1]
    %v302 = vlaneseq
    %v303 = vshrl.u32 %v302, 7
    %v304 = vsub.s32 0, %v303
    %v305 = vrot.slane %v300, %v304
    %v308 = vsel %vm252, %v294, 0
    %v311 = vsel %vm252, %v295, 0
    %313 = vmatprep.subr.mxu0 0.0
    %314 = vmatpush1.msra.mxu0 0.0
    %315 = vmatprep.subr.mxu0 0.0
    %316 = vmatpush1.msra.mxu0 0.0
    %317 = vmatprep.subr.mxu0 0.0
    %318 = vmatpush1.msra.mxu0 0.0
    %319 = vmatprep.subr.mxu0 0.0
    %320 = vmatpush1.msra.mxu0 0.0
    %321 = vmatprep.subr.mxu0 0.0
    %322 = vmatpush1.msra.mxu0 0.0
    %323 = vmatprep.subr.mxu0 0.0
    %324 = vmatpush1.msra.mxu0 0.0
    %325 = vmatprep.subr.mxu0 0.0
    %326 = vmatpush1.msra.mxu0 0.0
    %327 = vmatprep.subr.mxu0 0.0
    %328 = vmatpush1.msra.mxu0 0.0
    %329 = vmatprep.subr.mxu0 0.0
    %330 = vmatpush1.msra.mxu0 0.0
    %331 = vmatprep.subr.mxu0 0.0
    %332 = vmatpush1.msra.mxu0 0.0
    %333 = vmatprep.subr.mxu0 0.0
    %334 = vmatpush1.msra.mxu0 0.0
    %335 = vmatprep.subr.mxu0 0.0
    %336 = vmatpush1.msra.mxu0 0.0
    %337 = vmatprep.subr.mxu0 0.0
    %338 = vmatpush1.msra.mxu0 %v299
    %339 = vmatprep.subr.mxu0 0.0
    %340 = vmatpush1.msra.mxu0 %v298
    %341 = vmatprep.subr.mxu0 0.0
    %342 = vmatpush1.msra.mxu0 %v297
    %343 = vmatprep.subr.mxu0 0.0
    %344 = vmatpush1.msra.mxu0 %v296
    %345 = vmatprep.subr.mxu0 0.0
    %346 = vmatpush2.msra.mxu0 0.0
    %347 = vmatprep.subr.mxu0 0.0
    %348 = vmatpush2.msra.mxu0 0.0
    %349 = vmatprep.subr.mxu0 0.0
    %350 = vmatpush2.msra.mxu0 0.0
    %351 = vmatprep.subr.mxu0 0.0
    %352 = vmatpush2.msra.mxu0 0.0
    %353 = vmatprep.subr.mxu0 0.0
    %354 = vmatpush2.msra.mxu0 0.0
    %355 = vmatprep.subr.mxu0 0.0
    %356 = vmatpush2.msra.mxu0 0.0
    %357 = vmatprep.subr.mxu0 0.0
    %358 = vmatpush2.msra.mxu0 0.0
    %359 = vmatprep.subr.mxu0 0.0
    %360 = vmatpush2.msra.mxu0 0.0
    %361 = vmatprep.subr.mxu0 0.0
    %362 = vmatpush2.msra.mxu0 0.0
    %363 = vmatprep.subr.mxu0 0.0
    %364 = vmatpush2.msra.mxu0 0.0
    %365 = vmatprep.subr.mxu0 0.0
    %366 = vmatpush2.msra.mxu0 0.0
    %367 = vmatprep.subr.mxu0 0.0
    %368 = vmatpush2.msra.mxu0 0.0
    %369 = vmatprep.subr.mxu0 0.0
    %370 = vmatpush2.msra.mxu0 0.0
    %371 = vmatprep.subr.mxu0 0.0
    %372 = vmatpush2.msra.mxu0 0.0
    %373 = vmatprep.subr.mxu0 0.0
    %374 = vmatpush2.msra.mxu0 0.0
    %375 = vmatprep.subr.mxu0 0.0
    %376 = vmatpush2.msra.mxu0 0.0
    %377 = vmatprep.mubr.f32.mxu0 0.0
    %378 = vmatmul.mubr.f32.gmra.mxu0 %v308
    %v379 = vpop.f32.mrf.mxu0
    %v380 = vadd.f32 %v305, %v379
    %v381 = vpop.f32.mrf.mxu0
    %382 = vmatprep.mubr.f32.mxu0 0.0
    %383 = vmatmul.mubr.f32.gmra.mxu0 %v311
    %v384 = vpop.f32.mrf.mxu0
    %v385 = vadd.f32 %v305, %v384
    %v386 = vpop.f32.mrf.mxu0
    %387 = vdwg.mxu0
    %v388 = vld [vmem:[%s7] sm:$0xff]
    %v389 = vld [vmem:[%s7 + $0x8] sm:$0xff]
    %v390 = vld [vmem:[%s7 + $0x10] sm:$0xff]
    %v391 = vld [vmem:[%s7 + $0x18] sm:$0xff]
    %v392 = vld [vmem:[%s10] sm:$0x1]
    %v394 = vlaneseq
    %v395 = vshrl.u32 %v394, 7
    %v396 = vsub.s32 0, %v395
    %v397 = vrot.slane %v392, %v396
    %399 = vmatprep.subr.mxu0 0.0
    %400 = vmatpush1.msra.mxu0 0.0
    %401 = vmatprep.subr.mxu0 0.0
    %402 = vmatpush1.msra.mxu0 0.0
    %403 = vmatprep.subr.mxu0 0.0
    %404 = vmatpush1.msra.mxu0 0.0
    %405 = vmatprep.subr.mxu0 0.0
    %406 = vmatpush1.msra.mxu0 0.0
    %407 = vmatprep.subr.mxu0 0.0
    %408 = vmatpush1.msra.mxu0 0.0
    %409 = vmatprep.subr.mxu0 0.0
    %410 = vmatpush1.msra.mxu0 0.0
    %411 = vmatprep.subr.mxu0 0.0
    %412 = vmatpush1.msra.mxu0 0.0
    %413 = vmatprep.subr.mxu0 0.0
    %414 = vmatpush1.msra.mxu0 0.0
    %415 = vmatprep.subr.mxu0 0.0
    %416 = vmatpush1.msra.mxu0 0.0
    %417 = vmatprep.subr.mxu0 0.0
    %418 = vmatpush1.msra.mxu0 0.0
    %419 = vmatprep.subr.mxu0 0.0
    %420 = vmatpush1.msra.mxu0 0.0
    %421 = vmatprep.subr.mxu0 0.0
    %422 = vmatpush1.msra.mxu0 0.0
    %423 = vmatprep.subr.mxu0 0.0
    %424 = vmatpush1.msra.mxu0 %v391
    %425 = vmatprep.subr.mxu0 0.0
    %426 = vmatpush1.msra.mxu0 %v390
    %427 = vmatprep.subr.mxu0 0.0
    %428 = vmatpush1.msra.mxu0 %v389
    %429 = vmatprep.subr.mxu0 0.0
    %430 = vmatpush1.msra.mxu0 %v388
    %431 = vmatprep.subr.mxu0 0.0
    %432 = vmatpush2.msra.mxu0 0.0
    %433 = vmatprep.subr.mxu0 0.0
    %434 = vmatpush2.msra.mxu0 0.0
    %435 = vmatprep.subr.mxu0 0.0
    %436 = vmatpush2.msra.mxu0 0.0
    %437 = vmatprep.subr.mxu0 0.0
    %438 = vmatpush2.msra.mxu0 0.0
    %439 = vmatprep.subr.mxu0 0.0
    %440 = vmatpush2.msra.mxu0 0.0
    %441 = vmatprep.subr.mxu0 0.0
    %442 = vmatpush2.msra.mxu0 0.0
    %443 = vmatprep.subr.mxu0 0.0
    %444 = vmatpush2.msra.mxu0 0.0
    %445 = vmatprep.subr.mxu0 0.0
    %446 = vmatpush2.msra.mxu0 0.0
    %447 = vmatprep.subr.mxu0 0.0
    %448 = vmatpush2.msra.mxu0 0.0
    %449 = vmatprep.subr.mxu0 0.0
    %450 = vmatpush2.msra.mxu0 0.0
    %451 = vmatprep.subr.mxu0 0.0
    %452 = vmatpush2.msra.mxu0 0.0
    %453 = vmatprep.subr.mxu0 0.0
    %454 = vmatpush2.msra.mxu0 0.0
    %455 = vmatprep.subr.mxu0 0.0
    %456 = vmatpush2.msra.mxu0 0.0
    %457 = vmatprep.subr.mxu0 0.0
    %458 = vmatpush2.msra.mxu0 0.0
    %459 = vmatprep.subr.mxu0 0.0
    %460 = vmatpush2.msra.mxu0 0.0
    %461 = vmatprep.subr.mxu0 0.0
    %462 = vmatpush2.msra.mxu0 0.0
    %463 = vmatprep.mubr.f32.mxu0 0.0
    %464 = vmatmul.mubr.f32.gmra.mxu0 %v308
    %v465 = vpop.f32.mrf.mxu0
    %v466 = vadd.f32 %v397, %v465
    %v467 = vpop.f32.mrf.mxu0
    %468 = vmatprep.mubr.f32.mxu0 0.0
    %469 = vmatmul.mubr.f32.gmra.mxu0 %v311
    %v470 = vpop.f32.mrf.mxu0
    %v471 = vadd.f32 %v397, %v470
    %v472 = vpop.f32.mrf.mxu0
    %473 = vdwg.mxu0
    %v474 = vld [vmem:[%s8] sm:$0xff]
    %v475 = vld [vmem:[%s8 + $0x8] sm:$0xff]
    %v476 = vld [vmem:[%s8 + $0x10] sm:$0xff]
    %v477 = vld [vmem:[%s8 + $0x18] sm:$0xff]
    %v478 = vld [vmem:[%s11] sm:$0x1]
    %v480 = vlaneseq
    %v481 = vshrl.u32 %v480, 7
    %v482 = vsub.s32 0, %v481
    %v483 = vrot.slane %v478, %v482
    %485 = vmatprep.subr.mxu0 0.0
    %486 = vmatpush1.msra.mxu0 0.0
    %487 = vmatprep.subr.mxu0 0.0
    %488 = vmatpush1.msra.mxu0 0.0
    %489 = vmatprep.subr.mxu0 0.0
    %490 = vmatpush1.msra.mxu0 0.0
    %491 = vmatprep.subr.mxu0 0.0
    %492 = vmatpush1.msra.mxu0 0.0
    %493 = vmatprep.subr.mxu0 0.0
    %494 = vmatpush1.msra.mxu0 0.0
    %495 = vmatprep.subr.mxu0 0.0
    %496 = vmatpush1.msra.mxu0 0.0
    %497 = vmatprep.subr.mxu0 0.0
    %498 = vmatpush1.msra.mxu0 0.0
    %499 = vmatprep.subr.mxu0 0.0
    %500 = vmatpush1.msra.mxu0 0.0
    %501 = vmatprep.subr.mxu0 0.0
    %502 = vmatpush1.msra.mxu0 0.0
    %503 = vmatprep.subr.mxu0 0.0
    %504 = vmatpush1.msra.mxu0 0.0
    %505 = vmatprep.subr.mxu0 0.0
    %506 = vmatpush1.msra.mxu0 0.0
    %507 = vmatprep.subr.mxu0 0.0
    %508 = vmatpush1.msra.mxu0 0.0
    %509 = vmatprep.subr.mxu0 0.0
    %510 = vmatpush1.msra.mxu0 %v477
    %511 = vmatprep.subr.mxu0 0.0
    %512 = vmatpush1.msra.mxu0 %v476
    %513 = vmatprep.subr.mxu0 0.0
    %514 = vmatpush1.msra.mxu0 %v475
    %515 = vmatprep.subr.mxu0 0.0
    %516 = vmatpush1.msra.mxu0 %v474
    %517 = vmatprep.subr.mxu0 0.0
    %518 = vmatpush2.msra.mxu0 0.0
    %519 = vmatprep.subr.mxu0 0.0
    %520 = vmatpush2.msra.mxu0 0.0
    %521 = vmatprep.subr.mxu0 0.0
    %522 = vmatpush2.msra.mxu0 0.0
    %523 = vmatprep.subr.mxu0 0.0
    %524 = vmatpush2.msra.mxu0 0.0
    %525 = vmatprep.subr.mxu0 0.0
    %526 = vmatpush2.msra.mxu0 0.0
    %527 = vmatprep.subr.mxu0 0.0
    %528 = vmatpush2.msra.mxu0 0.0
    %529 = vmatprep.subr.mxu0 0.0
    %530 = vmatpush2.msra.mxu0 0.0
    %531 = vmatprep.subr.mxu0 0.0
    %532 = vmatpush2.msra.mxu0 0.0
    %533 = vmatprep.subr.mxu0 0.0
    %534 = vmatpush2.msra.mxu0 0.0
    %535 = vmatprep.subr.mxu0 0.0
    %536 = vmatpush2.msra.mxu0 0.0
    %537 = vmatprep.subr.mxu0 0.0
    %538 = vmatpush2.msra.mxu0 0.0
    %539 = vmatprep.subr.mxu0 0.0
    %540 = vmatpush2.msra.mxu0 0.0
    %541 = vmatprep.subr.mxu0 0.0
    %542 = vmatpush2.msra.mxu0 0.0
    %543 = vmatprep.subr.mxu0 0.0
    %544 = vmatpush2.msra.mxu0 0.0
    %545 = vmatprep.subr.mxu0 0.0
    %546 = vmatpush2.msra.mxu0 0.0
    %547 = vmatprep.subr.mxu0 0.0
    %548 = vmatpush2.msra.mxu0 0.0
    %549 = vmatprep.mubr.f32.mxu0 0.0
    %550 = vmatmul.mubr.f32.gmra.mxu0 %v308
    %v551 = vpop.f32.mrf.mxu0
    %v552 = vadd.f32 %v483, %v551
    %v553 = vpop.f32.mrf.mxu0
    %554 = vmatprep.mubr.f32.mxu0 0.0
    %555 = vmatmul.mubr.f32.gmra.mxu0 %v311
    %v556 = vpop.f32.mrf.mxu0
    %v557 = vadd.f32 %v483, %v556
    %v558 = vpop.f32.mrf.mxu0
    %559 = vdwg.mxu0
    %v560 = vsel %vm227, 1, 0
    %vm561 = vcmp.eq.s32.totalorder %v560, 1
    %v562 = vsel %vm561, %v466, 0.0
    %v563 = vsel %vm561, %v471, 0.0
    %v565 = vsel %vm252, %v380, 0
    %v568 = vsel %vm252, %v562, 0
    %570 = vmatprep.subr.mxu0 0.0
    %571 = vmatpush1.xpose.msra.mxu0 0.0
    %572 = vmatprep.subr.mxu0 0.0
    %573 = vmatpush1.xpose.msra.mxu0 0.0
    %574 = vmatprep.subr.mxu0 0.0
    %575 = vmatpush1.xpose.msra.mxu0 0.0
    %576 = vmatprep.subr.mxu0 0.0
    %577 = vmatpush1.xpose.msra.mxu0 0.0
    %578 = vmatprep.subr.mxu0 0.0
    %579 = vmatpush1.xpose.msra.mxu0 0.0
    %580 = vmatprep.subr.mxu0 0.0
    %581 = vmatpush1.xpose.msra.mxu0 0.0
    %582 = vmatprep.subr.mxu0 0.0
    %583 = vmatpush1.xpose.msra.mxu0 0.0
    %584 = vmatprep.subr.mxu0 0.0
    %585 = vmatpush1.xpose.msra.mxu0 0.0
    %586 = vmatprep.subr.mxu0 0.0
    %587 = vmatpush1.xpose.msra.mxu0 0.0
    %588 = vmatprep.subr.mxu0 0.0
    %589 = vmatpush1.xpose.msra.mxu0 0.0
    %590 = vmatprep.subr.mxu0 0.0
    %591 = vmatpush1.xpose.msra.mxu0 0.0
    %592 = vmatprep.subr.mxu0 0.0
    %593 = vmatpush1.xpose.msra.mxu0 0.0
    %594 = vmatprep.subr.mxu0 0.0
    %595 = vmatpush1.xpose.msra.mxu0 0.0
    %596 = vmatprep.subr.mxu0 0.0
    %597 = vmatpush1.xpose.msra.mxu0 0.0
    %598 = vmatprep.subr.mxu0 0.0
    %599 = vmatpush1.xpose.msra.mxu0 0.0
    %600 = vmatprep.subr.mxu0 0.0
    %601 = vmatpush1.xpose.msra.mxu0 %v568
    %602 = vmatprep.subr.mxu0 0.0
    %603 = vmatpush2.xpose.msra.mxu0 0.0
    %604 = vmatprep.subr.mxu0 0.0
    %605 = vmatpush2.xpose.msra.mxu0 0.0
    %606 = vmatprep.subr.mxu0 0.0
    %607 = vmatpush2.xpose.msra.mxu0 0.0
    %608 = vmatprep.subr.mxu0 0.0
    %609 = vmatpush2.xpose.msra.mxu0 0.0
    %610 = vmatprep.subr.mxu0 0.0
    %611 = vmatpush2.xpose.msra.mxu0 0.0
    %612 = vmatprep.subr.mxu0 0.0
    %613 = vmatpush2.xpose.msra.mxu0 0.0
    %614 = vmatprep.subr.mxu0 0.0
    %615 = vmatpush2.xpose.msra.mxu0 0.0
    %616 = vmatprep.subr.mxu0 0.0
    %617 = vmatpush2.xpose.msra.mxu0 0.0
    %618 = vmatprep.subr.mxu0 0.0
    %619 = vmatpush2.xpose.msra.mxu0 0.0
    %620 = vmatprep.subr.mxu0 0.0
    %621 = vmatpush2.xpose.msra.mxu0 0.0
    %622 = vmatprep.subr.mxu0 0.0
    %623 = vmatpush2.xpose.msra.mxu0 0.0
    %624 = vmatprep.subr.mxu0 0.0
    %625 = vmatpush2.xpose.msra.mxu0 0.0
    %626 = vmatprep.subr.mxu0 0.0
    %627 = vmatpush2.xpose.msra.mxu0 0.0
    %628 = vmatprep.subr.mxu0 0.0
    %629 = vmatpush2.xpose.msra.mxu0 0.0
    %630 = vmatprep.subr.mxu0 0.0
    %631 = vmatpush2.xpose.msra.mxu0 0.0
    %632 = vmatprep.subr.mxu0 0.0
    %633 = vmatpush2.xpose.msra.mxu0 0.0
    %634 = vmatprep.mubr.f32.mxu0 0.0
    %635 = vmatmul.mubr.f32.gmra.mxu0 %v565
    %v636 = vpop.f32.mrf.mxu0
    %v637 = vadd.f32 0.0, %v636
    %v638 = vpop.f32.mrf.mxu0
    %639 = vdwg.mxu0
    %v641 = vsel %vm252, %v385, 0
    %v644 = vsel %vm252, %v563, 0
    %646 = vmatprep.subr.mxu0 0.0
    %647 = vmatpush1.xpose.msra.mxu0 0.0
    %648 = vmatprep.subr.mxu0 0.0
    %649 = vmatpush1.xpose.msra.mxu0 0.0
    %650 = vmatprep.subr.mxu0 0.0
    %651 = vmatpush1.xpose.msra.mxu0 0.0
    %652 = vmatprep.subr.mxu0 0.0
    %653 = vmatpush1.xpose.msra.mxu0 0.0
    %654 = vmatprep.subr.mxu0 0.0
    %655 = vmatpush1.xpose.msra.mxu0 0.0
    %656 = vmatprep.subr.mxu0 0.0
    %657 = vmatpush1.xpose.msra.mxu0 0.0
    %658 = vmatprep.subr.mxu0 0.0
    %659 = vmatpush1.xpose.msra.mxu0 0.0
    %660 = vmatprep.subr.mxu0 0.0
    %661 = vmatpush1.xpose.msra.mxu0 0.0
    %662 = vmatprep.subr.mxu0 0.0
    %663 = vmatpush1.xpose.msra.mxu0 0.0
    %664 = vmatprep.subr.mxu0 0.0
    %665 = vmatpush1.xpose.msra.mxu0 0.0
    %666 = vmatprep.subr.mxu0 0.0
    %667 = vmatpush1.xpose.msra.mxu0 0.0
    %668 = vmatprep.subr.mxu0 0.0
    %669 = vmatpush1.xpose.msra.mxu0 0.0
    %670 = vmatprep.subr.mxu0 0.0
    %671 = vmatpush1.xpose.msra.mxu0 0.0
    %672 = vmatprep.subr.mxu0 0.0
    %673 = vmatpush1.xpose.msra.mxu0 0.0
    %674 = vmatprep.subr.mxu0 0.0
    %675 = vmatpush1.xpose.msra.mxu0 0.0
    %676 = vmatprep.subr.mxu0 0.0
    %677 = vmatpush1.xpose.msra.mxu0 %v644
    %678 = vmatprep.subr.mxu0 0.0
    %679 = vmatpush2.xpose.msra.mxu0 0.0
    %680 = vmatprep.subr.mxu0 0.0
    %681 = vmatpush2.xpose.msra.mxu0 0.0
    %682 = vmatprep.subr.mxu0 0.0
    %683 = vmatpush2.xpose.msra.mxu0 0.0
    %684 = vmatprep.subr.mxu0 0.0
    %685 = vmatpush2.xpose.msra.mxu0 0.0
    %686 = vmatprep.subr.mxu0 0.0
    %687 = vmatpush2.xpose.msra.mxu0 0.0
    %688 = vmatprep.subr.mxu0 0.0
    %689 = vmatpush2.xpose.msra.mxu0 0.0
    %690 = vmatprep.subr.mxu0 0.0
    %691 = vmatpush2.xpose.msra.mxu0 0.0
    %692 = vmatprep.subr.mxu0 0.0
    %693 = vmatpush2.xpose.msra.mxu0 0.0
    %694 = vmatprep.subr.mxu0 0.0
    %695 = vmatpush2.xpose.msra.mxu0 0.0
    %696 = vmatprep.subr.mxu0 0.0
    %697 = vmatpush2.xpose.msra.mxu0 0.0
    %698 = vmatprep.subr.mxu0 0.0
    %699 = vmatpush2.xpose.msra.mxu0 0.0
    %700 = vmatprep.subr.mxu0 0.0
    %701 = vmatpush2.xpose.msra.mxu0 0.0
    %702 = vmatprep.subr.mxu0 0.0
    %703 = vmatpush2.xpose.msra.mxu0 0.0
    %704 = vmatprep.subr.mxu0 0.0
    %705 = vmatpush2.xpose.msra.mxu0 0.0
    %706 = vmatprep.subr.mxu0 0.0
    %707 = vmatpush2.xpose.msra.mxu0 0.0
    %708 = vmatprep.subr.mxu0 0.0
    %709 = vmatpush2.xpose.msra.mxu0 0.0
    %710 = vmatprep.mubr.f32.mxu0 0.0
    %711 = vmatmul.mubr.f32.gmra.mxu0 %v641
    %v712 = vpop.f32.mrf.mxu0
    %v713 = vadd.f32 0.0, %v712
    %v714 = vpop.f32.mrf.mxu0
    %715 = vdwg.mxu0
    %v716 = vsel %vm230, 1, 0
    %vm717 = vcmp.eq.s32.totalorder %v716, 1
    %v718 = vsel %vm717, %v466, 0.0
    %v719 = vsel %vm717, %v471, 0.0
    %v721 = vsel %vm252, %v718, 0
    %723 = vmatprep.subr.mxu0 0.0
    %724 = vmatpush1.xpose.msra.mxu0 0.0
    %725 = vmatprep.subr.mxu0 0.0
    %726 = vmatpush1.xpose.msra.mxu0 0.0
    %727 = vmatprep.subr.mxu0 0.0
    %728 = vmatpush1.xpose.msra.mxu0 0.0
    %729 = vmatprep.subr.mxu0 0.0
    %730 = vmatpush1.xpose.msra.mxu0 0.0
    %731 = vmatprep.subr.mxu0 0.0
    %732 = vmatpush1.xpose.msra.mxu0 0.0
    %733 = vmatprep.subr.mxu0 0.0
    %734 = vmatpush1.xpose.msra.mxu0 0.0
    %735 = vmatprep.subr.mxu0 0.0
    %736 = vmatpush1.xpose.msra.mxu0 0.0
    %737 = vmatprep.subr.mxu0 0.0
    %738 = vmatpush1.xpose.msra.mxu0 0.0
    %739 = vmatprep.subr.mxu0 0.0
    %740 = vmatpush1.xpose.msra.mxu0 0.0
    %741 = vmatprep.subr.mxu0 0.0
    %742 = vmatpush1.xpose.msra.mxu0 0.0
    %743 = vmatprep.subr.mxu0 0.0
    %744 = vmatpush1.xpose.msra.mxu0 0.0
    %745 = vmatprep.subr.mxu0 0.0
    %746 = vmatpush1.xpose.msra.mxu0 0.0
    %747 = vmatprep.subr.mxu0 0.0
    %748 = vmatpush1.xpose.msra.mxu0 0.0
    %749 = vmatprep.subr.mxu0 0.0
    %750 = vmatpush1.xpose.msra.mxu0 0.0
    %751 = vmatprep.subr.mxu0 0.0
    %752 = vmatpush1.xpose.msra.mxu0 0.0
    %753 = vmatprep.subr.mxu0 0.0
    %754 = vmatpush1.xpose.msra.mxu0 %v721
    %755 = vmatprep.subr.mxu0 0.0
    %756 = vmatpush2.xpose.msra.mxu0 0.0
    %757 = vmatprep.subr.mxu0 0.0
    %758 = vmatpush2.xpose.msra.mxu0 0.0
    %759 = vmatprep.subr.mxu0 0.0
    %760 = vmatpush2.xpose.msra.mxu0 0.0
    %761 = vmatprep.subr.mxu0 0.0
    %762 = vmatpush2.xpose.msra.mxu0 0.0
    %763 = vmatprep.subr.mxu0 0.0
    %764 = vmatpush2.xpose.msra.mxu0 0.0
    %765 = vmatprep.subr.mxu0 0.0
    %766 = vmatpush2.xpose.msra.mxu0 0.0
    %767 = vmatprep.subr.mxu0 0.0
    %768 = vmatpush2.xpose.msra.mxu0 0.0
    %769 = vmatprep.subr.mxu0 0.0
    %770 = vmatpush2.xpose.msra.mxu0 0.0
    %771 = vmatprep.subr.mxu0 0.0
    %772 = vmatpush2.xpose.msra.mxu0 0.0
    %773 = vmatprep.subr.mxu0 0.0
    %774 = vmatpush2.xpose.msra.mxu0 0.0
    %775 = vmatprep.subr.mxu0 0.0
    %776 = vmatpush2.xpose.msra.mxu0 0.0
    %777 = vmatprep.subr.mxu0 0.0
    %778 = vmatpush2.xpose.msra.mxu0 0.0
    %779 = vmatprep.subr.mxu0 0.0
    %780 = vmatpush2.xpose.msra.mxu0 0.0
    %781 = vmatprep.subr.mxu0 0.0
    %782 = vmatpush2.xpose.msra.mxu0 0.0
    %783 = vmatprep.subr.mxu0 0.0
    %784 = vmatpush2.xpose.msra.mxu0 0.0
    %785 = vmatprep.subr.mxu0 0.0
    %786 = vmatpush2.xpose.msra.mxu0 0.0
    %787 = vmatprep.mubr.f32.mxu0 0.0
    %788 = vmatmul.mubr.f32.gmra.mxu0 %v565
    %v789 = vpop.f32.mrf.mxu0
    %v790 = vadd.f32 0.0, %v789
    %v791 = vpop.f32.mrf.mxu0
    %792 = vdwg.mxu0
    %v794 = vsel %vm252, %v719, 0
    %796 = vmatprep.subr.mxu0 0.0
    %797 = vmatpush1.xpose.msra.mxu0 0.0
    %798 = vmatprep.subr.mxu0 0.0
    %799 = vmatpush1.xpose.msra.mxu0 0.0
    %800 = vmatprep.subr.mxu0 0.0
    %801 = vmatpush1.xpose.msra.mxu0 0.0
    %802 = vmatprep.subr.mxu0 0.0
    %803 = vmatpush1.xpose.msra.mxu0 0.0
    %804 = vmatprep.subr.mxu0 0.0
    %805 = vmatpush1.xpose.msra.mxu0 0.0
    %806 = vmatprep.subr.mxu0 0.0
    %807 = vmatpush1.xpose.msra.mxu0 0.0
    %808 = vmatprep.subr.mxu0 0.0
    %809 = vmatpush1.xpose.msra.mxu0 0.0
    %810 = vmatprep.subr.mxu0 0.0
    %811 = vmatpush1.xpose.msra.mxu0 0.0
    %812 = vmatprep.subr.mxu0 0.0
    %813 = vmatpush1.xpose.msra.mxu0 0.0
    %814 = vmatprep.subr.mxu0 0.0
    %815 = vmatpush1.xpose.msra.mxu0 0.0
    %816 = vmatprep.subr.mxu0 0.0
    %817 = vmatpush1.xpose.msra.mxu0 0.0
    %818 = vmatprep.subr.mxu0 0.0
    %819 = vmatpush1.xpose.msra.mxu0 0.0
    %820 = vmatprep.subr.mxu0 0.0
    %821 = vmatpush1.xpose.msra.mxu0 0.0
    %822 = vmatprep.subr.mxu0 0.0
    %823 = vmatpush1.xpose.msra.mxu0 0.0
    %824 = vmatprep.subr.mxu0 0.0
    %825 = vmatpush1.xpose.msra.mxu0 0.0
    %826 = vmatprep.subr.mxu0 0.0
    %827 = vmatpush1.xpose.msra.mxu0 %v794
    %828 = vmatprep.subr.mxu0 0.0
    %829 = vmatpush2.xpose.msra.mxu0 0.0
    %830 = vmatprep.subr.mxu0 0.0
    %831 = vmatpush2.xpose.msra.mxu0 0.0
    %832 = vmatprep.subr.mxu0 0.0
    %833 = vmatpush2.xpose.msra.mxu0 0.0
    %834 = vmatprep.subr.mxu0 0.0
    %835 = vmatpush2.xpose.msra.mxu0 0.0
    %836 = vmatprep.subr.mxu0 0.0
    %837 = vmatpush2.xpose.msra.mxu0 0.0
    %838 = vmatprep.subr.mxu0 0.0
    %839 = vmatpush2.xpose.msra.mxu0 0.0
    %840 = vmatprep.subr.mxu0 0.0
    %841 = vmatpush2.xpose.msra.mxu0 0.0
    %842 = vmatprep.subr.mxu0 0.0
    %843 = vmatpush2.xpose.msra.mxu0 0.0
    %844 = vmatprep.subr.mxu0 0.0
    %845 = vmatpush2.xpose.msra.mxu0 0.0
    %846 = vmatprep.subr.mxu0 0.0
    %847 = vmatpush2.xpose.msra.mxu0 0.0
    %848 = vmatprep.subr.mxu0 0.0
    %849 = vmatpush2.xpose.msra.mxu0 0.0
    %850 = vmatprep.subr.mxu0 0.0
    %851 = vmatpush2.xpose.msra.mxu0 0.0
    %852 = vmatprep.subr.mxu0 0.0
    %853 = vmatpush2.xpose.msra.mxu0 0.0
    %854 = vmatprep.subr.mxu0 0.0
    %855 = vmatpush2.xpose.msra.mxu0 0.0
    %856 = vmatprep.subr.mxu0 0.0
    %857 = vmatpush2.xpose.msra.mxu0 0.0
    %858 = vmatprep.subr.mxu0 0.0
    %859 = vmatpush2.xpose.msra.mxu0 0.0
    %860 = vmatprep.mubr.f32.mxu0 0.0
    %861 = vmatmul.mubr.f32.gmra.mxu0 %v641
    %v862 = vpop.f32.mrf.mxu0
    %v863 = vadd.f32 0.0, %v862
    %v864 = vpop.f32.mrf.mxu0
    %865 = vdwg.mxu0
    %v866 = vsel %vm233, 1, 0
    %vm867 = vcmp.eq.s32.totalorder %v866, 1
    %v868 = vsel %vm867, %v466, 0.0
    %v869 = vsel %vm867, %v471, 0.0
    %v871 = vsel %vm252, %v868, 0
    %873 = vmatprep.subr.mxu0 0.0
    %874 = vmatpush1.xpose.msra.mxu0 0.0
    %875 = vmatprep.subr.mxu0 0.0
    %876 = vmatpush1.xpose.msra.mxu0 0.0
    %877 = vmatprep.subr.mxu0 0.0
    %878 = vmatpush1.xpose.msra.mxu0 0.0
    %879 = vmatprep.subr.mxu0 0.0
    %880 = vmatpush1.xpose.msra.mxu0 0.0
    %881 = vmatprep.subr.mxu0 0.0
    %882 = vmatpush1.xpose.msra.mxu0 0.0
    %883 = vmatprep.subr.mxu0 0.0
    %884 = vmatpush1.xpose.msra.mxu0 0.0
    %885 = vmatprep.subr.mxu0 0.0
    %886 = vmatpush1.xpose.msra.mxu0 0.0
    %887 = vmatprep.subr.mxu0 0.0
    %888 = vmatpush1.xpose.msra.mxu0 0.0
    %889 = vmatprep.subr.mxu0 0.0
    %890 = vmatpush1.xpose.msra.mxu0 0.0
    %891 = vmatprep.subr.mxu0 0.0
    %892 = vmatpush1.xpose.msra.mxu0 0.0
    %893 = vmatprep.subr.mxu0 0.0
    %894 = vmatpush1.xpose.msra.mxu0 0.0
    %895 = vmatprep.subr.mxu0 0.0
    %896 = vmatpush1.xpose.msra.mxu0 0.0
    %897 = vmatprep.subr.mxu0 0.0
    %898 = vmatpush1.xpose.msra.mxu0 0.0
    %899 = vmatprep.subr.mxu0 0.0
    %900 = vmatpush1.xpose.msra.mxu0 0.0
    %901 = vmatprep.subr.mxu0 0.0
    %902 = vmatpush1.xpose.msra.mxu0 0.0
    %903 = vmatprep.subr.mxu0 0.0
    %904 = vmatpush1.xpose.msra.mxu0 %v871
    %905 = vmatprep.subr.mxu0 0.0
    %906 = vmatpush2.xpose.msra.mxu0 0.0
    %907 = vmatprep.subr.mxu0 0.0
    %908 = vmatpush2.xpose.msra.mxu0 0.0
    %909 = vmatprep.subr.mxu0 0.0
    %910 = vmatpush2.xpose.msra.mxu0 0.0
    %911 = vmatprep.subr.mxu0 0.0
    %912 = vmatpush2.xpose.msra.mxu0 0.0
    %913 = vmatprep.subr.mxu0 0.0
    %914 = vmatpush2.xpose.msra.mxu0 0.0
    %915 = vmatprep.subr.mxu0 0.0
    %916 = vmatpush2.xpose.msra.mxu0 0.0
    %917 = vmatprep.subr.mxu0 0.0
    %918 = vmatpush2.xpose.msra.mxu0 0.0
    %919 = vmatprep.subr.mxu0 0.0
    %920 = vmatpush2.xpose.msra.mxu0 0.0
    %921 = vmatprep.subr.mxu0 0.0
    %922 = vmatpush2.xpose.msra.mxu0 0.0
    %923 = vmatprep.subr.mxu0 0.0
    %924 = vmatpush2.xpose.msra.mxu0 0.0
    %925 = vmatprep.subr.mxu0 0.0
    %926 = vmatpush2.xpose.msra.mxu0 0.0
    %927 = vmatprep.subr.mxu0 0.0
    %928 = vmatpush2.xpose.msra.mxu0 0.0
    %929 = vmatprep.subr.mxu0 0.0
    %930 = vmatpush2.xpose.msra.mxu0 0.0
    %931 = vmatprep.subr.mxu0 0.0
    %932 = vmatpush2.xpose.msra.mxu0 0.0
    %933 = vmatprep.subr.mxu0 0.0
    %934 = vmatpush2.xpose.msra.mxu0 0.0
    %935 = vmatprep.subr.mxu0 0.0
    %936 = vmatpush2.xpose.msra.mxu0 0.0
    %937 = vmatprep.mubr.f32.mxu0 0.0
    %938 = vmatmul.mubr.f32.gmra.mxu0 %v565
    %v939 = vpop.f32.mrf.mxu0
    %v940 = vadd.f32 0.0, %v939
    %v941 = vpop.f32.mrf.mxu0
    %942 = vdwg.mxu0
    %v944 = vsel %vm252, %v869, 0
    %946 = vmatprep.subr.mxu0 0.0
    %947 = vmatpush1.xpose.msra.mxu0 0.0
    %948 = vmatprep.subr.mxu0 0.0
    %949 = vmatpush1.xpose.msra.mxu0 0.0
    %950 = vmatprep.subr.mxu0 0.0
    %951 = vmatpush1.xpose.msra.mxu0 0.0
    %952 = vmatprep.subr.mxu0 0.0
    %953 = vmatpush1.xpose.msra.mxu0 0.0
    %954 = vmatprep.subr.mxu0 0.0
    %955 = vmatpush1.xpose.msra.mxu0 0.0
    %956 = vmatprep.subr.mxu0 0.0
    %957 = vmatpush1.xpose.msra.mxu0 0.0
    %958 = vmatprep.subr.mxu0 0.0
    %959 = vmatpush1.xpose.msra.mxu0 0.0
    %960 = vmatprep.subr.mxu0 0.0
    %961 = vmatpush1.xpose.msra.mxu0 0.0
    %962 = vmatprep.subr.mxu0 0.0
    %963 = vmatpush1.xpose.msra.mxu0 0.0
    %964 = vmatprep.subr.mxu0 0.0
    %965 = vmatpush1.xpose.msra.mxu0 0.0
    %966 = vmatprep.subr.mxu0 0.0
    %967 = vmatpush1.xpose.msra.mxu0 0.0
    %968 = vmatprep.subr.mxu0 0.0
    %969 = vmatpush1.xpose.msra.mxu0 0.0
    %970 = vmatprep.subr.mxu0 0.0
    %971 = vmatpush1.xpose.msra.mxu0 0.0
    %972 = vmatprep.subr.mxu0 0.0
    %973 = vmatpush1.xpose.msra.mxu0 0.0
    %974 = vmatprep.subr.mxu0 0.0
    %975 = vmatpush1.xpose.msra.mxu0 0.0
    %976 = vmatprep.subr.mxu0 0.0
    %977 = vmatpush1.xpose.msra.mxu0 %v944
    %978 = vmatprep.subr.mxu0 0.0
    %979 = vmatpush2.xpose.msra.mxu0 0.0
    %980 = vmatprep.subr.mxu0 0.0
    %981 = vmatpush2.xpose.msra.mxu0 0.0
    %982 = vmatprep.subr.mxu0 0.0
    %983 = vmatpush2.xpose.msra.mxu0 0.0
    %984 = vmatprep.subr.mxu0 0.0
    %985 = vmatpush2.xpose.msra.mxu0 0.0
    %986 = vmatprep.subr.mxu0 0.0
    %987 = vmatpush2.xpose.msra.mxu0 0.0
    %988 = vmatprep.subr.mxu0 0.0
    %989 = vmatpush2.xpose.msra.mxu0 0.0
    %990 = vmatprep.subr.mxu0 0.0
    %991 = vmatpush2.xpose.msra.mxu0 0.0
    %992 = vmatprep.subr.mxu0 0.0
    %993 = vmatpush2.xpose.msra.mxu0 0.0
    %994 = vmatprep.subr.mxu0 0.0
    %995 = vmatpush2.xpose.msra.mxu0 0.0
    %996 = vmatprep.subr.mxu0 0.0
    %997 = vmatpush2.xpose.msra.mxu0 0.0
    %998 = vmatprep.subr.mxu0 0.0
    %999 = vmatpush2.xpose.msra.mxu0 0.0
    %1000 = vmatprep.subr.mxu0 0.0
    %1001 = vmatpush2.xpose.msra.mxu0 0.0
    %1002 = vmatprep.subr.mxu0 0.0
    %1003 = vmatpush2.xpose.msra.mxu0 0.0
    %1004 = vmatprep.subr.mxu0 0.0
    %1005 = vmatpush2.xpose.msra.mxu0 0.0
    %1006 = vmatprep.subr.mxu0 0.0
    %1007 = vmatpush2.xpose.msra.mxu0 0.0
    %1008 = vmatprep.subr.mxu0 0.0
    %1009 = vmatpush2.xpose.msra.mxu0 0.0
    %1010 = vmatprep.mubr.f32.mxu0 0.0
    %1011 = vmatmul.mubr.f32.gmra.mxu0 %v641
    %v1012 = vpop.f32.mrf.mxu0
    %v1013 = vadd.f32 0.0, %v1012
    %v1014 = vpop.f32.mrf.mxu0
    %1015 = vdwg.mxu0
    %v1016 = vsel %vm236, 1, 0
    %vm1017 = vcmp.eq.s32.totalorder %v1016, 1
    %v1018 = vsel %vm1017, %v466, 0.0
    %v1019 = vsel %vm1017, %v471, 0.0
    %v1021 = vsel %vm252, %v1018, 0
    %1023 = vmatprep.subr.mxu0 0.0
    %1024 = vmatpush1.xpose.msra.mxu0 0.0
    %1025 = vmatprep.subr.mxu0 0.0
    %1026 = vmatpush1.xpose.msra.mxu0 0.0
    %1027 = vmatprep.subr.mxu0 0.0
    %1028 = vmatpush1.xpose.msra.mxu0 0.0
    %1029 = vmatprep.subr.mxu0 0.0
    %1030 = vmatpush1.xpose.msra.mxu0 0.0
    %1031 = vmatprep.subr.mxu0 0.0
    %1032 = vmatpush1.xpose.msra.mxu0 0.0
    %1033 = vmatprep.subr.mxu0 0.0
    %1034 = vmatpush1.xpose.msra.mxu0 0.0
    %1035 = vmatprep.subr.mxu0 0.0
    %1036 = vmatpush1.xpose.msra.mxu0 0.0
    %1037 = vmatprep.subr.mxu0 0.0
    %1038 = vmatpush1.xpose.msra.mxu0 0.0
    %1039 = vmatprep.subr.mxu0 0.0
    %1040 = vmatpush1.xpose.msra.mxu0 0.0
    %1041 = vmatprep.subr.mxu0 0.0
    %1042 = vmatpush1.xpose.msra.mxu0 0.0
    %1043 = vmatprep.subr.mxu0 0.0
    %1044 = vmatpush1.xpose.msra.mxu0 0.0
    %1045 = vmatprep.subr.mxu0 0.0
    %1046 = vmatpush1.xpose.msra.mxu0 0.0
    %1047 = vmatprep.subr.mxu0 0.0
    %1048 = vmatpush1.xpose.msra.mxu0 0.0
    %1049 = vmatprep.subr.mxu0 0.0
    %1050 = vmatpush1.xpose.msra.mxu0 0.0
    %1051 = vmatprep.subr.mxu0 0.0
    %1052 = vmatpush1.xpose.msra.mxu0 0.0
    %1053 = vmatprep.subr.mxu0 0.0
    %1054 = vmatpush1.xpose.msra.mxu0 %v1021
    %1055 = vmatprep.subr.mxu0 0.0
    %1056 = vmatpush2.xpose.msra.mxu0 0.0
    %1057 = vmatprep.subr.mxu0 0.0
    %1058 = vmatpush2.xpose.msra.mxu0 0.0
    %1059 = vmatprep.subr.mxu0 0.0
    %1060 = vmatpush2.xpose.msra.mxu0 0.0
    %1061 = vmatprep.subr.mxu0 0.0
    %1062 = vmatpush2.xpose.msra.mxu0 0.0
    %1063 = vmatprep.subr.mxu0 0.0
    %1064 = vmatpush2.xpose.msra.mxu0 0.0
    %1065 = vmatprep.subr.mxu0 0.0
    %1066 = vmatpush2.xpose.msra.mxu0 0.0
    %1067 = vmatprep.subr.mxu0 0.0
    %1068 = vmatpush2.xpose.msra.mxu0 0.0
    %1069 = vmatprep.subr.mxu0 0.0
    %1070 = vmatpush2.xpose.msra.mxu0 0.0
    %1071 = vmatprep.subr.mxu0 0.0
    %1072 = vmatpush2.xpose.msra.mxu0 0.0
    %1073 = vmatprep.subr.mxu0 0.0
    %1074 = vmatpush2.xpose.msra.mxu0 0.0
    %1075 = vmatprep.subr.mxu0 0.0
    %1076 = vmatpush2.xpose.msra.mxu0 0.0
    %1077 = vmatprep.subr.mxu0 0.0
    %1078 = vmatpush2.xpose.msra.mxu0 0.0
    %1079 = vmatprep.subr.mxu0 0.0
    %1080 = vmatpush2.xpose.msra.mxu0 0.0
    %1081 = vmatprep.subr.mxu0 0.0
    %1082 = vmatpush2.xpose.msra.mxu0 0.0
    %1083 = vmatprep.subr.mxu0 0.0
    %1084 = vmatpush2.xpose.msra.mxu0 0.0
    %1085 = vmatprep.subr.mxu0 0.0
    %1086 = vmatpush2.xpose.msra.mxu0 0.0
    %1087 = vmatprep.mubr.f32.mxu0 0.0
    %1088 = vmatmul.mubr.f32.gmra.mxu0 %v565
    %v1089 = vpop.f32.mrf.mxu0
    %v1090 = vadd.f32 0.0, %v1089
    %v1091 = vpop.f32.mrf.mxu0
    %1092 = vdwg.mxu0
    %v1094 = vsel %vm252, %v1019, 0
    %1096 = vmatprep.subr.mxu0 0.0
    %1097 = vmatpush1.xpose.msra.mxu0 0.0
    %1098 = vmatprep.subr.mxu0 0.0
    %1099 = vmatpush1.xpose.msra.mxu0 0.0
    %1100 = vmatprep.subr.mxu0 0.0
    %1101 = vmatpush1.xpose.msra.mxu0 0.0
    %1102 = vmatprep.subr.mxu0 0.0
    %1103 = vmatpush1.xpose.msra.mxu0 0.0
    %1104 = vmatprep.subr.mxu0 0.0
    %1105 = vmatpush1.xpose.msra.mxu0 0.0
    %1106 = vmatprep.subr.mxu0 0.0
    %1107 = vmatpush1.xpose.msra.mxu0 0.0
    %1108 = vmatprep.subr.mxu0 0.0
    %1109 = vmatpush1.xpose.msra.mxu0 0.0
    %1110 = vmatprep.subr.mxu0 0.0
    %1111 = vmatpush1.xpose.msra.mxu0 0.0
    %1112 = vmatprep.subr.mxu0 0.0
    %1113 = vmatpush1.xpose.msra.mxu0 0.0
    %1114 = vmatprep.subr.mxu0 0.0
    %1115 = vmatpush1.xpose.msra.mxu0 0.0
    %1116 = vmatprep.subr.mxu0 0.0
    %1117 = vmatpush1.xpose.msra.mxu0 0.0
    %1118 = vmatprep.subr.mxu0 0.0
    %1119 = vmatpush1.xpose.msra.mxu0 0.0
    %1120 = vmatprep.subr.mxu0 0.0
    %1121 = vmatpush1.xpose.msra.mxu0 0.0
    %1122 = vmatprep.subr.mxu0 0.0
    %1123 = vmatpush1.xpose.msra.mxu0 0.0
    %1124 = vmatprep.subr.mxu0 0.0
    %1125 = vmatpush1.xpose.msra.mxu0 0.0
    %1126 = vmatprep.subr.mxu0 0.0
    %1127 = vmatpush1.xpose.msra.mxu0 %v1094
    %1128 = vmatprep.subr.mxu0 0.0
    %1129 = vmatpush2.xpose.msra.mxu0 0.0
    %1130 = vmatprep.subr.mxu0 0.0
    %1131 = vmatpush2.xpose.msra.mxu0 0.0
    %1132 = vmatprep.subr.mxu0 0.0
    %1133 = vmatpush2.xpose.msra.mxu0 0.0
    %1134 = vmatprep.subr.mxu0 0.0
    %1135 = vmatpush2.xpose.msra.mxu0 0.0
    %1136 = vmatprep.subr.mxu0 0.0
    %1137 = vmatpush2.xpose.msra.mxu0 0.0
    %1138 = vmatprep.subr.mxu0 0.0
    %1139 = vmatpush2.xpose.msra.mxu0 0.0
    %1140 = vmatprep.subr.mxu0 0.0
    %1141 = vmatpush2.xpose.msra.mxu0 0.0
    %1142 = vmatprep.subr.mxu0 0.0
    %1143 = vmatpush2.xpose.msra.mxu0 0.0
    %1144 = vmatprep.subr.mxu0 0.0
    %1145 = vmatpush2.xpose.msra.mxu0 0.0
    %1146 = vmatprep.subr.mxu0 0.0
    %1147 = vmatpush2.xpose.msra.mxu0 0.0
    %1148 = vmatprep.subr.mxu0 0.0
    %1149 = vmatpush2.xpose.msra.mxu0 0.0
    %1150 = vmatprep.subr.mxu0 0.0
    %1151 = vmatpush2.xpose.msra.mxu0 0.0
    %1152 = vmatprep.subr.mxu0 0.0
    %1153 = vmatpush2.xpose.msra.mxu0 0.0
    %1154 = vmatprep.subr.mxu0 0.0
    %1155 = vmatpush2.xpose.msra.mxu0 0.0
    %1156 = vmatprep.subr.mxu0 0.0
    %1157 = vmatpush2.xpose.msra.mxu0 0.0
    %1158 = vmatprep.subr.mxu0 0.0
    %1159 = vmatpush2.xpose.msra.mxu0 0.0
    %1160 = vmatprep.mubr.f32.mxu0 0.0
    %1161 = vmatmul.mubr.f32.gmra.mxu0 %v641
    %v1162 = vpop.f32.mrf.mxu0
    %v1163 = vadd.f32 0.0, %v1162
    %v1164 = vpop.f32.mrf.mxu0
    %1165 = vdwg.mxu0
    %v1166 = vmul.f32 %v637, 0.35355338
    %v1167 = vmul.f32 %v713, 0.35355338
    %v1168 = vmul.f32 %v790, 0.35355338
    %v1169 = vmul.f32 %v863, 0.35355338
    %v1170 = vmul.f32 %v940, 0.35355338
    %v1171 = vmul.f32 %v1013, 0.35355338
    %v1172 = vmul.f32 %v1090, 0.35355338
    %v1173 = vmul.f32 %v1163, 0.35355338
    %v1174 = vadd.f32 %v1166, %v223
    %v1175 = vadd.f32 %v1167, %v224
    %v1176 = vadd.f32 %v1168, %v223
    %v1177 = vadd.f32 %v1169, %v224
    %v1178 = vadd.f32 %v1170, %v223
    %v1179 = vadd.f32 %v1171, %v224
    %v1180 = vadd.f32 %v1172, %v223
    %v1181 = vadd.f32 %v1173, %v224
    %vm1182 = vcmask 64512
    %v1183 = vsel %vm1182, %v1174, -inf
    %1184 = vmax.xlane.f32.xlu0 %v1183
    %v1185 = vpop.xlane.xlu0 %1184
    %v1186 = vsel %vm1182, %v1175, -inf
    %1187 = vmax.xlane.f32.xlu0 %v1186
    %v1188 = vpop.xlane.xlu0 %1187
    %v1189 = vsel %vm1182, %v1176, -inf
    %1190 = vmax.xlane.f32.xlu0 %v1189
    %v1191 = vpop.xlane.xlu0 %1190
    %v1192 = vsel %vm1182, %v1177, -inf
    %1193 = vmax.xlane.f32.xlu0 %v1192
    %v1194 = vpop.xlane.xlu0 %1193
    %v1195 = vsel %vm1182, %v1178, -inf
    %1196 = vmax.xlane.f32.xlu0 %v1195
    %v1197 = vpop.xlane.xlu0 %1196
    %v1198 = vsel %vm1182, %v1179, -inf
    %1199 = vmax.xlane.f32.xlu0 %v1198
    %v1200 = vpop.xlane.xlu0 %1199
    %v1201 = vsel %vm1182, %v1180, -inf
    %1202 = vmax.xlane.f32.xlu0 %v1201
    %v1203 = vpop.xlane.xlu0 %1202
    %v1204 = vsel %vm1182, %v1181, -inf
    %1205 = vmax.xlane.f32.xlu0 %v1204
    %v1206 = vpop.xlane.xlu0 %1205
    %v1207 = vsub.f32 %v1174, %v1185
    %v1208 = vsub.f32 %v1175, %v1188
    %v1209 = vsub.f32 %v1176, %v1191
    %v1210 = vsub.f32 %v1177, %v1194
    %v1211 = vsub.f32 %v1178, %v1197
    %v1212 = vsub.f32 %v1179, %v1200
    %v1213 = vsub.f32 %v1180, %v1203
    %v1214 = vsub.f32 %v1181, %v1206
    %v1215 = vmul.f32 %v1207, 1.442695
    %v1216 = vpow.pop %v1215
    %v1217 = vmul.f32 %v1208, 1.442695
    %v1218 = vpow.pop %v1217
    %v1219 = vmul.f32 %v1209, 1.442695
    %v1220 = vpow.pop %v1219
    %v1221 = vmul.f32 %v1210, 1.442695
    %v1222 = vpow.pop %v1221
    %v1223 = vmul.f32 %v1211, 1.442695
    %v1224 = vpow.pop %v1223
    %v1225 = vmul.f32 %v1212, 1.442695
    %v1226 = vpow.pop %v1225
    %v1227 = vmul.f32 %v1213, 1.442695
    %v1228 = vpow.pop %v1227
    %v1229 = vmul.f32 %v1214, 1.442695
    %v1230 = vpow.pop %v1229
    %v1231 = vsel %vm1182, %v1216, 0.0
    %1232 = vadd.xlane.f32.xlu0 %v1231
    %v1233 = vpop.xlane.xlu0 %1232
    %v1234 = vsel %vm1182, %v1218, 0.0
    %1235 = vadd.xlane.f32.xlu0 %v1234
    %v1236 = vpop.xlane.xlu0 %1235
    %v1237 = vsel %vm1182, %v1220, 0.0
    %1238 = vadd.xlane.f32.xlu0 %v1237
    %v1239 = vpop.xlane.xlu0 %1238
    %v1240 = vsel %vm1182, %v1222, 0.0
    %1241 = vadd.xlane.f32.xlu0 %v1240
    %v1242 = vpop.xlane.xlu0 %1241
    %v1243 = vsel %vm1182, %v1224, 0.0
    %1244 = vadd.xlane.f32.xlu0 %v1243
    %v1245 = vpop.xlane.xlu0 %1244
    %v1246 = vsel %vm1182, %v1226, 0.0
    %1247 = vadd.xlane.f32.xlu0 %v1246
    %v1248 = vpop.xlane.xlu0 %1247
    %v1249 = vsel %vm1182, %v1228, 0.0
    %1250 = vadd.xlane.f32.xlu0 %v1249
    %v1251 = vpop.xlane.xlu0 %1250
    %v1252 = vsel %vm1182, %v1230, 0.0
    %1253 = vadd.xlane.f32.xlu0 %v1252
    %v1254 = vpop.xlane.xlu0 %1253
    %v1255 = vrcp.pop %v1233
    %v1256 = vmul.f32 %v1216, %v1255
    %v1257 = vrcp.pop %v1236
    %v1258 = vmul.f32 %v1218, %v1257
    %v1259 = vrcp.pop %v1239
    %v1260 = vmul.f32 %v1220, %v1259
    %v1261 = vrcp.pop %v1242
    %v1262 = vmul.f32 %v1222, %v1261
    %v1263 = vrcp.pop %v1245
    %v1264 = vmul.f32 %v1224, %v1263
    %v1265 = vrcp.pop %v1248
    %v1266 = vmul.f32 %v1226, %v1265
    %v1267 = vrcp.pop %v1251
    %v1268 = vmul.f32 %v1228, %v1267
    %v1269 = vrcp.pop %v1254
    %v1270 = vmul.f32 %v1230, %v1269
    %v1271 = vsel %vm561, %v552, 0.0
    %v1272 = vsel %vm561, %v557, 0.0
    %v1273 = vsel %vm717, %v552, 0.0
    %v1274 = vsel %vm717, %v557, 0.0
    %v1276 = vsel %vm1182, %v1260, 0
    %1278 = vmatprep.subr.mxu0 0.0
    %1279 = vmatpush1.msra.mxu0 0.0
    %1280 = vmatprep.subr.mxu0 0.0
    %1281 = vmatpush1.msra.mxu0 0.0
    %1282 = vmatprep.subr.mxu0 0.0
    %1283 = vmatpush1.msra.mxu0 0.0
    %1284 = vmatprep.subr.mxu0 0.0
    %1285 = vmatpush1.msra.mxu0 0.0
    %1286 = vmatprep.subr.mxu0 0.0
    %1287 = vmatpush1.msra.mxu0 0.0
    %1288 = vmatprep.subr.mxu0 0.0
    %1289 = vmatpush1.msra.mxu0 0.0
    %1290 = vmatprep.subr.mxu0 0.0
    %1291 = vmatpush1.msra.mxu0 0.0
    %1292 = vmatprep.subr.mxu0 0.0
    %1293 = vmatpush1.msra.mxu0 0.0
    %1294 = vmatprep.subr.mxu0 0.0
    %1295 = vmatpush1.msra.mxu0 0.0
    %1296 = vmatprep.subr.mxu0 0.0
    %1297 = vmatpush1.msra.mxu0 0.0
    %1298 = vmatprep.subr.mxu0 0.0
    %1299 = vmatpush1.msra.mxu0 0.0
    %1300 = vmatprep.subr.mxu0 0.0
    %1301 = vmatpush1.msra.mxu0 0.0
    %1302 = vmatprep.subr.mxu0 0.0
    %1303 = vmatpush1.msra.mxu0 0.0
    %1304 = vmatprep.subr.mxu0 0.0
    %1305 = vmatpush1.msra.mxu0 0.0
    %1306 = vmatprep.subr.mxu0 0.0
    %1307 = vmatpush1.msra.mxu0 0.0
    %1308 = vmatprep.subr.mxu0 0.0
    %1309 = vmatpush1.msra.mxu0 %v1273
    %1310 = vmatprep.subr.mxu0 0.0
    %1311 = vmatpush2.msra.mxu0 0.0
    %1312 = vmatprep.subr.mxu0 0.0
    %1313 = vmatpush2.msra.mxu0 0.0
    %1314 = vmatprep.subr.mxu0 0.0
    %1315 = vmatpush2.msra.mxu0 0.0
    %1316 = vmatprep.subr.mxu0 0.0
    %1317 = vmatpush2.msra.mxu0 0.0
    %1318 = vmatprep.subr.mxu0 0.0
    %1319 = vmatpush2.msra.mxu0 0.0
    %1320 = vmatprep.subr.mxu0 0.0
    %1321 = vmatpush2.msra.mxu0 0.0
    %1322 = vmatprep.subr.mxu0 0.0
    %1323 = vmatpush2.msra.mxu0 0.0
    %1324 = vmatprep.subr.mxu0 0.0
    %1325 = vmatpush2.msra.mxu0 0.0
    %1326 = vmatprep.subr.mxu0 0.0
    %1327 = vmatpush2.msra.mxu0 0.0
    %1328 = vmatprep.subr.mxu0 0.0
    %1329 = vmatpush2.msra.mxu0 0.0
    %1330 = vmatprep.subr.mxu0 0.0
    %1331 = vmatpush2.msra.mxu0 0.0
    %1332 = vmatprep.subr.mxu0 0.0
    %1333 = vmatpush2.msra.mxu0 0.0
    %1334 = vmatprep.subr.mxu0 0.0
    %1335 = vmatpush2.msra.mxu0 0.0
    %1336 = vmatprep.subr.mxu0 0.0
    %1337 = vmatpush2.msra.mxu0 0.0
    %1338 = vmatprep.subr.mxu0 0.0
    %1339 = vmatpush2.msra.mxu0 0.0
    %1340 = vmatprep.subr.mxu0 0.0
    %1341 = vmatpush2.msra.mxu0 0.0
    %1342 = vmatprep.mubr.f32.mxu0 0.0
    %1343 = vmatmul.mubr.f32.gmra.mxu0 %v1276
    %v1344 = vpop.f32.mrf.mxu0
    %v1345 = vadd.f32 0.0, %v1344
    %v1346 = vpop.f32.mrf.mxu0
    %1347 = vdwg.mxu0
    %v1349 = vsel %vm1182, %v1262, 0
    %1351 = vmatprep.subr.mxu0 0.0
    %1352 = vmatpush1.msra.mxu0 0.0
    %1353 = vmatprep.subr.mxu0 0.0
    %1354 = vmatpush1.msra.mxu0 0.0
    %1355 = vmatprep.subr.mxu0 0.0
    %1356 = vmatpush1.msra.mxu0 0.0
    %1357 = vmatprep.subr.mxu0 0.0
    %1358 = vmatpush1.msra.mxu0 0.0
    %1359 = vmatprep.subr.mxu0 0.0
    %1360 = vmatpush1.msra.mxu0 0.0
    %1361 = vmatprep.subr.mxu0 0.0
    %1362 = vmatpush1.msra.mxu0 0.0
    %1363 = vmatprep.subr.mxu0 0.0
    %1364 = vmatpush1.msra.mxu0 0.0
    %1365 = vmatprep.subr.mxu0 0.0
    %1366 = vmatpush1.msra.mxu0 0.0
    %1367 = vmatprep.subr.mxu0 0.0
    %1368 = vmatpush1.msra.mxu0 0.0
    %1369 = vmatprep.subr.mxu0 0.0
    %1370 = vmatpush1.msra.mxu0 0.0
    %1371 = vmatprep.subr.mxu0 0.0
    %1372 = vmatpush1.msra.mxu0 0.0
    %1373 = vmatprep.subr.mxu0 0.0
    %1374 = vmatpush1.msra.mxu0 0.0
    %1375 = vmatprep.subr.mxu0 0.0
    %1376 = vmatpush1.msra.mxu0 0.0
    %1377 = vmatprep.subr.mxu0 0.0
    %1378 = vmatpush1.msra.mxu0 0.0
    %1379 = vmatprep.subr.mxu0 0.0
    %1380 = vmatpush1.msra.mxu0 0.0
    %1381 = vmatprep.subr.mxu0 0.0
    %1382 = vmatpush1.msra.mxu0 %v1274
    %1383 = vmatprep.subr.mxu0 0.0
    %1384 = vmatpush2.msra.mxu0 0.0
    %1385 = vmatprep.subr.mxu0 0.0
    %1386 = vmatpush2.msra.mxu0 0.0
    %1387 = vmatprep.subr.mxu0 0.0
    %1388 = vmatpush2.msra.mxu0 0.0
    %1389 = vmatprep.subr.mxu0 0.0
    %1390 = vmatpush2.msra.mxu0 0.0
    %1391 = vmatprep.subr.mxu0 0.0
    %1392 = vmatpush2.msra.mxu0 0.0
    %1393 = vmatprep.subr.mxu0 0.0
    %1394 = vmatpush2.msra.mxu0 0.0
    %1395 = vmatprep.subr.mxu0 0.0
    %1396 = vmatpush2.msra.mxu0 0.0
    %1397 = vmatprep.subr.mxu0 0.0
    %1398 = vmatpush2.msra.mxu0 0.0
    %1399 = vmatprep.subr.mxu0 0.0
    %1400 = vmatpush2.msra.mxu0 0.0
    %1401 = vmatprep.subr.mxu0 0.0
    %1402 = vmatpush2.msra.mxu0 0.0
    %1403 = vmatprep.subr.mxu0 0.0
    %1404 = vmatpush2.msra.mxu0 0.0
    %1405 = vmatprep.subr.mxu0 0.0
    %1406 = vmatpush2.msra.mxu0 0.0
    %1407 = vmatprep.subr.mxu0 0.0
    %1408 = vmatpush2.msra.mxu0 0.0
    %1409 = vmatprep.subr.mxu0 0.0
    %1410 = vmatpush2.msra.mxu0 0.0
    %1411 = vmatprep.subr.mxu0 0.0
    %1412 = vmatpush2.msra.mxu0 0.0
    %1413 = vmatprep.subr.mxu0 0.0
    %1414 = vmatpush2.msra.mxu0 0.0
    %1415 = vmatprep.mubr.f32.mxu0 0.0
    %1416 = vmatmul.mubr.f32.gmra.mxu0 %v1349
    %v1417 = vpop.f32.mrf.mxu0
    %v1418 = vadd.f32 0.0, %v1417
    %v1419 = vpop.f32.mrf.mxu0
    %1420 = vdwg.mxu0
    %v1422 = vsel %vm1182, %v1256, 0
    %1424 = vmatprep.subr.mxu0 0.0
    %1425 = vmatpush1.msra.mxu0 0.0
    %1426 = vmatprep.subr.mxu0 0.0
    %1427 = vmatpush1.msra.mxu0 0.0
    %1428 = vmatprep.subr.mxu0 0.0
    %1429 = vmatpush1.msra.mxu0 0.0
    %1430 = vmatprep.subr.mxu0 0.0
    %1431 = vmatpush1.msra.mxu0 0.0
    %1432 = vmatprep.subr.mxu0 0.0
    %1433 = vmatpush1.msra.mxu0 0.0
    %1434 = vmatprep.subr.mxu0 0.0
    %1435 = vmatpush1.msra.mxu0 0.0
    %1436 = vmatprep.subr.mxu0 0.0
    %1437 = vmatpush1.msra.mxu0 0.0
    %1438 = vmatprep.subr.mxu0 0.0
    %1439 = vmatpush1.msra.mxu0 0.0
    %1440 = vmatprep.subr.mxu0 0.0
    %1441 = vmatpush1.msra.mxu0 0.0
    %1442 = vmatprep.subr.mxu0 0.0
    %1443 = vmatpush1.msra.mxu0 0.0
    %1444 = vmatprep.subr.mxu0 0.0
    %1445 = vmatpush1.msra.mxu0 0.0
    %1446 = vmatprep.subr.mxu0 0.0
    %1447 = vmatpush1.msra.mxu0 0.0
    %1448 = vmatprep.subr.mxu0 0.0
    %1449 = vmatpush1.msra.mxu0 0.0
    %1450 = vmatprep.subr.mxu0 0.0
    %1451 = vmatpush1.msra.mxu0 0.0
    %1452 = vmatprep.subr.mxu0 0.0
    %1453 = vmatpush1.msra.mxu0 0.0
    %1454 = vmatprep.subr.mxu0 0.0
    %1455 = vmatpush1.msra.mxu0 %v1271
    %1456 = vmatprep.subr.mxu0 0.0
    %1457 = vmatpush2.msra.mxu0 0.0
    %1458 = vmatprep.subr.mxu0 0.0
    %1459 = vmatpush2.msra.mxu0 0.0
    %1460 = vmatprep.subr.mxu0 0.0
    %1461 = vmatpush2.msra.mxu0 0.0
    %1462 = vmatprep.subr.mxu0 0.0
    %1463 = vmatpush2.msra.mxu0 0.0
    %1464 = vmatprep.subr.mxu0 0.0
    %1465 = vmatpush2.msra.mxu0 0.0
    %1466 = vmatprep.subr.mxu0 0.0
    %1467 = vmatpush2.msra.mxu0 0.0
    %1468 = vmatprep.subr.mxu0 0.0
    %1469 = vmatpush2.msra.mxu0 0.0
    %1470 = vmatprep.subr.mxu0 0.0
    %1471 = vmatpush2.msra.mxu0 0.0
    %1472 = vmatprep.subr.mxu0 0.0
    %1473 = vmatpush2.msra.mxu0 0.0
    %1474 = vmatprep.subr.mxu0 0.0
    %1475 = vmatpush2.msra.mxu0 0.0
    %1476 = vmatprep.subr.mxu0 0.0
    %1477 = vmatpush2.msra.mxu0 0.0
    %1478 = vmatprep.subr.mxu0 0.0
    %1479 = vmatpush2.msra.mxu0 0.0
    %1480 = vmatprep.subr.mxu0 0.0
    %1481 = vmatpush2.msra.mxu0 0.0
    %1482 = vmatprep.subr.mxu0 0.0
    %1483 = vmatpush2.msra.mxu0 0.0
    %1484 = vmatprep.subr.mxu0 0.0
    %1485 = vmatpush2.msra.mxu0 0.0
    %1486 = vmatprep.subr.mxu0 0.0
    %1487 = vmatpush2.msra.mxu0 0.0
    %1488 = vmatprep.mubr.f32.mxu0 0.0
    %1489 = vmatmul.mubr.f32.gmra.mxu0 %v1422
    %v1490 = vpop.f32.mrf.mxu0
    %v1491 = vadd.f32 %v1345, %v1490
    %v1492 = vpop.f32.mrf.mxu0
    %1493 = vdwg.mxu0
    %v1495 = vsel %vm1182, %v1258, 0
    %1497 = vmatprep.subr.mxu0 0.0
    %1498 = vmatpush1.msra.mxu0 0.0
    %1499 = vmatprep.subr.mxu0 0.0
    %1500 = vmatpush1.msra.mxu0 0.0
    %1501 = vmatprep.subr.mxu0 0.0
    %1502 = vmatpush1.msra.mxu0 0.0
    %1503 = vmatprep.subr.mxu0 0.0
    %1504 = vmatpush1.msra.mxu0 0.0
    %1505 = vmatprep.subr.mxu0 0.0
    %1506 = vmatpush1.msra.mxu0 0.0
    %1507 = vmatprep.subr.mxu0 0.0
    %1508 = vmatpush1.msra.mxu0 0.0
    %1509 = vmatprep.subr.mxu0 0.0
    %1510 = vmatpush1.msra.mxu0 0.0
    %1511 = vmatprep.subr.mxu0 0.0
    %1512 = vmatpush1.msra.mxu0 0.0
    %1513 = vmatprep.subr.mxu0 0.0
    %1514 = vmatpush1.msra.mxu0 0.0
    %1515 = vmatprep.subr.mxu0 0.0
    %1516 = vmatpush1.msra.mxu0 0.0
    %1517 = vmatprep.subr.mxu0 0.0
    %1518 = vmatpush1.msra.mxu0 0.0
    %1519 = vmatprep.subr.mxu0 0.0
    %1520 = vmatpush1.msra.mxu0 0.0
    %1521 = vmatprep.subr.mxu0 0.0
    %1522 = vmatpush1.msra.mxu0 0.0
    %1523 = vmatprep.subr.mxu0 0.0
    %1524 = vmatpush1.msra.mxu0 0.0
    %1525 = vmatprep.subr.mxu0 0.0
    %1526 = vmatpush1.msra.mxu0 0.0
    %1527 = vmatprep.subr.mxu0 0.0
    %1528 = vmatpush1.msra.mxu0 %v1272
    %1529 = vmatprep.subr.mxu0 0.0
    %1530 = vmatpush2.msra.mxu0 0.0
    %1531 = vmatprep.subr.mxu0 0.0
    %1532 = vmatpush2.msra.mxu0 0.0
    %1533 = vmatprep.subr.mxu0 0.0
    %1534 = vmatpush2.msra.mxu0 0.0
    %1535 = vmatprep.subr.mxu0 0.0
    %1536 = vmatpush2.msra.mxu0 0.0
    %1537 = vmatprep.subr.mxu0 0.0
    %1538 = vmatpush2.msra.mxu0 0.0
    %1539 = vmatprep.subr.mxu0 0.0
    %1540 = vmatpush2.msra.mxu0 0.0
    %1541 = vmatprep.subr.mxu0 0.0
    %1542 = vmatpush2.msra.mxu0 0.0
    %1543 = vmatprep.subr.mxu0 0.0
    %1544 = vmatpush2.msra.mxu0 0.0
    %1545 = vmatprep.subr.mxu0 0.0
    %1546 = vmatpush2.msra.mxu0 0.0
    %1547 = vmatprep.subr.mxu0 0.0
    %1548 = vmatpush2.msra.mxu0 0.0
    %1549 = vmatprep.subr.mxu0 0.0
    %1550 = vmatpush2.msra.mxu0 0.0
    %1551 = vmatprep.subr.mxu0 0.0
    %1552 = vmatpush2.msra.mxu0 0.0
    %1553 = vmatprep.subr.mxu0 0.0
    %1554 = vmatpush2.msra.mxu0 0.0
    %1555 = vmatprep.subr.mxu0 0.0
    %1556 = vmatpush2.msra.mxu0 0.0
    %1557 = vmatprep.subr.mxu0 0.0
    %1558 = vmatpush2.msra.mxu0 0.0
    %1559 = vmatprep.subr.mxu0 0.0
    %1560 = vmatpush2.msra.mxu0 0.0
    %1561 = vmatprep.mubr.f32.mxu0 0.0
    %1562 = vmatmul.mubr.f32.gmra.mxu0 %v1495
    %v1563 = vpop.f32.mrf.mxu0
    %v1564 = vadd.f32 %v1418, %v1563
    %v1565 = vpop.f32.mrf.mxu0
    %1566 = vdwg.mxu0
    %v1567 = vsel %vm867, %v552, 0.0
    %v1568 = vsel %vm867, %v557, 0.0
    %v1570 = vsel %vm1182, %v1264, 0
    %1572 = vmatprep.subr.mxu0 0.0
    %1573 = vmatpush1.msra.mxu0 0.0
    %1574 = vmatprep.subr.mxu0 0.0
    %1575 = vmatpush1.msra.mxu0 0.0
    %1576 = vmatprep.subr.mxu0 0.0
    %1577 = vmatpush1.msra.mxu0 0.0
    %1578 = vmatprep.subr.mxu0 0.0
    %1579 = vmatpush1.msra.mxu0 0.0
    %1580 = vmatprep.subr.mxu0 0.0
    %1581 = vmatpush1.msra.mxu0 0.0
    %1582 = vmatprep.subr.mxu0 0.0
    %1583 = vmatpush1.msra.mxu0 0.0
    %1584 = vmatprep.subr.mxu0 0.0
    %1585 = vmatpush1.msra.mxu0 0.0
    %1586 = vmatprep.subr.mxu0 0.0
    %1587 = vmatpush1.msra.mxu0 0.0
    %1588 = vmatprep.subr.mxu0 0.0
    %1589 = vmatpush1.msra.mxu0 0.0
    %1590 = vmatprep.subr.mxu0 0.0
    %1591 = vmatpush1.msra.mxu0 0.0
    %1592 = vmatprep.subr.mxu0 0.0
    %1593 = vmatpush1.msra.mxu0 0.0
    %1594 = vmatprep.subr.mxu0 0.0
    %1595 = vmatpush1.msra.mxu0 0.0
    %1596 = vmatprep.subr.mxu0 0.0
    %1597 = vmatpush1.msra.mxu0 0.0
    %1598 = vmatprep.subr.mxu0 0.0
    %1599 = vmatpush1.msra.mxu0 0.0
    %1600 = vmatprep.subr.mxu0 0.0
    %1601 = vmatpush1.msra.mxu0 0.0
    %1602 = vmatprep.subr.mxu0 0.0
    %1603 = vmatpush1.msra.mxu0 %v1567
    %1604 = vmatprep.subr.mxu0 0.0
    %1605 = vmatpush2.msra.mxu0 0.0
    %1606 = vmatprep.subr.mxu0 0.0
    %1607 = vmatpush2.msra.mxu0 0.0
    %1608 = vmatprep.subr.mxu0 0.0
    %1609 = vmatpush2.msra.mxu0 0.0
    %1610 = vmatprep.subr.mxu0 0.0
    %1611 = vmatpush2.msra.mxu0 0.0
    %1612 = vmatprep.subr.mxu0 0.0
    %1613 = vmatpush2.msra.mxu0 0.0
    %1614 = vmatprep.subr.mxu0 0.0
    %1615 = vmatpush2.msra.mxu0 0.0
    %1616 = vmatprep.subr.mxu0 0.0
    %1617 = vmatpush2.msra.mxu0 0.0
    %1618 = vmatprep.subr.mxu0 0.0
    %1619 = vmatpush2.msra.mxu0 0.0
    %1620 = vmatprep.subr.mxu0 0.0
    %1621 = vmatpush2.msra.mxu0 0.0
    %1622 = vmatprep.subr.mxu0 0.0
    %1623 = vmatpush2.msra.mxu0 0.0
    %1624 = vmatprep.subr.mxu0 0.0
    %1625 = vmatpush2.msra.mxu0 0.0
    %1626 = vmatprep.subr.mxu0 0.0
    %1627 = vmatpush2.msra.mxu0 0.0
    %1628 = vmatprep.subr.mxu0 0.0
    %1629 = vmatpush2.msra.mxu0 0.0
    %1630 = vmatprep.subr.mxu0 0.0
    %1631 = vmatpush2.msra.mxu0 0.0
    %1632 = vmatprep.subr.mxu0 0.0
    %1633 = vmatpush2.msra.mxu0 0.0
    %1634 = vmatprep.subr.mxu0 0.0
    %1635 = vmatpush2.msra.mxu0 0.0
    %1636 = vmatprep.mubr.f32.mxu0 0.0
    %1637 = vmatmul.mubr.f32.gmra.mxu0 %v1570
    %v1638 = vpop.f32.mrf.mxu0
    %v1639 = vadd.f32 0.0, %v1638
    %v1640 = vpop.f32.mrf.mxu0
    %1641 = vdwg.mxu0
    %v1643 = vsel %vm1182, %v1266, 0
    %1645 = vmatprep.subr.mxu0 0.0
    %1646 = vmatpush1.msra.mxu0 0.0
    %1647 = vmatprep.subr.mxu0 0.0
    %1648 = vmatpush1.msra.mxu0 0.0
    %1649 = vmatprep.subr.mxu0 0.0
    %1650 = vmatpush1.msra.mxu0 0.0
    %1651 = vmatprep.subr.mxu0 0.0
    %1652 = vmatpush1.msra.mxu0 0.0
    %1653 = vmatprep.subr.mxu0 0.0
    %1654 = vmatpush1.msra.mxu0 0.0
    %1655 = vmatprep.subr.mxu0 0.0
    %1656 = vmatpush1.msra.mxu0 0.0
    %1657 = vmatprep.subr.mxu0 0.0
    %1658 = vmatpush1.msra.mxu0 0.0
    %1659 = vmatprep.subr.mxu0 0.0
    %1660 = vmatpush1.msra.mxu0 0.0
    %1661 = vmatprep.subr.mxu0 0.0
    %1662 = vmatpush1.msra.mxu0 0.0
    %1663 = vmatprep.subr.mxu0 0.0
    %1664 = vmatpush1.msra.mxu0 0.0
    %1665 = vmatprep.subr.mxu0 0.0
    %1666 = vmatpush1.msra.mxu0 0.0
    %1667 = vmatprep.subr.mxu0 0.0
    %1668 = vmatpush1.msra.mxu0 0.0
    %1669 = vmatprep.subr.mxu0 0.0
    %1670 = vmatpush1.msra.mxu0 0.0
    %1671 = vmatprep.subr.mxu0 0.0
    %1672 = vmatpush1.msra.mxu0 0.0
    %1673 = vmatprep.subr.mxu0 0.0
    %1674 = vmatpush1.msra.mxu0 0.0
    %1675 = vmatprep.subr.mxu0 0.0
    %1676 = vmatpush1.msra.mxu0 %v1568
    %1677 = vmatprep.subr.mxu0 0.0
    %1678 = vmatpush2.msra.mxu0 0.0
    %1679 = vmatprep.subr.mxu0 0.0
    %1680 = vmatpush2.msra.mxu0 0.0
    %1681 = vmatprep.subr.mxu0 0.0
    %1682 = vmatpush2.msra.mxu0 0.0
    %1683 = vmatprep.subr.mxu0 0.0
    %1684 = vmatpush2.msra.mxu0 0.0
    %1685 = vmatprep.subr.mxu0 0.0
    %1686 = vmatpush2.msra.mxu0 0.0
    %1687 = vmatprep.subr.mxu0 0.0
    %1688 = vmatpush2.msra.mxu0 0.0
    %1689 = vmatprep.subr.mxu0 0.0
    %1690 = vmatpush2.msra.mxu0 0.0
    %1691 = vmatprep.subr.mxu0 0.0
    %1692 = vmatpush2.msra.mxu0 0.0
    %1693 = vmatprep.subr.mxu0 0.0
    %1694 = vmatpush2.msra.mxu0 0.0
    %1695 = vmatprep.subr.mxu0 0.0
    %1696 = vmatpush2.msra.mxu0 0.0
    %1697 = vmatprep.subr.mxu0 0.0
    %1698 = vmatpush2.msra.mxu0 0.0
    %1699 = vmatprep.subr.mxu0 0.0
    %1700 = vmatpush2.msra.mxu0 0.0
    %1701 = vmatprep.subr.mxu0 0.0
    %1702 = vmatpush2.msra.mxu0 0.0
    %1703 = vmatprep.subr.mxu0 0.0
    %1704 = vmatpush2.msra.mxu0 0.0
    %1705 = vmatprep.subr.mxu0 0.0
    %1706 = vmatpush2.msra.mxu0 0.0
    %1707 = vmatprep.subr.mxu0 0.0
    %1708 = vmatpush2.msra.mxu0 0.0
    %1709 = vmatprep.mubr.f32.mxu0 0.0
    %1710 = vmatmul.mubr.f32.gmra.mxu0 %v1643
    %v1711 = vpop.f32.mrf.mxu0
    %v1712 = vadd.f32 0.0, %v1711
    %v1713 = vpop.f32.mrf.mxu0
    %1714 = vdwg.mxu0
    %v1715 = vadd.f32 %v1491, %v1639
    %v1716 = vadd.f32 %v1564, %v1712
    %v1717 = vsel %vm1017, %v552, 0.0
    %v1718 = vsel %vm1017, %v557, 0.0
    %v1720 = vsel %vm1182, %v1268, 0
    %1722 = vmatprep.subr.mxu0 0.0
    %1723 = vmatpush1.msra.mxu0 0.0
    %1724 = vmatprep.subr.mxu0 0.0
    %1725 = vmatpush1.msra.mxu0 0.0
    %1726 = vmatprep.subr.mxu0 0.0
    %1727 = vmatpush1.msra.mxu0 0.0
    %1728 = vmatprep.subr.mxu0 0.0
    %1729 = vmatpush1.msra.mxu0 0.0
    %1730 = vmatprep.subr.mxu0 0.0
    %1731 = vmatpush1.msra.mxu0 0.0
    %1732 = vmatprep.subr.mxu0 0.0
    %1733 = vmatpush1.msra.mxu0 0.0
    %1734 = vmatprep.subr.mxu0 0.0
    %1735 = vmatpush1.msra.mxu0 0.0
    %1736 = vmatprep.subr.mxu0 0.0
    %1737 = vmatpush1.msra.mxu0 0.0
    %1738 = vmatprep.subr.mxu0 0.0
    %1739 = vmatpush1.msra.mxu0 0.0
    %1740 = vmatprep.subr.mxu0 0.0
    %1741 = vmatpush1.msra.mxu0 0.0
    %1742 = vmatprep.subr.mxu0 0.0
    %1743 = vmatpush1.msra.mxu0 0.0
    %1744 = vmatprep.subr.mxu0 0.0
    %1745 = vmatpush1.msra.mxu0 0.0
    %1746 = vmatprep.subr.mxu0 0.0
    %1747 = vmatpush1.msra.mxu0 0.0
    %1748 = vmatprep.subr.mxu0 0.0
    %1749 = vmatpush1.msra.mxu0 0.0
    %1750 = vmatprep.subr.mxu0 0.0
    %1751 = vmatpush1.msra.mxu0 0.0
    %1752 = vmatprep.subr.mxu0 0.0
    %1753 = vmatpush1.msra.mxu0 %v1717
    %1754 = vmatprep.subr.mxu0 0.0
    %1755 = vmatpush2.msra.mxu0 0.0
    %1756 = vmatprep.subr.mxu0 0.0
    %1757 = vmatpush2.msra.mxu0 0.0
    %1758 = vmatprep.subr.mxu0 0.0
    %1759 = vmatpush2.msra.mxu0 0.0
    %1760 = vmatprep.subr.mxu0 0.0
    %1761 = vmatpush2.msra.mxu0 0.0
    %1762 = vmatprep.subr.mxu0 0.0
    %1763 = vmatpush2.msra.mxu0 0.0
    %1764 = vmatprep.subr.mxu0 0.0
    %1765 = vmatpush2.msra.mxu0 0.0
    %1766 = vmatprep.subr.mxu0 0.0
    %1767 = vmatpush2.msra.mxu0 0.0
    %1768 = vmatprep.subr.mxu0 0.0
    %1769 = vmatpush2.msra.mxu0 0.0
    %1770 = vmatprep.subr.mxu0 0.0
    %1771 = vmatpush2.msra.mxu0 0.0
    %1772 = vmatprep.subr.mxu0 0.0
    %1773 = vmatpush2.msra.mxu0 0.0
    %1774 = vmatprep.subr.mxu0 0.0
    %1775 = vmatpush2.msra.mxu0 0.0
    %1776 = vmatprep.subr.mxu0 0.0
    %1777 = vmatpush2.msra.mxu0 0.0
    %1778 = vmatprep.subr.mxu0 0.0
    %1779 = vmatpush2.msra.mxu0 0.0
    %1780 = vmatprep.subr.mxu0 0.0
    %1781 = vmatpush2.msra.mxu0 0.0
    %1782 = vmatprep.subr.mxu0 0.0
    %1783 = vmatpush2.msra.mxu0 0.0
    %1784 = vmatprep.subr.mxu0 0.0
    %1785 = vmatpush2.msra.mxu0 0.0
    %1786 = vmatprep.mubr.f32.mxu0 0.0
    %1787 = vmatmul.mubr.f32.gmra.mxu0 %v1720
    %v1788 = vpop.f32.mrf.mxu0
    %v1789 = vadd.f32 0.0, %v1788
    %v1790 = vpop.f32.mrf.mxu0
    %1791 = vdwg.mxu0
    %v1793 = vsel %vm1182, %v1270, 0
    %1795 = vmatprep.subr.mxu0 0.0
    %1796 = vmatpush1.msra.mxu0 0.0
    %1797 = vmatprep.subr.mxu0 0.0
    %1798 = vmatpush1.msra.mxu0 0.0
    %1799 = vmatprep.subr.mxu0 0.0
    %1800 = vmatpush1.msra.mxu0 0.0
    %1801 = vmatprep.subr.mxu0 0.0
    %1802 = vmatpush1.msra.mxu0 0.0
    %1803 = vmatprep.subr.mxu0 0.0
    %1804 = vmatpush1.msra.mxu0 0.0
    %1805 = vmatprep.subr.mxu0 0.0
    %1806 = vmatpush1.msra.mxu0 0.0
    %1807 = vmatprep.subr.mxu0 0.0
    %1808 = vmatpush1.msra.mxu0 0.0
    %1809 = vmatprep.subr.mxu0 0.0
    %1810 = vmatpush1.msra.mxu0 0.0
    %1811 = vmatprep.subr.mxu0 0.0
    %1812 = vmatpush1.msra.mxu0 0.0
    %1813 = vmatprep.subr.mxu0 0.0
    %1814 = vmatpush1.msra.mxu0 0.0
    %1815 = vmatprep.subr.mxu0 0.0
    %1816 = vmatpush1.msra.mxu0 0.0
    %1817 = vmatprep.subr.mxu0 0.0
    %1818 = vmatpush1.msra.mxu0 0.0
    %1819 = vmatprep.subr.mxu0 0.0
    %1820 = vmatpush1.msra.mxu0 0.0
    %1821 = vmatprep.subr.mxu0 0.0
    %1822 = vmatpush1.msra.mxu0 0.0
    %1823 = vmatprep.subr.mxu0 0.0
    %1824 = vmatpush1.msra.mxu0 0.0
    %1825 = vmatprep.subr.mxu0 0.0
    %1826 = vmatpush1.msra.mxu0 %v1718
    %1827 = vmatprep.subr.mxu0 0.0
    %1828 = vmatpush2.msra.mxu0 0.0
    %1829 = vmatprep.subr.mxu0 0.0
    %1830 = vmatpush2.msra.mxu0 0.0
    %1831 = vmatprep.subr.mxu0 0.0
    %1832 = vmatpush2.msra.mxu0 0.0
    %1833 = vmatprep.subr.mxu0 0.0
    %1834 = vmatpush2.msra.mxu0 0.0
    %1835 = vmatprep.subr.mxu0 0.0
    %1836 = vmatpush2.msra.mxu0 0.0
    %1837 = vmatprep.subr.mxu0 0.0
    %1838 = vmatpush2.msra.mxu0 0.0
    %1839 = vmatprep.subr.mxu0 0.0
    %1840 = vmatpush2.msra.mxu0 0.0
    %1841 = vmatprep.subr.mxu0 0.0
    %1842 = vmatpush2.msra.mxu0 0.0
    %1843 = vmatprep.subr.mxu0 0.0
    %1844 = vmatpush2.msra.mxu0 0.0
    %1845 = vmatprep.subr.mxu0 0.0
    %1846 = vmatpush2.msra.mxu0 0.0
    %1847 = vmatprep.subr.mxu0 0.0
    %1848 = vmatpush2.msra.mxu0 0.0
    %1849 = vmatprep.subr.mxu0 0.0
    %1850 = vmatpush2.msra.mxu0 0.0
    %1851 = vmatprep.subr.mxu0 0.0
    %1852 = vmatpush2.msra.mxu0 0.0
    %1853 = vmatprep.subr.mxu0 0.0
    %1854 = vmatpush2.msra.mxu0 0.0
    %1855 = vmatprep.subr.mxu0 0.0
    %1856 = vmatpush2.msra.mxu0 0.0
    %1857 = vmatprep.subr.mxu0 0.0
    %1858 = vmatpush2.msra.mxu0 0.0
    %1859 = vmatprep.mubr.f32.mxu0 0.0
    %1860 = vmatmul.mubr.f32.gmra.mxu0 %v1793
    %v1861 = vpop.f32.mrf.mxu0
    %v1862 = vadd.f32 0.0, %v1861
    %v1863 = vpop.f32.mrf.mxu0
    %1864 = vdwg.mxu0
    %v1865 = vadd.f32 %v1715, %v1789
    %v1866 = vadd.f32 %v1716, %v1862
    %v1867 = vld [vmem:[#allocation13] sm:$0xff]
    %v1868 = vld [vmem:[#allocation13 + $0x8] sm:$0xff]
    %v1869 = vld [vmem:[#allocation13 + $0x10] sm:$0xff]
    %v1870 = vld [vmem:[#allocation13 + $0x18] sm:$0xff]
    %v1871 = vld [vmem:[%s13] sm:$0x1]
    %v1873 = vlaneseq
    %v1874 = vshrl.u32 %v1873, 7
    %v1875 = vsub.s32 0, %v1874
    %v1876 = vrot.slane %v1871, %v1875
    %v1879 = vsel %vm252, %v1865, 0
    %v1882 = vsel %vm252, %v1866, 0
    %1884 = vmatprep.subr.mxu0 0.0
    %1885 = vmatpush1.msra.mxu0 0.0
    %1886 = vmatprep.subr.mxu0 0.0
    %1887 = vmatpush1.msra.mxu0 0.0
    %1888 = vmatprep.subr.mxu0 0.0
    %1889 = vmatpush1.msra.mxu0 0.0
    %1890 = vmatprep.subr.mxu0 0.0
    %1891 = vmatpush1.msra.mxu0 0.0
    %1892 = vmatprep.subr.mxu0 0.0
    %1893 = vmatpush1.msra.mxu0 0.0
    %1894 = vmatprep.subr.mxu0 0.0
    %1895 = vmatpush1.msra.mxu0 0.0
    %1896 = vmatprep.subr.mxu0 0.0
    %1897 = vmatpush1.msra.mxu0 0.0
    %1898 = vmatprep.subr.mxu0 0.0
    %1899 = vmatpush1.msra.mxu0 0.0
    %1900 = vmatprep.subr.mxu0 0.0
    %1901 = vmatpush1.msra.mxu0 0.0
    %1902 = vmatprep.subr.mxu0 0.0
    %1903 = vmatpush1.msra.mxu0 0.0
    %1904 = vmatprep.subr.mxu0 0.0
    %1905 = vmatpush1.msra.mxu0 0.0
    %1906 = vmatprep.subr.mxu0 0.0
    %1907 = vmatpush1.msra.mxu0 0.0
    %1908 = vmatprep.subr.mxu0 0.0
    %1909 = vmatpush1.msra.mxu0 %v1870
    %1910 = vmatprep.subr.mxu0 0.0
    %1911 = vmatpush1.msra.mxu0 %v1869
    %1912 = vmatprep.subr.mxu0 0.0
    %1913 = vmatpush1.msra.mxu0 %v1868
    %1914 = vmatprep.subr.mxu0 0.0
    %1915 = vmatpush1.msra.mxu0 %v1867
    %1916 = vmatprep.subr.mxu0 0.0
    %1917 = vmatpush2.msra.mxu0 0.0
    %1918 = vmatprep.subr.mxu0 0.0
    %1919 = vmatpush2.msra.mxu0 0.0
    %1920 = vmatprep.subr.mxu0 0.0
    %1921 = vmatpush2.msra.mxu0 0.0
    %1922 = vmatprep.subr.mxu0 0.0
    %1923 = vmatpush2.msra.mxu0 0.0
    %1924 = vmatprep.subr.mxu0 0.0
    %1925 = vmatpush2.msra.mxu0 0.0
    %1926 = vmatprep.subr.mxu0 0.0
    %1927 = vmatpush2.msra.mxu0 0.0
    %1928 = vmatprep.subr.mxu0 0.0
    %1929 = vmatpush2.msra.mxu0 0.0
    %1930 = vmatprep.subr.mxu0 0.0
    %1931 = vmatpush2.msra.mxu0 0.0
    %1932 = vmatprep.subr.mxu0 0.0
    %1933 = vmatpush2.msra.mxu0 0.0
    %1934 = vmatprep.subr.mxu0 0.0
    %1935 = vmatpush2.msra.mxu0 0.0
    %1936 = vmatprep.subr.mxu0 0.0
    %1937 = vmatpush2.msra.mxu0 0.0
    %1938 = vmatprep.subr.mxu0 0.0
    %1939 = vmatpush2.msra.mxu0 0.0
    %1940 = vmatprep.subr.mxu0 0.0
    %1941 = vmatpush2.msra.mxu0 0.0
    %1942 = vmatprep.subr.mxu0 0.0
    %1943 = vmatpush2.msra.mxu0 0.0
    %1944 = vmatprep.subr.mxu0 0.0
    %1945 = vmatpush2.msra.mxu0 0.0
    %1946 = vmatprep.subr.mxu0 0.0
    %1947 = vmatpush2.msra.mxu0 0.0
    %1948 = vmatprep.mubr.f32.mxu0 0.0
    %1949 = vmatmul.mubr.f32.gmra.mxu0 %v1879
    %v1950 = vpop.f32.mrf.mxu0
    %v1951 = vadd.f32 %v1876, %v1950
    %v1952 = vpop.f32.mrf.mxu0
    %1953 = vmatprep.mubr.f32.mxu0 0.0
    %1954 = vmatmul.mubr.f32.gmra.mxu0 %v1882
    %v1955 = vpop.f32.mrf.mxu0
    %v1956 = vadd.f32 %v1876, %v1955
    %v1957 = vpop.f32.mrf.mxu0
    %1958 = vdwg.mxu0
    %v1959 = vadd.f32 %v294, %v1951
    %v1960 = vadd.f32 %v295, %v1956
    %v1961 = vld [vmem:[%s14] sm:$0x1]
    %v1962 = vld [vmem:[%s15] sm:$0x1]
    %v1963 = vsel %vm252, %v1959, 0.0
    %1964 = vadd.xlane.f32.xlu0 %v1963
    %v1965 = vpop.xlane.xlu0 %1964
    %v1966 = vsel %vm252, %v1960, 0.0
    %1967 = vadd.xlane.f32.xlu0 %v1966
    %v1968 = vpop.xlane.xlu0 %1967
    %v1969 = vmul.f32 %v1965, %v259
    %v1970 = vmul.f32 %v1968, %v259
    %v1971 = vsub.f32 %v1959, %v1969
    %v1972 = vsub.f32 %v1960, %v1970
    %v1973 = vmul.f32 %v1971, %v1971
    %v1974 = vmul.f32 %v1972, %v1972
    %v1975 = vsel %vm252, %v1973, 0.0
    %1976 = vadd.xlane.f32.xlu0 %v1975
    %v1977 = vpop.xlane.xlu0 %1976
    %v1978 = vsel %vm252, %v1974, 0.0
    %1979 = vadd.xlane.f32.xlu0 %v1978
    %v1980 = vpop.xlane.xlu0 %1979
    %v1981 = vmul.f32 %v1977, %v259
    %v1982 = vmul.f32 %v1980, %v259
    %v1983 = vadd.f32 %v1981, 1e-12
    %v1984 = vadd.f32 %v1982, 1e-12
    %v1985 = vrsqrt.pop %v1983
    %v1986 = vrsqrt.pop %v1984
    %v1987 = vmul.f32 %v1971, %v1985
    %v1988 = vmul.f32 %v1972, %v1986
    %v1990 = vlaneseq
    %v1991 = vshrl.u32 %v1990, 7
    %v1992 = vsub.s32 0, %v1991
    %v1993 = vrot.slane %v1961, %v1992
    %v1995 = vmul.f32 %v1987, %v1993
    %v1996 = vmul.f32 %v1988, %v1993
    %v1998 = vlaneseq
    %v1999 = vshrl.u32 %v1998, 7
    %v2000 = vsub.s32 0, %v1999
    %v2001 = vrot.slane %v1962, %v2000
    %v2003 = vadd.f32 %v1995, %v2001
    %v2004 = vadd.f32 %v1996, %v2001
    %v2005 = vld [vmem:[#allocation14] sm:$0xff]
    %v2006 = vld [vmem:[#allocation14 + $0x8] sm:$0xff]
    %v2007 = vld [vmem:[#allocation14 + $0x10] sm:$0xff]
    %v2008 = vld [vmem:[#allocation14 + $0x18] sm:$0xff]
    %v2009 = vld [vmem:[%s17] sm:$0x1]
    %v2011 = vlaneseq
    %v2012 = vshrl.u32 %v2011, 7
    %v2013 = vsub.s32 0, %v2012
    %v2014 = vrot.slane %v2009, %v2013
    %v2017 = vsel %vm252, %v2003, 0
    %v2020 = vsel %vm252, %v2004, 0
    %2022 = vmatprep.subr.mxu0 0.0
    %2023 = vmatpush1.msra.mxu0 0.0
    %2024 = vmatprep.subr.mxu0 0.0
    %2025 = vmatpush1.msra.mxu0 0.0
    %2026 = vmatprep.subr.mxu0 0.0
    %2027 = vmatpush1.msra.mxu0 0.0
    %2028 = vmatprep.subr.mxu0 0.0
    %2029 = vmatpush1.msra.mxu0 0.0
    %2030 = vmatprep.subr.mxu0 0.0
    %2031 = vmatpush1.msra.mxu0 0.0
    %2032 = vmatprep.subr.mxu0 0.0
    %2033 = vmatpush1.msra.mxu0 0.0
    %2034 = vmatprep.subr.mxu0 0.0
    %2035 = vmatpush1.msra.mxu0 0.0
    %2036 = vmatprep.subr.mxu0 0.0
    %2037 = vmatpush1.msra.mxu0 0.0
    %2038 = vmatprep.subr.mxu0 0.0
    %2039 = vmatpush1.msra.mxu0 0.0
    %2040 = vmatprep.subr.mxu0 0.0
    %2041 = vmatpush1.msra.mxu0 0.0
    %2042 = vmatprep.subr.mxu0 0.0
    %2043 = vmatpush1.msra.mxu0 0.0
    %2044 = vmatprep.subr.mxu0 0.0
    %2045 = vmatpush1.msra.mxu0 0.0
    %2046 = vmatprep.subr.mxu0 0.0
    %2047 = vmatpush1.msra.mxu0 %v2008
    %2048 = vmatprep.subr.mxu0 0.0
    %2049 = vmatpush1.msra.mxu0 %v2007
    %2050 = vmatprep.subr.mxu0 0.0
    %2051 = vmatpush1.msra.mxu0 %v2006
    %2052 = vmatprep.subr.mxu0 0.0
    %2053 = vmatpush1.msra.mxu0 %v2005
    %2054 = vmatprep.subr.mxu0 0.0
    %2055 = vmatpush2.msra.mxu0 0.0
    %2056 = vmatprep.subr.mxu0 0.0
    %2057 = vmatpush2.msra.mxu0 0.0
    %2058 = vmatprep.subr.mxu0 0.0
    %2059 = vmatpush2.msra.mxu0 0.0
    %2060 = vmatprep.subr.mxu0 0.0
    %2061 = vmatpush2.msra.mxu0 0.0
    %2062 = vmatprep.subr.mxu0 0.0
    %2063 = vmatpush2.msra.mxu0 0.0
    %2064 = vmatprep.subr.mxu0 0.0
    %2065 = vmatpush2.msra.mxu0 0.0
    %2066 = vmatprep.subr.mxu0 0.0
    %2067 = vmatpush2.msra.mxu0 0.0
    %2068 = vmatprep.subr.mxu0 0.0
    %2069 = vmatpush2.msra.mxu0 0.0
    %2070 = vmatprep.subr.mxu0 0.0
    %2071 = vmatpush2.msra.mxu0 0.0
    %2072 = vmatprep.subr.mxu0 0.0
    %2073 = vmatpush2.msra.mxu0 0.0
    %2074 = vmatprep.subr.mxu0 0.0
    %2075 = vmatpush2.msra.mxu0 0.0
    %2076 = vmatprep.subr.mxu0 0.0
    %2077 = vmatpush2.msra.mxu0 0.0
    %2078 = vmatprep.subr.mxu0 0.0
    %2079 = vmatpush2.msra.mxu0 0.0
    %2080 = vmatprep.subr.mxu0 0.0
    %2081 = vmatpush2.msra.mxu0 0.0
    %2082 = vmatprep.subr.mxu0 0.0
    %2083 = vmatpush2.msra.mxu0 0.0
    %2084 = vmatprep.subr.mxu0 0.0
    %2085 = vmatpush2.msra.mxu0 0.0
    %2086 = vmatprep.mubr.f32.mxu0 0.0
    %2087 = vmatmul.mubr.f32.gmra.mxu0 %v2017
    %v2088 = vpop.f32.mrf.mxu0
    %v2089 = vadd.f32 %v2014, %v2088
    %v2090 = vpop.f32.mrf.mxu0
    %2091 = vmatprep.mubr.f32.mxu0 0.0
    %2092 = vmatmul.mubr.f32.gmra.mxu0 %v2020
    %v2093 = vpop.f32.mrf.mxu0
    %v2094 = vadd.f32 %v2014, %v2093
    %v2095 = vpop.f32.mrf.mxu0
    %2096 = vdwg.mxu0
    %v2097 = vmul.f32 %v2089, 0.5
    %v2098 = vmul.f32 %v2094, 0.5
    %v2099 = vmul.f32 %v2089, 0.044715
    %v2100 = vmul.f32 %v2094, 0.044715
    %v2101 = vmul.f32 %v2099, %v2089
    %v2102 = vmul.f32 %v2100, %v2094
    %v2103 = vmul.f32 %v2101, %v2089
    %v2104 = vmul.f32 %v2102, %v2094
    %v2105 = vadd.f32 %v2089, %v2103
    %v2106 = vadd.f32 %v2094, %v2104
    %v2107 = vmul.f32 %v2105, 0.7978846
    %v2108 = vmul.f32 %v2106, 0.7978846
    %v2109 = vtanh.pop %v2107
    %v2110 = vtanh.pop %v2108
    %v2111 = vadd.f32 %v2109, 1.0
    %v2112 = vadd.f32 %v2110, 1.0
    %v2113 = vmul.f32 %v2097, %v2111
    %v2114 = vmul.f32 %v2098, %v2112
    %v2115 = vld [vmem:[%s18] sm:$0xff]
    %v2116 = vld [vmem:[%s18 + $0x8] sm:$0xff]
    %v2117 = vld [vmem:[%s18 + $0x10] sm:$0xff]
    %v2118 = vld [vmem:[%s18 + $0x18] sm:$0xff]
    %v2119 = vld [vmem:[%s18 + $0x20] sm:$0xff]
    %v2120 = vld [vmem:[%s18 + $0x28] sm:$0xff]
    %v2121 = vld [vmem:[%s18 + $0x30] sm:$0xff]
    %v2122 = vld [vmem:[%s18 + $0x38] sm:$0xff]
    %v2123 = vld [vmem:[%s19] sm:$0x1]
    %v2125 = vlaneseq
    %v2126 = vshrl.u32 %v2125, 7
    %v2127 = vsub.s32 0, %v2126
    %v2128 = vrot.slane %v2123, %v2127
    %vm2130 = vcmask 523264
    %v2132 = vsel %vm2130, %v2113, 0
    %v2135 = vsel %vm2130, %v2114, 0
    %2137 = vmatprep.subr.mxu0 0.0
    %2138 = vmatpush1.msra.mxu0 0.0
    %2139 = vmatprep.subr.mxu0 0.0
    %2140 = vmatpush1.msra.mxu0 0.0
    %2141 = vmatprep.subr.mxu0 0.0
    %2142 = vmatpush1.msra.mxu0 0.0
    %2143 = vmatprep.subr.mxu0 0.0
    %2144 = vmatpush1.msra.mxu0 0.0
    %2145 = vmatprep.subr.mxu0 0.0
    %2146 = vmatpush1.msra.mxu0 0.0
    %2147 = vmatprep.subr.mxu0 0.0
    %2148 = vmatpush1.msra.mxu0 0.0
    %2149 = vmatprep.subr.mxu0 0.0
    %2150 = vmatpush1.msra.mxu0 0.0
    %2151 = vmatprep.subr.mxu0 0.0
    %2152 = vmatpush1.msra.mxu0 0.0
    %2153 = vmatprep.subr.mxu0 0.0
    %2154 = vmatpush1.msra.mxu0 %v2122
    %2155 = vmatprep.subr.mxu0 0.0
    %2156 = vmatpush1.msra.mxu0 %v2121
    %2157 = vmatprep.subr.mxu0 0.0
    %2158 = vmatpush1.msra.mxu0 %v2120
    %2159 = vmatprep.subr.mxu0 0.0
    %2160 = vmatpush1.msra.mxu0 %v2119
    %2161 = vmatprep.subr.mxu0 0.0
    %2162 = vmatpush1.msra.mxu0 %v2118
    %2163 = vmatprep.subr.mxu0 0.0
    %2164 = vmatpush1.msra.mxu0 %v2117
    %2165 = vmatprep.subr.mxu0 0.0
    %2166 = vmatpush1.msra.mxu0 %v2116
    %2167 = vmatprep.subr.mxu0 0.0
    %2168 = vmatpush1.msra.mxu0 %v2115
    %2169 = vmatprep.subr.mxu0 0.0
    %2170 = vmatpush2.msra.mxu0 0.0
    %2171 = vmatprep.subr.mxu0 0.0
    %2172 = vmatpush2.msra.mxu0 0.0
    %2173 = vmatprep.subr.mxu0 0.0
    %2174 = vmatpush2.msra.mxu0 0.0
    %2175 = vmatprep.subr.mxu0 0.0
    %2176 = vmatpush2.msra.mxu0 0.0
    %2177 = vmatprep.subr.mxu0 0.0
    %2178 = vmatpush2.msra.mxu0 0.0
    %2179 = vmatprep.subr.mxu0 0.0
    %2180 = vmatpush2.msra.mxu0 0.0
    %2181 = vmatprep.subr.mxu0 0.0
    %2182 = vmatpush2.msra.mxu0 0.0
    %2183 = vmatprep.subr.mxu0 0.0
    %2184 = vmatpush2.msra.mxu0 0.0
    %2185 = vmatprep.subr.mxu0 0.0
    %2186 = vmatpush2.msra.mxu0 0.0
    %2187 = vmatprep.subr.mxu0 0.0
    %2188 = vmatpush2.msra.mxu0 0.0
    %2189 = vmatprep.subr.mxu0 0.0
    %2190 = vmatpush2.msra.mxu0 0.0
    %2191 = vmatprep.subr.mxu0 0.0
    %2192 = vmatpush2.msra.mxu0 0.0
    %2193 = vmatprep.subr.mxu0 0.0
    %2194 = vmatpush2.msra.mxu0 0.0
    %2195 = vmatprep.subr.mxu0 0.0
    %2196 = vmatpush2.msra.mxu0 0.0
    %2197 = vmatprep.subr.mxu0 0.0
    %2198 = vmatpush2.msra.mxu0 0.0
    %2199 = vmatprep.subr.mxu0 0.0
    %2200 = vmatpush2.msra.mxu0 0.0
    %2201 = vmatprep.mubr.f32.mxu0 0.0
    %2202 = vmatmul.mubr.f32.gmra.mxu0 %v2132
    %v2203 = vpop.f32.mrf.mxu0
    %v2204 = vadd.f32 %v2128, %v2203
    %v2205 = vpop.f32.mrf.mxu0
    %2206 = vmatprep.mubr.f32.mxu0 0.0
    %2207 = vmatmul.mubr.f32.gmra.mxu0 %v2135
    %v2208 = vpop.f32.mrf.mxu0
    %v2209 = vadd.f32 %v2128, %v2208
    %v2210 = vpop.f32.mrf.mxu0
    %2211 = vdwg.mxu0
    %v2212 = vadd.f32 %v2003, %v2204
    %v2213 = vadd.f32 %v2004, %v2209
    %v2214 = vld [vmem:[%s20] sm:$0x1]
    %v2215 = vld [vmem:[%s21] sm:$0x1]
    %v2216 = vsel %vm252, %v2212, 0.0
    %2217 = vadd.xlane.f32.xlu0 %v2216
    %v2218 = vpop.xlane.xlu0 %2217
    %v2219 = vsel %vm252, %v2213, 0.0
    %2220 = vadd.xlane.f32.xlu0 %v2219
    %v2221 = vpop.xlane.xlu0 %2220
    %v2222 = vmul.f32 %v2218, %v259
    %v2223 = vmul.f32 %v2221, %v259
    %v2224 = vsub.f32 %v2212, %v2222
    %v2225 = vsub.f32 %v2213, %v2223
    %v2226 = vmul.f32 %v2224, %v2224
    %v2227 = vmul.f32 %v2225, %v2225
    %v2228 = vsel %vm252, %v2226, 0.0
    %2229 = vadd.xlane.f32.xlu0 %v2228
    %v2230 = vpop.xlane.xlu0 %2229
    %v2231 = vsel %vm252, %v2227, 0.0
    %2232 = vadd.xlane.f32.xlu0 %v2231
    %v2233 = vpop.xlane.xlu0 %2232
    %v2234 = vmul.f32 %v2230, %v259
    %v2235 = vmul.f32 %v2233, %v259
    %v2236 = vadd.f32 %v2234, 1e-12
    %v2237 = vadd.f32 %v2235, 1e-12
    %v2238 = vrsqrt.pop %v2236
    %v2239 = vrsqrt.pop %v2237
    %v2240 = vmul.f32 %v2224, %v2238
    %v2241 = vmul.f32 %v2225, %v2239
    %v2243 = vlaneseq
    %v2244 = vshrl.u32 %v2243, 7
    %v2245 = vsub.s32 0, %v2244
    %v2246 = vrot.slane %v2214, %v2245
    %v2248 = vmul.f32 %v2240, %v2246
    %v2249 = vmul.f32 %v2241, %v2246
    %v2251 = vlaneseq
    %v2252 = vshrl.u32 %v2251, 7
    %v2253 = vsub.s32 0, %v2252
    %v2254 = vrot.slane %v2215, %v2253
    %v2256 = vadd.f32 %v2248, %v2254
    %v2257 = vadd.f32 %v2249, %v2254
    %s2258 = scalar_lea.vmem %s6, 32
    %v2259 = vld [vmem:[%s2258] sm:$0xff]
    %v2260 = vld [vmem:[%s2258 + $0x8] sm:$0xff]
    %v2261 = vld [vmem:[%s2258 + $0x10] sm:$0xff]
    %v2262 = vld [vmem:[%s2258 + $0x18] sm:$0xff]
    %s2263 = scalar_lea.vmem %s9, 1
    %v2264 = vld [vmem:[%s2263] sm:$0x1]
    %v2266 = vlaneseq
    %v2267 = vshrl.u32 %v2266, 7
    %v2268 = vsub.s32 0, %v2267
    %v2269 = vrot.slane %v2264, %v2268
    %v2272 = vsel %vm252, %v2256, 0
    %v2275 = vsel %vm252, %v2257, 0
    %2277 = vmatprep.subr.mxu0 0.0
    %2278 = vmatpush1.msra.mxu0 0.0
    %2279 = vmatprep.subr.mxu0 0.0
    %2280 = vmatpush1.msra.mxu0 0.0
    %2281 = vmatprep.subr.mxu0 0.0
    %2282 = vmatpush1.msra.mxu0 0.0
    %2283 = vmatprep.subr.mxu0 0.0
    %2284 = vmatpush1.msra.mxu0 0.0
    %2285 = vmatprep.subr.mxu0 0.0
    %2286 = vmatpush1.msra.mxu0 0.0
    %2287 = vmatprep.subr.mxu0 0.0
    %2288 = vmatpush1.msra.mxu0 0.0
    %2289 = vmatprep.subr.mxu0 0.0
    %2290 = vmatpush1.msra.mxu0 0.0
    %2291 = vmatprep.subr.mxu0 0.0
    %2292 = vmatpush1.msra.mxu0 0.0
    %2293 = vmatprep.subr.mxu0 0.0
    %2294 = vmatpush1.msra.mxu0 0.0
    %2295 = vmatprep.subr.mxu0 0.0
    %2296 = vmatpush1.msra.mxu0 0.0
    %2297 = vmatprep.subr.mxu0 0.0
    %2298 = vmatpush1.msra.mxu0 0.0
    %2299 = vmatprep.subr.mxu0 0.0
    %2300 = vmatpush1.msra.mxu0 0.0
    %2301 = vmatprep.subr.mxu0 0.0
    %2302 = vmatpush1.msra.mxu0 %v2262
    %2303 = vmatprep.subr.mxu0 0.0
    %2304 = vmatpush1.msra.mxu0 %v2261
    %2305 = vmatprep.subr.mxu0 0.0
    %2306 = vmatpush1.msra.mxu0 %v2260
    %2307 = vmatprep.subr.mxu0 0.0
    %2308 = vmatpush1.msra.mxu0 %v2259
    %2309 = vmatprep.subr.mxu0 0.0
    %2310 = vmatpush2.msra.mxu0 0.0
    %2311 = vmatprep.subr.mxu0 0.0
    %2312 = vmatpush2.msra.mxu0 0.0
    %2313 = vmatprep.subr.mxu0 0.0
    %2314 = vmatpush2.msra.mxu0 0.0
    %2315 = vmatprep.subr.mxu0 0.0
    %2316 = vmatpush2.msra.mxu0 0.0
    %2317 = vmatprep.subr.mxu0 0.0
    %2318 = vmatpush2.msra.mxu0 0.0
    %2319 = vmatprep.subr.mxu0 0.0
    %2320 = vmatpush2.msra.mxu0 0.0
    %2321 = vmatprep.subr.mxu0 0.0
    %2322 = vmatpush2.msra.mxu0 0.0
    %2323 = vmatprep.subr.mxu0 0.0
    %2324 = vmatpush2.msra.mxu0 0.0
    %2325 = vmatprep.subr.mxu0 0.0
    %2326 = vmatpush2.msra.mxu0 0.0
    %2327 = vmatprep.subr.mxu0 0.0
    %2328 = vmatpush2.msra.mxu0 0.0
    %2329 = vmatprep.subr.mxu0 0.0
    %2330 = vmatpush2.msra.mxu0 0.0
    %2331 = vmatprep.subr.mxu0 0.0
    %2332 = vmatpush2.msra.mxu0 0.0
    %2333 = vmatprep.subr.mxu0 0.0
    %2334 = vmatpush2.msra.mxu0 0.0
    %2335 = vmatprep.subr.mxu0 0.0
    %2336 = vmatpush2.msra.mxu0 0.0
    %2337 = vmatprep.subr.mxu0 0.0
    %2338 = vmatpush2.msra.mxu0 0.0
    %2339 = vmatprep.subr.mxu0 0.0
    %2340 = vmatpush2.msra.mxu0 0.0
    %2341 = vmatprep.mubr.f32.mxu0 0.0
    %2342 = vmatmul.mubr.f32.gmra.mxu0 %v2272
    %v2343 = vpop.f32.mrf.mxu0
    %v2344 = vadd.f32 %v2269, %v2343
    %v2345 = vpop.f32.mrf.mxu0
    %2346 = vmatprep.mubr.f32.mxu0 0.0
    %2347 = vmatmul.mubr.f32.gmra.mxu0 %v2275
    %v2348 = vpop.f32.mrf.mxu0
    %v2349 = vadd.f32 %v2269, %v2348
    %v2350 = vpop.f32.mrf.mxu0
    %2351 = vdwg.mxu0
    %s2352 = scalar_lea.vmem %s7, 32
    %v2353 = vld [vmem:[%s2352] sm:$0xff]
    %v2354 = vld [vmem:[%s2352 + $0x8] sm:$0xff]
    %v2355 = vld [vmem:[%s2352 + $0x10] sm:$0xff]
    %v2356 = vld [vmem:[%s2352 + $0x18] sm:$0xff]
    %s2357 = scalar_lea.vmem %s10, 1
    %v2358 = vld [vmem:[%s2357] sm:$0x1]
    %v2360 = vlaneseq
    %v2361 = vshrl.u32 %v2360, 7
    %v2362 = vsub.s32 0, %v2361
    %v2363 = vrot.slane %v2358, %v2362
    %2365 = vmatprep.subr.mxu0 0.0
    %2366 = vmatpush1.msra.mxu0 0.0
    %2367 = vmatprep.subr.mxu0 0.0
    %2368 = vmatpush1.msra.mxu0 0.0
    %2369 = vmatprep.subr.mxu0 0.0
    %2370 = vmatpush1.msra.mxu0 0.0
    %2371 = vmatprep.subr.mxu0 0.0
    %2372 = vmatpush1.msra.mxu0 0.0
    %2373 = vmatprep.subr.mxu0 0.0
    %2374 = vmatpush1.msra.mxu0 0.0
    %2375 = vmatprep.subr.mxu0 0.0
    %2376 = vmatpush1.msra.mxu0 0.0
    %2377 = vmatprep.subr.mxu0 0.0
    %2378 = vmatpush1.msra.mxu0 0.0
    %2379 = vmatprep.subr.mxu0 0.0
    %2380 = vmatpush1.msra.mxu0 0.0
    %2381 = vmatprep.subr.mxu0 0.0
    %2382 = vmatpush1.msra.mxu0 0.0
    %2383 = vmatprep.subr.mxu0 0.0
    %2384 = vmatpush1.msra.mxu0 0.0
    %2385 = vmatprep.subr.mxu0 0.0
    %2386 = vmatpush1.msra.mxu0 0.0
    %2387 = vmatprep.subr.mxu0 0.0
    %2388 = vmatpush1.msra.mxu0 0.0
    %2389 = vmatprep.subr.mxu0 0.0
    %2390 = vmatpush1.msra.mxu0 %v2356
    %2391 = vmatprep.subr.mxu0 0.0
    %2392 = vmatpush1.msra.mxu0 %v2355
    %2393 = vmatprep.subr.mxu0 0.0
    %2394 = vmatpush1.msra.mxu0 %v2354
    %2395 = vmatprep.subr.mxu0 0.0
    %2396 = vmatpush1.msra.mxu0 %v2353
    %2397 = vmatprep.subr.mxu0 0.0
    %2398 = vmatpush2.msra.mxu0 0.0
    %2399 = vmatprep.subr.mxu0 0.0
    %2400 = vmatpush2.msra.mxu0 0.0
    %2401 = vmatprep.subr.mxu0 0.0
    %2402 = vmatpush2.msra.mxu0 0.0
    %2403 = vmatprep.subr.mxu0 0.0
    %2404 = vmatpush2.msra.mxu0 0.0
    %2405 = vmatprep.subr.mxu0 0.0
    %2406 = vmatpush2.msra.mxu0 0.0
    %2407 = vmatprep.subr.mxu0 0.0
    %2408 = vmatpush2.msra.mxu0 0.0
    %2409 = vmatprep.subr.mxu0 0.0
    %2410 = vmatpush2.msra.mxu0 0.0
    %2411 = vmatprep.subr.mxu0 0.0
    %2412 = vmatpush2.msra.mxu0 0.0
    %2413 = vmatprep.subr.mxu0 0.0
    %2414 = vmatpush2.msra.mxu0 0.0
    %2415 = vmatprep.subr.mxu0 0.0
    %2416 = vmatpush2.msra.mxu0 0.0
    %2417 = vmatprep.subr.mxu0 0.0
    %2418 = vmatpush2.msra.mxu0 0.0
    %2419 = vmatprep.subr.mxu0 0.0
    %2420 = vmatpush2.msra.mxu0 0.0
    %2421 = vmatprep.subr.mxu0 0.0
    %2422 = vmatpush2.msra.mxu0 0.0
    %2423 = vmatprep.subr.mxu0 0.0
    %2424 = vmatpush2.msra.mxu0 0.0
    %2425 = vmatprep.subr.mxu0 0.0
    %2426 = vmatpush2.msra.mxu0 0.0
    %2427 = vmatprep.subr.mxu0 0.0
    %2428 = vmatpush2.msra.mxu0 0.0
    %2429 = vmatprep.mubr.f32.mxu0 0.0
    %2430 = vmatmul.mubr.f32.gmra.mxu0 %v2272
    %v2431 = vpop.f32.mrf.mxu0
    %v2432 = vadd.f32 %v2363, %v2431
    %v2433 = vpop.f32.mrf.mxu0
    %2434 = vmatprep.mubr.f32.mxu0 0.0
    %2435 = vmatmul.mubr.f32.gmra.mxu0 %v2275
    %v2436 = vpop.f32.mrf.mxu0
    %v2437 = vadd.f32 %v2363, %v2436
    %v2438 = vpop.f32.mrf.mxu0
    %2439 = vdwg.mxu0
    %s2440 = scalar_lea.vmem %s8, 32
    %v2441 = vld [vmem:[%s2440] sm:$0xff]
    %v2442 = vld [vmem:[%s2440 + $0x8] sm:$0xff]
    %v2443 = vld [vmem:[%s2440 + $0x10] sm:$0xff]
    %v2444 = vld [vmem:[%s2440 + $0x18] sm:$0xff]
    %s2445 = scalar_lea.vmem %s11, 1
    %v2446 = vld [vmem:[%s2445] sm:$0x1]
    %v2448 = vlaneseq
    %v2449 = vshrl.u32 %v2448, 7
    %v2450 = vsub.s32 0, %v2449
    %v2451 = vrot.slane %v2446, %v2450
    %2453 = vmatprep.subr.mxu0 0.0
    %2454 = vmatpush1.msra.mxu0 0.0
    %2455 = vmatprep.subr.mxu0 0.0
    %2456 = vmatpush1.msra.mxu0 0.0
    %2457 = vmatprep.subr.mxu0 0.0
    %2458 = vmatpush1.msra.mxu0 0.0
    %2459 = vmatprep.subr.mxu0 0.0
    %2460 = vmatpush1.msra.mxu0 0.0
    %2461 = vmatprep.subr.mxu0 0.0
    %2462 = vmatpush1.msra.mxu0 0.0
    %2463 = vmatprep.subr.mxu0 0.0
    %2464 = vmatpush1.msra.mxu0 0.0
    %2465 = vmatprep.subr.mxu0 0.0
    %2466 = vmatpush1.msra.mxu0 0.0
    %2467 = vmatprep.subr.mxu0 0.0
    %2468 = vmatpush1.msra.mxu0 0.0
    %2469 = vmatprep.subr.mxu0 0.0
    %2470 = vmatpush1.msra.mxu0 0.0
    %2471 = vmatprep.subr.mxu0 0.0
    %2472 = vmatpush1.msra.mxu0 0.0
    %2473 = vmatprep.subr.mxu0 0.0
    %2474 = vmatpush1.msra.mxu0 0.0
    %2475 = vmatprep.subr.mxu0 0.0
    %2476 = vmatpush1.msra.mxu0 0.0
    %2477 = vmatprep.subr.mxu0 0.0
    %2478 = vmatpush1.msra.mxu0 %v2444
    %2479 = vmatprep.subr.mxu0 0.0
    %2480 = vmatpush1.msra.mxu0 %v2443
    %2481 = vmatprep.subr.mxu0 0.0
    %2482 = vmatpush1.msra.mxu0 %v2442
    %2483 = vmatprep.subr.mxu0 0.0
    %2484 = vmatpush1.msra.mxu0 %v2441
    %2485 = vmatprep.subr.mxu0 0.0
    %2486 = vmatpush2.msra.mxu0 0.0
    %2487 = vmatprep.subr.mxu0 0.0
    %2488 = vmatpush2.msra.mxu0 0.0
    %2489 = vmatprep.subr.mxu0 0.0
    %2490 = vmatpush2.msra.mxu0 0.0
    %2491 = vmatprep.subr.mxu0 0.0
    %2492 = vmatpush2.msra.mxu0 0.0
    %2493 = vmatprep.subr.mxu0 0.0
    %2494 = vmatpush2.msra.mxu0 0.0
    %2495 = vmatprep.subr.mxu0 0.0
    %2496 = vmatpush2.msra.mxu0 0.0
    %2497 = vmatprep.subr.mxu0 0.0
    %2498 = vmatpush2.msra.mxu0 0.0
    %2499 = vmatprep.subr.mxu0 0.0
    %2500 = vmatpush2.msra.mxu0 0.0
    %2501 = vmatprep.subr.mxu0 0.0
    %2502 = vmatpush2.msra.mxu0 0.0
    %2503 = vmatprep.subr.mxu0 0.0
    %2504 = vmatpush2.msra.mxu0 0.0
    %2505 = vmatprep.subr.mxu0 0.0
    %2506 = vmatpush2.msra.mxu0 0.0
    %2507 = vmatprep.subr.mxu0 0.0
    %2508 = vmatpush2.msra.mxu0 0.0
    %2509 = vmatprep.subr.mxu0 0.0
    %2510 = vmatpush2.msra.mxu0 0.0
    %2511 = vmatprep.subr.mxu0 0.0
    %2512 = vmatpush2.msra.mxu0 0.0
    %2513 = vmatprep.subr.mxu0 0.0
    %2514 = vmatpush2.msra.mxu0 0.0
    %2515 = vmatprep.subr.mxu0 0.0
    %2516 = vmatpush2.msra.mxu0 0.0
    %2517 = vmatprep.mubr.f32.mxu0 0.0
    %2518 = vmatmul.mubr.f32.gmra.mxu0 %v2272
    %v2519 = vpop.f32.mrf.mxu0
    %v2520 = vadd.f32 %v2451, %v2519
    %v2521 = vpop.f32.mrf.mxu0
    %2522 = vmatprep.mubr.f32.mxu0 0.0
    %2523 = vmatmul.mubr.f32.gmra.mxu0 %v2275
    %v2524 = vpop.f32.mrf.mxu0
    %v2525 = vadd.f32 %v2451, %v2524
    %v2526 = vpop.f32.mrf.mxu0
    %2527 = vdwg.mxu0
    %v2528 = vsel %vm561, %v2432, 0.0
    %v2529 = vsel %vm561, %v2437, 0.0
    %v2531 = vsel %vm252, %v2344, 0
    %v2534 = vsel %vm252, %v2528, 0
    %2536 = vmatprep.subr.mxu0 0.0
    %2537 = vmatpush1.xpose.msra.mxu0 0.0
    %2538 = vmatprep.subr.mxu0 0.0
    %2539 = vmatpush1.xpose.msra.mxu0 0.0
    %2540 = vmatprep.subr.mxu0 0.0
    %2541 = vmatpush1.xpose.msra.mxu0 0.0
    %2542 = vmatprep.subr.mxu0 0.0
    %2543 = vmatpush1.xpose.msra.mxu0 0.0
    %2544 = vmatprep.subr.mxu0 0.0
    %2545 = vmatpush1.xpose.msra.mxu0 0.0
    %2546 = vmatprep.subr.mxu0 0.0
    %2547 = vmatpush1.xpose.msra.mxu0 0.0
    %2548 = vmatprep.subr.mxu0 0.0
    %2549 = vmatpush1.xpose.msra.mxu0 0.0
    %2550 = vmatprep.subr.mxu0 0.0
    %2551 = vmatpush1.xpose.msra.mxu0 0.0
    %2552 = vmatprep.subr.mxu0 0.0
    %2553 = vmatpush1.xpose.msra.mxu0 0.0
    %2554 = vmatprep.subr.mxu0 0.0
    %2555 = vmatpush1.xpose.msra.mxu0 0.0
    %2556 = vmatprep.subr.mxu0 0.0
    %2557 = vmatpush1.xpose.msra.mxu0 0.0
    %2558 = vmatprep.subr.mxu0 0.0
    %2559 = vmatpush1.xpose.msra.mxu0 0.0
    %2560 = vmatprep.subr.mxu0 0.0
    %2561 = vmatpush1.xpose.msra.mxu0 0.0
    %2562 = vmatprep.subr.mxu0 0.0
    %2563 = vmatpush1.xpose.msra.mxu0 0.0
    %2564 = vmatprep.subr.mxu0 0.0
    %2565 = vmatpush1.xpose.msra.mxu0 0.0
    %2566 = vmatprep.subr.mxu0 0.0
    %2567 = vmatpush1.xpose.msra.mxu0 %v2534
    %2568 = vmatprep.subr.mxu0 0.0
    %2569 = vmatpush2.xpose.msra.mxu0 0.0
    %2570 = vmatprep.subr.mxu0 0.0
    %2571 = vmatpush2.xpose.msra.mxu0 0.0
    %2572 = vmatprep.subr.mxu0 0.0
    %2573 = vmatpush2.xpose.msra.mxu0 0.0
    %2574 = vmatprep.subr.mxu0 0.0
    %2575 = vmatpush2.xpose.msra.mxu0 0.0
    %2576 = vmatprep.subr.mxu0 0.0
    %2577 = vmatpush2.xpose.msra.mxu0 0.0
    %2578 = vmatprep.subr.mxu0 0.0
    %2579 = vmatpush2.xpose.msra.mxu0 0.0
    %2580 = vmatprep.subr.mxu0 0.0
    %2581 = vmatpush2.xpose.msra.mxu0 0.0
    %2582 = vmatprep.subr.mxu0 0.0
    %2583 = vmatpush2.xpose.msra.mxu0 0.0
    %2584 = vmatprep.subr.mxu0 0.0
    %2585 = vmatpush2.xpose.msra.mxu0 0.0
    %2586 = vmatprep.subr.mxu0 0.0
    %2587 = vmatpush2.xpose.msra.mxu0 0.0
    %2588 = vmatprep.subr.mxu0 0.0
    %2589 = vmatpush2.xpose.msra.mxu0 0.0
    %2590 = vmatprep.subr.mxu0 0.0
    %2591 = vmatpush2.xpose.msra.mxu0 0.0
    %2592 = vmatprep.subr.mxu0 0.0
    %2593 = vmatpush2.xpose.msra.mxu0 0.0
    %2594 = vmatprep.subr.mxu0 0.0
    %2595 = vmatpush2.xpose.msra.mxu0 0.0
    %2596 = vmatprep.subr.mxu0 0.0
    %2597 = vmatpush2.xpose.msra.mxu0 0.0
    %2598 = vmatprep.subr.mxu0 0.0
    %2599 = vmatpush2.xpose.msra.mxu0 0.0
    %2600 = vmatprep.mubr.f32.mxu0 0.0
    %2601 = vmatmul.mubr.f32.gmra.mxu0 %v2531
    %v2602 = vpop.f32.mrf.mxu0
    %v2603 = vadd.f32 0.0, %v2602
    %v2604 = vpop.f32.mrf.mxu0
    %2605 = vdwg.mxu0
    %v2607 = vsel %vm252, %v2349, 0
    %v2610 = vsel %vm252, %v2529, 0
    %2612 = vmatprep.subr.mxu0 0.0
    %2613 = vmatpush1.xpose.msra.mxu0 0.0
    %2614 = vmatprep.subr.mxu0 0.0
    %2615 = vmatpush1.xpose.msra.mxu0 0.0
    %2616 = vmatprep.subr.mxu0 0.0
    %2617 = vmatpush1.xpose.msra.mxu0 0.0
    %2618 = vmatprep.subr.mxu0 0.0
    %2619 = vmatpush1.xpose.msra.mxu0 0.0
    %2620 = vmatprep.subr.mxu0 0.0
    %2621 = vmatpush1.xpose.msra.mxu0 0.0
    %2622 = vmatprep.subr.mxu0 0.0
    %2623 = vmatpush1.xpose.msra.mxu0 0.0
    %2624 = vmatprep.subr.mxu0 0.0
    %2625 = vmatpush1.xpose.msra.mxu0 0.0
    %2626 = vmatprep.subr.mxu0 0.0
    %2627 = vmatpush1.xpose.msra.mxu0 0.0
    %2628 = vmatprep.subr.mxu0 0.0
    %2629 = vmatpush1.xpose.msra.mxu0 0.0
    %2630 = vmatprep.subr.mxu0 0.0
    %2631 = vmatpush1.xpose.msra.mxu0 0.0
    %2632 = vmatprep.subr.mxu0 0.0
    %2633 = vmatpush1.xpose.msra.mxu0 0.0
    %2634 = vmatprep.subr.mxu0 0.0
    %2635 = vmatpush1.xpose.msra.mxu0 0.0
    %2636 = vmatprep.subr.mxu0 0.0
    %2637 = vmatpush1.xpose.msra.mxu0 0.0
    %2638 = vmatprep.subr.mxu0 0.0
    %2639 = vmatpush1.xpose.msra.mxu0 0.0
    %2640 = vmatprep.subr.mxu0 0.0
    %2641 = vmatpush1.xpose.msra.mxu0 0.0
    %2642 = vmatprep.subr.mxu0 0.0
    %2643 = vmatpush1.xpose.msra.mxu0 %v2610
    %2644 = vmatprep.subr.mxu0 0.0
    %2645 = vmatpush2.xpose.msra.mxu0 0.0
    %2646 = vmatprep.subr.mxu0 0.0
    %2647 = vmatpush2.xpose.msra.mxu0 0.0
    %2648 = vmatprep.subr.mxu0 0.0
    %2649 = vmatpush2.xpose.msra.mxu0 0.0
    %2650 = vmatprep.subr.mxu0 0.0
    %2651 = vmatpush2.xpose.msra.mxu0 0.0
    %2652 = vmatprep.subr.mxu0 0.0
    %2653 = vmatpush2.xpose.msra.mxu0 0.0
    %2654 = vmatprep.subr.mxu0 0.0
    %2655 = vmatpush2.xpose.msra.mxu0 0.0
    %2656 = vmatprep.subr.mxu0 0.0
    %2657 = vmatpush2.xpose.msra.mxu0 0.0
    %2658 = vmatprep.subr.mxu0 0.0
    %2659 = vmatpush2.xpose.msra.mxu0 0.0
    %2660 = vmatprep.subr.mxu0 0.0
    %2661 = vmatpush2.xpose.msra.mxu0 0.0
    %2662 = vmatprep.subr.mxu0 0.0
    %2663 = vmatpush2.xpose.msra.mxu0 0.0
    %2664 = vmatprep.subr.mxu0 0.0
    %2665 = vmatpush2.xpose.msra.mxu0 0.0
    %2666 = vmatprep.subr.mxu0 0.0
    %2667 = vmatpush2.xpose.msra.mxu0 0.0
    %2668 = vmatprep.subr.mxu0 0.0
    %2669 = vmatpush2.xpose.msra.mxu0 0.0
    %2670 = vmatprep.subr.mxu0 0.0
    %2671 = vmatpush2.xpose.msra.mxu0 0.0
    %2672 = vmatprep.subr.mxu0 0.0
    %2673 = vmatpush2.xpose.msra.mxu0 0.0
    %2674 = vmatprep.subr.mxu0 0.0
    %2675 = vmatpush2.xpose.msra.mxu0 0.0
    %2676 = vmatprep.mubr.f32.mxu0 0.0
    %2677 = vmatmul.mubr.f32.gmra.mxu0 %v2607
    %v2678 = vpop.f32.mrf.mxu0
    %v2679 = vadd.f32 0.0, %v2678
    %v2680 = vpop.f32.mrf.mxu0
    %2681 = vdwg.mxu0
    %v2682 = vsel %vm717, %v2432, 0.0
    %v2683 = vsel %vm717, %v2437, 0.0
    %v2685 = vsel %vm252, %v2682, 0
    %2687 = vmatprep.subr.mxu0 0.0
    %2688 = vmatpush1.xpose.msra.mxu0 0.0
    %2689 = vmatprep.subr.mxu0 0.0
    %2690 = vmatpush1.xpose.msra.mxu0 0.0
    %2691 = vmatprep.subr.mxu0 0.0
    %2692 = vmatpush1.xpose.msra.mxu0 0.0
    %2693 = vmatprep.subr.mxu0 0.0
    %2694 = vmatpush1.xpose.msra.mxu0 0.0
    %2695 = vmatprep.subr.mxu0 0.0
    %2696 = vmatpush1.xpose.msra.mxu0 0.0
    %2697 = vmatprep.subr.mxu0 0.0
    %2698 = vmatpush1.xpose.msra.mxu0 0.0
    %2699 = vmatprep.subr.mxu0 0.0
    %2700 = vmatpush1.xpose.msra.mxu0 0.0
    %2701 = vmatprep.subr.mxu0 0.0
    %2702 = vmatpush1.xpose.msra.mxu0 0.0
    %2703 = vmatprep.subr.mxu0 0.0
    %2704 = vmatpush1.xpose.msra.mxu0 0.0
    %2705 = vmatprep.subr.mxu0 0.0
    %2706 = vmatpush1.xpose.msra.mxu0 0.0
    %2707 = vmatprep.subr.mxu0 0.0
    %2708 = vmatpush1.xpose.msra.mxu0 0.0
    %2709 = vmatprep.subr.mxu0 0.0
    %2710 = vmatpush1.xpose.msra.mxu0 0.0
    %2711 = vmatprep.subr.mxu0 0.0
    %2712 = vmatpush1.xpose.msra.mxu0 0.0
    %2713 = vmatprep.subr.mxu0 0.0
    %2714 = vmatpush1.xpose.msra.mxu0 0.0
    %2715 = vmatprep.subr.mxu0 0.0
    %2716 = vmatpush1.xpose.msra.mxu0 0.0
    %2717 = vmatprep.subr.mxu0 0.0
    %2718 = vmatpush1.xpose.msra.mxu0 %v2685
    %2719 = vmatprep.subr.mxu0 0.0
    %2720 = vmatpush2.xpose.msra.mxu0 0.0
    %2721 = vmatprep.subr.mxu0 0.0
    %2722 = vmatpush2.xpose.msra.mxu0 0.0
    %2723 = vmatprep.subr.mxu0 0.0
    %2724 = vmatpush2.xpose.msra.mxu0 0.0
    %2725 = vmatprep.subr.mxu0 0.0
    %2726 = vmatpush2.xpose.msra.mxu0 0.0
    %2727 = vmatprep.subr.mxu0 0.0
    %2728 = vmatpush2.xpose.msra.mxu0 0.0
    %2729 = vmatprep.subr.mxu0 0.0
    %2730 = vmatpush2.xpose.msra.mxu0 0.0
    %2731 = vmatprep.subr.mxu0 0.0
    %2732 = vmatpush2.xpose.msra.mxu0 0.0
    %2733 = vmatprep.subr.mxu0 0.0
    %2734 = vmatpush2.xpose.msra.mxu0 0.0
    %2735 = vmatprep.subr.mxu0 0.0
    %2736 = vmatpush2.xpose.msra.mxu0 0.0
    %2737 = vmatprep.subr.mxu0 0.0
    %2738 = vmatpush2.xpose.msra.mxu0 0.0
    %2739 = vmatprep.subr.mxu0 0.0
    %2740 = vmatpush2.xpose.msra.mxu0 0.0
    %2741 = vmatprep.subr.mxu0 0.0
    %2742 = vmatpush2.xpose.msra.mxu0 0.0
    %2743 = vmatprep.subr.mxu0 0.0
    %2744 = vmatpush2.xpose.msra.mxu0 0.0
    %2745 = vmatprep.subr.mxu0 0.0
    %2746 = vmatpush2.xpose.msra.mxu0 0.0
    %2747 = vmatprep.subr.mxu0 0.0
    %2748 = vmatpush2.xpose.msra.mxu0 0.0
    %2749 = vmatprep.subr.mxu0 0.0
    %2750 = vmatpush2.xpose.msra.mxu0 0.0
    %2751 = vmatprep.mubr.f32.mxu0 0.0
    %2752 = vmatmul.mubr.f32.gmra.mxu0 %v2531
    %v2753 = vpop.f32.mrf.mxu0
    %v2754 = vadd.f32 0.0, %v2753
    %v2755 = vpop.f32.mrf.mxu0
    %2756 = vdwg.mxu0
    %v2758 = vsel %vm252, %v2683, 0
    %2760 = vmatprep.subr.mxu0 0.0
    %2761 = vmatpush1.xpose.msra.mxu0 0.0
    %2762 = vmatprep.subr.mxu0 0.0
    %2763 = vmatpush1.xpose.msra.mxu0 0.0
    %2764 = vmatprep.subr.mxu0 0.0
    %2765 = vmatpush1.xpose.msra.mxu0 0.0
    %2766 = vmatprep.subr.mxu0 0.0
    %2767 = vmatpush1.xpose.msra.mxu0 0.0
    %2768 = vmatprep.subr.mxu0 0.0
    %2769 = vmatpush1.xpose.msra.mxu0 0.0
    %2770 = vmatprep.subr.mxu0 0.0
    %2771 = vmatpush1.xpose.msra.mxu0 0.0
    %2772 = vmatprep.subr.mxu0 0.0
    %2773 = vmatpush1.xpose.msra.mxu0 0.0
    %2774 = vmatprep.subr.mxu0 0.0
    %2775 = vmatpush1.xpose.msra.mxu0 0.0
    %2776 = vmatprep.subr.mxu0 0.0
    %2777 = vmatpush1.xpose.msra.mxu0 0.0
    %2778 = vmatprep.subr.mxu0 0.0
    %2779 = vmatpush1.xpose.msra.mxu0 0.0
    %2780 = vmatprep.subr.mxu0 0.0
    %2781 = vmatpush1.xpose.msra.mxu0 0.0
    %2782 = vmatprep.subr.mxu0 0.0
    %2783 = vmatpush1.xpose.msra.mxu0 0.0
    %2784 = vmatprep.subr.mxu0 0.0
    %2785 = vmatpush1.xpose.msra.mxu0 0.0
    %2786 = vmatprep.subr.mxu0 0.0
    %2787 = vmatpush1.xpose.msra.mxu0 0.0
    %2788 = vmatprep.subr.mxu0 0.0
    %2789 = vmatpush1.xpose.msra.mxu0 0.0
    %2790 = vmatprep.subr.mxu0 0.0
    %2791 = vmatpush1.xpose.msra.mxu0 %v2758
    %2792 = vmatprep.subr.mxu0 0.0
    %2793 = vmatpush2.xpose.msra.mxu0 0.0
    %2794 = vmatprep.subr.mxu0 0.0
    %2795 = vmatpush2.xpose.msra.mxu0 0.0
    %2796 = vmatprep.subr.mxu0 0.0
    %2797 = vmatpush2.xpose.msra.mxu0 0.0
    %2798 = vmatprep.subr.mxu0 0.0
    %2799 = vmatpush2.xpose.msra.mxu0 0.0
    %2800 = vmatprep.subr.mxu0 0.0
    %2801 = vmatpush2.xpose.msra.mxu0 0.0
    %2802 = vmatprep.subr.mxu0 0.0
    %2803 = vmatpush2.xpose.msra.mxu0 0.0
    %2804 = vmatprep.subr.mxu0 0.0
    %2805 = vmatpush2.xpose.msra.mxu0 0.0
    %2806 = vmatprep.subr.mxu0 0.0
    %2807 = vmatpush2.xpose.msra.mxu0 0.0
    %2808 = vmatprep.subr.mxu0 0.0
    %2809 = vmatpush2.xpose.msra.mxu0 0.0
    %2810 = vmatprep.subr.mxu0 0.0
    %2811 = vmatpush2.xpose.msra.mxu0 0.0
    %2812 = vmatprep.subr.mxu0 0.0
    %2813 = vmatpush2.xpose.msra.mxu0 0.0
    %2814 = vmatprep.subr.mxu0 0.0
    %2815 = vmatpush2.xpose.msra.mxu0 0.0
    %2816 = vmatprep.subr.mxu0 0.0
    %2817 = vmatpush2.xpose.msra.mxu0 0.0
    %2818 = vmatprep.subr.mxu0 0.0
    %2819 = vmatpush2.xpose.msra.mxu0 0.0
    %2820 = vmatprep.subr.mxu0 0.0
    %2821 = vmatpush2.xpose.msra.mxu0 0.0
    %2822 = vmatprep.subr.mxu0 0.0
    %2823 = vmatpush2.xpose.msra.mxu0 0.0
    %2824 = vmatprep.mubr.f32.mxu0 0.0
    %2825 = vmatmul.mubr.f32.gmra.mxu0 %v2607
    %v2826 = vpop.f32.mrf.mxu0
    %v2827 = vadd.f32 0.0, %v2826
    %v2828 = vpop.f32.mrf.mxu0
    %2829 = vdwg.mxu0
    %v2830 = vsel %vm867, %v2432, 0.0
    %v2831 = vsel %vm867, %v2437, 0.0
    %v2833 = vsel %vm252, %v2830, 0
    %2835 = vmatprep.subr.mxu0 0.0
    %2836 = vmatpush1.xpose.msra.mxu0 0.0
    %2837 = vmatprep.subr.mxu0 0.0
    %2838 = vmatpush1.xpose.msra.mxu0 0.0
    %2839 = vmatprep.subr.mxu0 0.0
    %2840 = vmatpush1.xpose.msra.mxu0 0.0
    %2841 = vmatprep.subr.mxu0 0.0
    %2842 = vmatpush1.xpose.msra.mxu0 0.0
    %2843 = vmatprep.subr.mxu0 0.0
    %2844 = vmatpush1.xpose.msra.mxu0 0.0
    %2845 = vmatprep.subr.mxu0 0.0
    %2846 = vmatpush1.xpose.msra.mxu0 0.0
    %2847 = vmatprep.subr.mxu0 0.0
    %2848 = vmatpush1.xpose.msra.mxu0 0.0
    %2849 = vmatprep.subr.mxu0 0.0
    %2850 = vmatpush1.xpose.msra.mxu0 0.0
    %2851 = vmatprep.subr.mxu0 0.0
    %2852 = vmatpush1.xpose.msra.mxu0 0.0
    %2853 = vmatprep.subr.mxu0 0.0
    %2854 = vmatpush1.xpose.msra.mxu0 0.0
    %2855 = vmatprep.subr.mxu0 0.0
    %2856 = vmatpush1.xpose.msra.mxu0 0.0
    %2857 = vmatprep.subr.mxu0 0.0
    %2858 = vmatpush1.xpose.msra.mxu0 0.0
    %2859 = vmatprep.subr.mxu0 0.0
    %2860 = vmatpush1.xpose.msra.mxu0 0.0
    %2861 = vmatprep.subr.mxu0 0.0
    %2862 = vmatpush1.xpose.msra.mxu0 0.0
    %2863 = vmatprep.subr.mxu0 0.0
    %2864 = vmatpush1.xpose.msra.mxu0 0.0
    %2865 = vmatprep.subr.mxu0 0.0
    %2866 = vmatpush1.xpose.msra.mxu0 %v2833
    %2867 = vmatprep.subr.mxu0 0.0
    %2868 = vmatpush2.xpose.msra.mxu0 0.0
    %2869 = vmatprep.subr.mxu0 0.0
    %2870 = vmatpush2.xpose.msra.mxu0 0.0
    %2871 = vmatprep.subr.mxu0 0.0
    %2872 = vmatpush2.xpose.msra.mxu0 0.0
    %2873 = vmatprep.subr.mxu0 0.0
    %2874 = vmatpush2.xpose.msra.mxu0 0.0
    %2875 = vmatprep.subr.mxu0 0.0
    %2876 = vmatpush2.xpose.msra.mxu0 0.0
    %2877 = vmatprep.subr.mxu0 0.0
    %2878 = vmatpush2.xpose.msra.mxu0 0.0
    %2879 = vmatprep.subr.mxu0 0.0
    %2880 = vmatpush2.xpose.msra.mxu0 0.0
    %2881 = vmatprep.subr.mxu0 0.0
    %2882 = vmatpush2.xpose.msra.mxu0 0.0
    %2883 = vmatprep.subr.mxu0 0.0
    %2884 = vmatpush2.xpose.msra.mxu0 0.0
    %2885 = vmatprep.subr.mxu0 0.0
    %2886 = vmatpush2.xpose.msra.mxu0 0.0
    %2887 = vmatprep.subr.mxu0 0.0
    %2888 = vmatpush2.xpose.msra.mxu0 0.0
    %2889 = vmatprep.subr.mxu0 0.0
    %2890 = vmatpush2.xpose.msra.mxu0 0.0
    %2891 = vmatprep.subr.mxu0 0.0
    %2892 = vmatpush2.xpose.msra.mxu0 0.0
    %2893 = vmatprep.subr.mxu0 0.0
    %2894 = vmatpush2.xpose.msra.mxu0 0.0
    %2895 = vmatprep.subr.mxu0 0.0
    %2896 = vmatpush2.xpose.msra.mxu0 0.0
    %2897 = vmatprep.subr.mxu0 0.0
    %2898 = vmatpush2.xpose.msra.mxu0 0.0
    %2899 = vmatprep.mubr.f32.mxu0 0.0
    %2900 = vmatmul.mubr.f32.gmra.mxu0 %v2531
    %v2901 = vpop.f32.mrf.mxu0
    %v2902 = vadd.f32 0.0, %v2901
    %v2903 = vpop.f32.mrf.mxu0
    %2904 = vdwg.mxu0
    %v2906 = vsel %vm252, %v2831, 0
    %2908 = vmatprep.subr.mxu0 0.0
    %2909 = vmatpush1.xpose.msra.mxu0 0.0
    %2910 = vmatprep.subr.mxu0 0.0
    %2911 = vmatpush1.xpose.msra.mxu0 0.0
    %2912 = vmatprep.subr.mxu0 0.0
    %2913 = vmatpush1.xpose.msra.mxu0 0.0
    %2914 = vmatprep.subr.mxu0 0.0
    %2915 = vmatpush1.xpose.msra.mxu0 0.0
    %2916 = vmatprep.subr.mxu0 0.0
    %2917 = vmatpush1.xpose.msra.mxu0 0.0
    %2918 = vmatprep.subr.mxu0 0.0
    %2919 = vmatpush1.xpose.msra.mxu0 0.0
    %2920 = vmatprep.subr.mxu0 0.0
    %2921 = vmatpush1.xpose.msra.mxu0 0.0
    %2922 = vmatprep.subr.mxu0 0.0
    %2923 = vmatpush1.xpose.msra.mxu0 0.0
    %2924 = vmatprep.subr.mxu0 0.0
    %2925 = vmatpush1.xpose.msra.mxu0 0.0
    %2926 = vmatprep.subr.mxu0 0.0
    %2927 = vmatpush1.xpose.msra.mxu0 0.0
    %2928 = vmatprep.subr.mxu0 0.0
    %2929 = vmatpush1.xpose.msra.mxu0 0.0
    %2930 = vmatprep.subr.mxu0 0.0
    %2931 = vmatpush1.xpose.msra.mxu0 0.0
    %2932 = vmatprep.subr.mxu0 0.0
    %2933 = vmatpush1.xpose.msra.mxu0 0.0
    %2934 = vmatprep.subr.mxu0 0.0
    %2935 = vmatpush1.xpose.msra.mxu0 0.0
    %2936 = vmatprep.subr.mxu0 0.0
    %2937 = vmatpush1.xpose.msra.mxu0 0.0
    %2938 = vmatprep.subr.mxu0 0.0
    %2939 = vmatpush1.xpose.msra.mxu0 %v2906
    %2940 = vmatprep.subr.mxu0 0.0
    %2941 = vmatpush2.xpose.msra.mxu0 0.0
    %2942 = vmatprep.subr.mxu0 0.0
    %2943 = vmatpush2.xpose.msra.mxu0 0.0
    %2944 = vmatprep.subr.mxu0 0.0
    %2945 = vmatpush2.xpose.msra.mxu0 0.0
    %2946 = vmatprep.subr.mxu0 0.0
    %2947 = vmatpush2.xpose.msra.mxu0 0.0
    %2948 = vmatprep.subr.mxu0 0.0
    %2949 = vmatpush2.xpose.msra.mxu0 0.0
    %2950 = vmatprep.subr.mxu0 0.0
    %2951 = vmatpush2.xpose.msra.mxu0 0.0
    %2952 = vmatprep.subr.mxu0 0.0
    %2953 = vmatpush2.xpose.msra.mxu0 0.0
    %2954 = vmatprep.subr.mxu0 0.0
    %2955 = vmatpush2.xpose.msra.mxu0 0.0
    %2956 = vmatprep.subr.mxu0 0.0
    %2957 = vmatpush2.xpose.msra.mxu0 0.0
    %2958 = vmatprep.subr.mxu0 0.0
    %2959 = vmatpush2.xpose.msra.mxu0 0.0
    %2960 = vmatprep.subr.mxu0 0.0
    %2961 = vmatpush2.xpose.msra.mxu0 0.0
    %2962 = vmatprep.subr.mxu0 0.0
    %2963 = vmatpush2.xpose.msra.mxu0 0.0
    %2964 = vmatprep.subr.mxu0 0.0
    %2965 = vmatpush2.xpose.msra.mxu0 0.0
    %2966 = vmatprep.subr.mxu0 0.0
    %2967 = vmatpush2.xpose.msra.mxu0 0.0
    %2968 = vmatprep.subr.mxu0 0.0
    %2969 = vmatpush2.xpose.msra.mxu0 0.0
    %2970 = vmatprep.subr.mxu0 0.0
    %2971 = vmatpush2.xpose.msra.mxu0 0.0
    %2972 = vmatprep.mubr.f32.mxu0 0.0
    %2973 = vmatmul.mubr.f32.gmra.mxu0 %v2607
    %v2974 = vpop.f32.mrf.mxu0
    %v2975 = vadd.f32 0.0, %v2974
    %v2976 = vpop.f32.mrf.mxu0
    %2977 = vdwg.mxu0
    %v2978 = vsel %vm1017, %v2432, 0.0
    %v2979 = vsel %vm1017, %v2437, 0.0
    %v2981 = vsel %vm252, %v2978, 0
    %2983 = vmatprep.subr.mxu0 0.0
    %2984 = vmatpush1.xpose.msra.mxu0 0.0
    %2985 = vmatprep.subr.mxu0 0.0
    %2986 = vmatpush1.xpose.msra.mxu0 0.0
    %2987 = vmatprep.subr.mxu0 0.0
    %2988 = vmatpush1.xpose.msra.mxu0 0.0
    %2989 = vmatprep.subr.mxu0 0.0
    %2990 = vmatpush1.xpose.msra.mxu0 0.0
    %2991 = vmatprep.subr.mxu0 0.0
    %2992 = vmatpush1.xpose.msra.mxu0 0.0
    %2993 = vmatprep.subr.mxu0 0.0
    %2994 = vmatpush1.xpose.msra.mxu0 0.0
    %2995 = vmatprep.subr.mxu0 0.0
    %2996 = vmatpush1.xpose.msra.mxu0 0.0
    %2997 = vmatprep.subr.mxu0 0.0
    %2998 = vmatpush1.xpose.msra.mxu0 0.0
    %2999 = vmatprep.subr.mxu0 0.0
    %3000 = vmatpush1.xpose.msra.mxu0 0.0
    %3001 = vmatprep.subr.mxu0 0.0
    %3002 = vmatpush1.xpose.msra.mxu0 0.0
    %3003 = vmatprep.subr.mxu0 0.0
    %3004 = vmatpush1.xpose.msra.mxu0 0.0
    %3005 = vmatprep.subr.mxu0 0.0
    %3006 = vmatpush1.xpose.msra.mxu0 0.0
    %3007 = vmatprep.subr.mxu0 0.0
    %3008 = vmatpush1.xpose.msra.mxu0 0.0
    %3009 = vmatprep.subr.mxu0 0.0
    %3010 = vmatpush1.xpose.msra.mxu0 0.0
    %3011 = vmatprep.subr.mxu0 0.0
    %3012 = vmatpush1.xpose.msra.mxu0 0.0
    %3013 = vmatprep.subr.mxu0 0.0
    %3014 = vmatpush1.xpose.msra.mxu0 %v2981
    %3015 = vmatprep.subr.mxu0 0.0
    %3016 = vmatpush2.xpose.msra.mxu0 0.0
    %3017 = vmatprep.subr.mxu0 0.0
    %3018 = vmatpush2.xpose.msra.mxu0 0.0
    %3019 = vmatprep.subr.mxu0 0.0
    %3020 = vmatpush2.xpose.msra.mxu0 0.0
    %3021 = vmatprep.subr.mxu0 0.0
    %3022 = vmatpush2.xpose.msra.mxu0 0.0
    %3023 = vmatprep.subr.mxu0 0.0
    %3024 = vmatpush2.xpose.msra.mxu0 0.0
    %3025 = vmatprep.subr.mxu0 0.0
    %3026 = vmatpush2.xpose.msra.mxu0 0.0
    %3027 = vmatprep.subr.mxu0 0.0
    %3028 = vmatpush2.xpose.msra.mxu0 0.0
    %3029 = vmatprep.subr.mxu0 0.0
    %3030 = vmatpush2.xpose.msra.mxu0 0.0
    %3031 = vmatprep.subr.mxu0 0.0
    %3032 = vmatpush2.xpose.msra.mxu0 0.0
    %3033 = vmatprep.subr.mxu0 0.0
    %3034 = vmatpush2.xpose.msra.mxu0 0.0
    %3035 = vmatprep.subr.mxu0 0.0
    %3036 = vmatpush2.xpose.msra.mxu0 0.0
    %3037 = vmatprep.subr.mxu0 0.0
    %3038 = vmatpush2.xpose.msra.mxu0 0.0
    %3039 = vmatprep.subr.mxu0 0.0
    %3040 = vmatpush2.xpose.msra.mxu0 0.0
    %3041 = vmatprep.subr.mxu0 0.0
    %3042 = vmatpush2.xpose.msra.mxu0 0.0
    %3043 = vmatprep.subr.mxu0 0.0
    %3044 = vmatpush2.xpose.msra.mxu0 0.0
    %3045 = vmatprep.subr.mxu0 0.0
    %3046 = vmatpush2.xpose.msra.mxu0 0.0
    %3047 = vmatprep.mubr.f32.mxu0 0.0
    %3048 = vmatmul.mubr.f32.gmra.mxu0 %v2531
    %v3049 = vpop.f32.mrf.mxu0
    %v3050 = vadd.f32 0.0, %v3049
    %v3051 = vpop.f32.mrf.mxu0
    %3052 = vdwg.mxu0
    %v3054 = vsel %vm252, %v2979, 0
    %3056 = vmatprep.subr.mxu0 0.0
    %3057 = vmatpush1.xpose.msra.mxu0 0.0
    %3058 = vmatprep.subr.mxu0 0.0
    %3059 = vmatpush1.xpose.msra.mxu0 0.0
    %3060 = vmatprep.subr.mxu0 0.0
    %3061 = vmatpush1.xpose.msra.mxu0 0.0
    %3062 = vmatprep.subr.mxu0 0.0
    %3063 = vmatpush1.xpose.msra.mxu0 0.0
    %3064 = vmatprep.subr.mxu0 0.0
    %3065 = vmatpush1.xpose.msra.mxu0 0.0
    %3066 = vmatprep.subr.mxu0 0.0
    %3067 = vmatpush1.xpose.msra.mxu0 0.0
    %3068 = vmatprep.subr.mxu0 0.0
    %3069 = vmatpush1.xpose.msra.mxu0 0.0
    %3070 = vmatprep.subr.mxu0 0.0
    %3071 = vmatpush1.xpose.msra.mxu0 0.0
    %3072 = vmatprep.subr.mxu0 0.0
    %3073 = vmatpush1.xpose.msra.mxu0 0.0
    %3074 = vmatprep.subr.mxu0 0.0
    %3075 = vmatpush1.xpose.msra.mxu0 0.0
    %3076 = vmatprep.subr.mxu0 0.0
    %3077 = vmatpush1.xpose.msra.mxu0 0.0
    %3078 = vmatprep.subr.mxu0 0.0
    %3079 = vmatpush1.xpose.msra.mxu0 0.0
    %3080 = vmatprep.subr.mxu0 0.0
    %3081 = vmatpush1.xpose.msra.mxu0 0.0
    %3082 = vmatprep.subr.mxu0 0.0
    %3083 = vmatpush1.xpose.msra.mxu0 0.0
    %3084 = vmatprep.subr.mxu0 0.0
    %3085 = vmatpush1.xpose.msra.mxu0 0.0
    %3086 = vmatprep.subr.mxu0 0.0
    %3087 = vmatpush1.xpose.msra.mxu0 %v3054
    %3088 = vmatprep.subr.mxu0 0.0
    %3089 = vmatpush2.xpose.msra.mxu0 0.0
    %3090 = vmatprep.subr.mxu0 0.0
    %3091 = vmatpush2.xpose.msra.mxu0 0.0
    %3092 = vmatprep.subr.mxu0 0.0
    %3093 = vmatpush2.xpose.msra.mxu0 0.0
    %3094 = vmatprep.subr.mxu0 0.0
    %3095 = vmatpush2.xpose.msra.mxu0 0.0
    %3096 = vmatprep.subr.mxu0 0.0
    %3097 = vmatpush2.xpose.msra.mxu0 0.0
    %3098 = vmatprep.subr.mxu0 0.0
    %3099 = vmatpush2.xpose.msra.mxu0 0.0
    %3100 = vmatprep.subr.mxu0 0.0
    %3101 = vmatpush2.xpose.msra.mxu0 0.0
    %3102 = vmatprep.subr.mxu0 0.0
    %3103 = vmatpush2.xpose.msra.mxu0 0.0
    %3104 = vmatprep.subr.mxu0 0.0
    %3105 = vmatpush2.xpose.msra.mxu0 0.0
    %3106 = vmatprep.subr.mxu0 0.0
    %3107 = vmatpush2.xpose.msra.mxu0 0.0
    %3108 = vmatprep.subr.mxu0 0.0
    %3109 = vmatpush2.xpose.msra.mxu0 0.0
    %3110 = vmatprep.subr.mxu0 0.0
    %3111 = vmatpush2.xpose.msra.mxu0 0.0
    %3112 = vmatprep.subr.mxu0 0.0
    %3113 = vmatpush2.xpose.msra.mxu0 0.0
    %3114 = vmatprep.subr.mxu0 0.0
    %3115 = vmatpush2.xpose.msra.mxu0 0.0
    %3116 = vmatprep.subr.mxu0 0.0
    %3117 = vmatpush2.xpose.msra.mxu0 0.0
    %3118 = vmatprep.subr.mxu0 0.0
    %3119 = vmatpush2.xpose.msra.mxu0 0.0
    %3120 = vmatprep.mubr.f32.mxu0 0.0
    %3121 = vmatmul.mubr.f32.gmra.mxu0 %v2607
    %v3122 = vpop.f32.mrf.mxu0
    %v3123 = vadd.f32 0.0, %v3122
    %v3124 = vpop.f32.mrf.mxu0
    %3125 = vdwg.mxu0
    %v3126 = vmul.f32 %v2603, 0.35355338
    %v3127 = vmul.f32 %v2679, 0.35355338
    %v3128 = vmul.f32 %v2754, 0.35355338
    %v3129 = vmul.f32 %v2827, 0.35355338
    %v3130 = vmul.f32 %v2902, 0.35355338
    %v3131 = vmul.f32 %v2975, 0.35355338
    %v3132 = vmul.f32 %v3050, 0.35355338
    %v3133 = vmul.f32 %v3123, 0.35355338
    %v3134 = vadd.f32 %v3126, %v223
    %v3135 = vadd.f32 %v3127, %v224
    %v3136 = vadd.f32 %v3128, %v223
    %v3137 = vadd.f32 %v3129, %v224
    %v3138 = vadd.f32 %v3130, %v223
    %v3139 = vadd.f32 %v3131, %v224
    %v3140 = vadd.f32 %v3132, %v223
    %v3141 = vadd.f32 %v3133, %v224
    %v3142 = vsel %vm1182, %v3134, -inf
    %3143 = vmax.xlane.f32.xlu0 %v3142
    %v3144 = vpop.xlane.xlu0 %3143
    %v3145 = vsel %vm1182, %v3135, -inf
    %3146 = vmax.xlane.f32.xlu0 %v3145
    %v3147 = vpop.xlane.xlu0 %3146
    %v3148 = vsel %vm1182, %v3136, -inf
    %3149 = vmax.xlane.f32.xlu0 %v3148
    %v3150 = vpop.xlane.xlu0 %3149
    %v3151 = vsel %vm1182, %v3137, -inf
    %3152 = vmax.xlane.f32.xlu0 %v3151
    %v3153 = vpop.xlane.xlu0 %3152
    %v3154 = vsel %vm1182, %v3138, -inf
    %3155 = vmax.xlane.f32.xlu0 %v3154
    %v3156 = vpop.xlane.xlu0 %3155
    %v3157 = vsel %vm1182, %v3139, -inf
    %3158 = vmax.xlane.f32.xlu0 %v3157
    %v3159 = vpop.xlane.xlu0 %3158
    %v3160 = vsel %vm1182, %v3140, -inf
    %3161 = vmax.xlane.f32.xlu0 %v3160
    %v3162 = vpop.xlane.xlu0 %3161
    %v3163 = vsel %vm1182, %v3141, -inf
    %3164 = vmax.xlane.f32.xlu0 %v3163
    %v3165 = vpop.xlane.xlu0 %3164
    %v3166 = vsub.f32 %v3134, %v3144
    %v3167 = vsub.f32 %v3135, %v3147
    %v3168 = vsub.f32 %v3136, %v3150
    %v3169 = vsub.f32 %v3137, %v3153
    %v3170 = vsub.f32 %v3138, %v3156
    %v3171 = vsub.f32 %v3139, %v3159
    %v3172 = vsub.f32 %v3140, %v3162
    %v3173 = vsub.f32 %v3141, %v3165
    %v3174 = vmul.f32 %v3166, 1.442695
    %v3175 = vpow.pop %v3174
    %v3176 = vmul.f32 %v3167, 1.442695
    %v3177 = vpow.pop %v3176
    %v3178 = vmul.f32 %v3168, 1.442695
    %v3179 = vpow.pop %v3178
    %v3180 = vmul.f32 %v3169, 1.442695
    %v3181 = vpow.pop %v3180
    %v3182 = vmul.f32 %v3170, 1.442695
    %v3183 = vpow.pop %v3182
    %v3184 = vmul.f32 %v3171, 1.442695
    %v3185 = vpow.pop %v3184
    %v3186 = vmul.f32 %v3172, 1.442695
    %v3187 = vpow.pop %v3186
    %v3188 = vmul.f32 %v3173, 1.442695
    %v3189 = vpow.pop %v3188
    %v3190 = vsel %vm1182, %v3175, 0.0
    %3191 = vadd.xlane.f32.xlu0 %v3190
    %v3192 = vpop.xlane.xlu0 %3191
    %v3193 = vsel %vm1182, %v3177, 0.0
    %3194 = vadd.xlane.f32.xlu0 %v3193
    %v3195 = vpop.xlane.xlu0 %3194
    %v3196 = vsel %vm1182, %v3179, 0.0
    %3197 = vadd.xlane.f32.xlu0 %v3196
    %v3198 = vpop.xlane.xlu0 %3197
    %v3199 = vsel %vm1182, %v3181, 0.0
    %3200 = vadd.xlane.f32.xlu0 %v3199
    %v3201 = vpop.xlane.xlu0 %3200
    %v3202 = vsel %vm1182, %v3183, 0.0
    %3203 = vadd.xlane.f32.xlu0 %v3202
    %v3204 = vpop.xlane.xlu0 %3203
    %v3205 = vsel %vm1182, %v3185, 0.0
    %3206 = vadd.xlane.f32.xlu0 %v3205
    %v3207 = vpop.xlane.xlu0 %3206
    %v3208 = vsel %vm1182, %v3187, 0.0
    %3209 = vadd.xlane.f32.xlu0 %v3208
    %v3210 = vpop.xlane.xlu0 %3209
    %v3211 = vsel %vm1182, %v3189, 0.0
    %3212 = vadd.xlane.f32.xlu0 %v3211
    %v3213 = vpop.xlane.xlu0 %3212
    %v3214 = vrcp.pop %v3192
    %v3215 = vmul.f32 %v3175, %v3214
    %v3216 = vrcp.pop %v3195
    %v3217 = vmul.f32 %v3177, %v3216
    %v3218 = vrcp.pop %v3198
    %v3219 = vmul.f32 %v3179, %v3218
    %v3220 = vrcp.pop %v3201
    %v3221 = vmul.f32 %v3181, %v3220
    %v3222 = vrcp.pop %v3204
    %v3223 = vmul.f32 %v3183, %v3222
    %v3224 = vrcp.pop %v3207
    %v3225 = vmul.f32 %v3185, %v3224
    %v3226 = vrcp.pop %v3210
    %v3227 = vmul.f32 %v3187, %v3226
    %v3228 = vrcp.pop %v3213
    %v3229 = vmul.f32 %v3189, %v3228
    %v3230 = vsel %vm561, %v2520, 0.0
    %v3231 = vsel %vm561, %v2525, 0.0
    %v3232 = vsel %vm717, %v2520, 0.0
    %v3233 = vsel %vm717, %v2525, 0.0
    %v3235 = vsel %vm1182, %v3219, 0
    %3237 = vmatprep.subr.mxu0 0.0
    %3238 = vmatpush1.msra.mxu0 0.0
    %3239 = vmatprep.subr.mxu0 0.0
    %3240 = vmatpush1.msra.mxu0 0.0
    %3241 = vmatprep.subr.mxu0 0.0
    %3242 = vmatpush1.msra.mxu0 0.0
    %3243 = vmatprep.subr.mxu0 0.0
    %3244 = vmatpush1.msra.mxu0 0.0
    %3245 = vmatprep.subr.mxu0 0.0
    %3246 = vmatpush1.msra.mxu0 0.0
    %3247 = vmatprep.subr.mxu0 0.0
    %3248 = vmatpush1.msra.mxu0 0.0
    %3249 = vmatprep.subr.mxu0 0.0
    %3250 = vmatpush1.msra.mxu0 0.0
    %3251 = vmatprep.subr.mxu0 0.0
    %3252 = vmatpush1.msra.mxu0 0.0
    %3253 = vmatprep.subr.mxu0 0.0
    %3254 = vmatpush1.msra.mxu0 0.0
    %3255 = vmatprep.subr.mxu0 0.0
    %3256 = vmatpush1.msra.mxu0 0.0
    %3257 = vmatprep.subr.mxu0 0.0
    %3258 = vmatpush1.msra.mxu0 0.0
    %3259 = vmatprep.subr.mxu0 0.0
    %3260 = vmatpush1.msra.mxu0 0.0
    %3261 = vmatprep.subr.mxu0 0.0
    %3262 = vmatpush1.msra.mxu0 0.0
    %3263 = vmatprep.subr.mxu0 0.0
    %3264 = vmatpush1.msra.mxu0 0.0
    %3265 = vmatprep.subr.mxu0 0.0
    %3266 = vmatpush1.msra.mxu0 0.0
    %3267 = vmatprep.subr.mxu0 0.0
    %3268 = vmatpush1.msra.mxu0 %v3232
    %3269 = vmatprep.subr.mxu0 0.0
    %3270 = vmatpush2.msra.mxu0 0.0
    %3271 = vmatprep.subr.mxu0 0.0
    %3272 = vmatpush2.msra.mxu0 0.0
    %3273 = vmatprep.subr.mxu0 0.0
    %3274 = vmatpush2.msra.mxu0 0.0
    %3275 = vmatprep.subr.mxu0 0.0
    %3276 = vmatpush2.msra.mxu0 0.0
    %3277 = vmatprep.subr.mxu0 0.0
    %3278 = vmatpush2.msra.mxu0 0.0
    %3279 = vmatprep.subr.mxu0 0.0
    %3280 = vmatpush2.msra.mxu0 0.0
    %3281 = vmatprep.subr.mxu0 0.0
    %3282 = vmatpush2.msra.mxu0 0.0
    %3283 = vmatprep.subr.mxu0 0.0
    %3284 = vmatpush2.msra.mxu0 0.0
    %3285 = vmatprep.subr.mxu0 0.0
    %3286 = vmatpush2.msra.mxu0 0.0
    %3287 = vmatprep.subr.mxu0 0.0
    %3288 = vmatpush2.msra.mxu0 0.0
    %3289 = vmatprep.subr.mxu0 0.0
    %3290 = vmatpush2.msra.mxu0 0.0
    %3291 = vmatprep.subr.mxu0 0.0
    %3292 = vmatpush2.msra.mxu0 0.0
    %3293 = vmatprep.subr.mxu0 0.0
    %3294 = vmatpush2.msra.mxu0 0.0
    %3295 = vmatprep.subr.mxu0 0.0
    %3296 = vmatpush2.msra.mxu0 0.0
    %3297 = vmatprep.subr.mxu0 0.0
    %3298 = vmatpush2.msra.mxu0 0.0
    %3299 = vmatprep.subr.mxu0 0.0
    %3300 = vmatpush2.msra.mxu0 0.0
    %3301 = vmatprep.mubr.f32.mxu0 0.0
    %3302 = vmatmul.mubr.f32.gmra.mxu0 %v3235
    %v3303 = vpop.f32.mrf.mxu0
    %v3304 = vadd.f32 0.0, %v3303
    %v3305 = vpop.f32.mrf.mxu0
    %3306 = vdwg.mxu0
    %v3308 = vsel %vm1182, %v3221, 0
    %3310 = vmatprep.subr.mxu0 0.0
    %3311 = vmatpush1.msra.mxu0 0.0
    %3312 = vmatprep.subr.mxu0 0.0
    %3313 = vmatpush1.msra.mxu0 0.0
    %3314 = vmatprep.subr.mxu0 0.0
    %3315 = vmatpush1.msra.mxu0 0.0
    %3316 = vmatprep.subr.mxu0 0.0
    %3317 = vmatpush1.msra.mxu0 0.0
    %3318 = vmatprep.subr.mxu0 0.0
    %3319 = vmatpush1.msra.mxu0 0.0
    %3320 = vmatprep.subr.mxu0 0.0
    %3321 = vmatpush1.msra.mxu0 0.0
    %3322 = vmatprep.subr.mxu0 0.0
    %3323 = vmatpush1.msra.mxu0 0.0
    %3324 = vmatprep.subr.mxu0 0.0
    %3325 = vmatpush1.msra.mxu0 0.0
    %3326 = vmatprep.subr.mxu0 0.0
    %3327 = vmatpush1.msra.mxu0 0.0
    %3328 = vmatprep.subr.mxu0 0.0
    %3329 = vmatpush1.msra.mxu0 0.0
    %3330 = vmatprep.subr.mxu0 0.0
    %3331 = vmatpush1.msra.mxu0 0.0
    %3332 = vmatprep.subr.mxu0 0.0
    %3333 = vmatpush1.msra.mxu0 0.0
    %3334 = vmatprep.subr.mxu0 0.0
    %3335 = vmatpush1.msra.mxu0 0.0
    %3336 = vmatprep.subr.mxu0 0.0
    %3337 = vmatpush1.msra.mxu0 0.0
    %3338 = vmatprep.subr.mxu0 0.0
    %3339 = vmatpush1.msra.mxu0 0.0
    %3340 = vmatprep.subr.mxu0 0.0
    %3341 = vmatpush1.msra.mxu0 %v3233
    %3342 = vmatprep.subr.mxu0 0.0
    %3343 = vmatpush2.msra.mxu0 0.0
    %3344 = vmatprep.subr.mxu0 0.0
    %3345 = vmatpush2.msra.mxu0 0.0
    %3346 = vmatprep.subr.mxu0 0.0
    %3347 = vmatpush2.msra.mxu0 0.0
    %3348 = vmatprep.subr.mxu0 0.0
    %3349 = vmatpush2.msra.mxu0 0.0
    %3350 = vmatprep.subr.mxu0 0.0
    %3351 = vmatpush2.msra.mxu0 0.0
    %3352 = vmatprep.subr.mxu0 0.0
    %3353 = vmatpush2.msra.mxu0 0.0
    %3354 = vmatprep.subr.mxu0 0.0
    %3355 = vmatpush2.msra.mxu0 0.0
    %3356 = vmatprep.subr.mxu0 0.0
    %3357 = vmatpush2.msra.mxu0 0.0
    %3358 = vmatprep.subr.mxu0 0.0
    %3359 = vmatpush2.msra.mxu0 0.0
    %3360 = vmatprep.subr.mxu0 0.0
    %3361 = vmatpush2.msra.mxu0 0.0
    %3362 = vmatprep.subr.mxu0 0.0
    %3363 = vmatpush2.msra.mxu0 0.0
    %3364 = vmatprep.subr.mxu0 0.0
    %3365 = vmatpush2.msra.mxu0 0.0
    %3366 = vmatprep.subr.mxu0 0.0
    %3367 = vmatpush2.msra.mxu0 0.0
    %3368 = vmatprep.subr.mxu0 0.0
    %3369 = vmatpush2.msra.mxu0 0.0
    %3370 = vmatprep.subr.mxu0 0.0
    %3371 = vmatpush2.msra.mxu0 0.0
    %3372 = vmatprep.subr.mxu0 0.0
    %3373 = vmatpush2.msra.mxu0 0.0
    %3374 = vmatprep.mubr.f32.mxu0 0.0
    %3375 = vmatmul.mubr.f32.gmra.mxu0 %v3308
    %v3376 = vpop.f32.mrf.mxu0
    %v3377 = vadd.f32 0.0, %v3376
    %v3378 = vpop.f32.mrf.mxu0
    %3379 = vdwg.mxu0
    %v3381 = vsel %vm1182, %v3215, 0
    %3383 = vmatprep.subr.mxu0 0.0
    %3384 = vmatpush1.msra.mxu0 0.0
    %3385 = vmatprep.subr.mxu0 0.0
    %3386 = vmatpush1.msra.mxu0 0.0
    %3387 = vmatprep.subr.mxu0 0.0
    %3388 = vmatpush1.msra.mxu0 0.0
    %3389 = vmatprep.subr.mxu0 0.0
    %3390 = vmatpush1.msra.mxu0 0.0
    %3391 = vmatprep.subr.mxu0 0.0
    %3392 = vmatpush1.msra.mxu0 0.0
    %3393 = vmatprep.subr.mxu0 0.0
    %3394 = vmatpush1.msra.mxu0 0.0
    %3395 = vmatprep.subr.mxu0 0.0
    %3396 = vmatpush1.msra.mxu0 0.0
    %3397 = vmatprep.subr.mxu0 0.0
    %3398 = vmatpush1.msra.mxu0 0.0
    %3399 = vmatprep.subr.mxu0 0.0
    %3400 = vmatpush1.msra.mxu0 0.0
    %3401 = vmatprep.subr.mxu0 0.0
    %3402 = vmatpush1.msra.mxu0 0.0
    %3403 = vmatprep.subr.mxu0 0.0
    %3404 = vmatpush1.msra.mxu0 0.0
    %3405 = vmatprep.subr.mxu0 0.0
    %3406 = vmatpush1.msra.mxu0 0.0
    %3407 = vmatprep.subr.mxu0 0.0
    %3408 = vmatpush1.msra.mxu0 0.0
    %3409 = vmatprep.subr.mxu0 0.0
    %3410 = vmatpush1.msra.mxu0 0.0
    %3411 = vmatprep.subr.mxu0 0.0
    %3412 = vmatpush1.msra.mxu0 0.0
    %3413 = vmatprep.subr.mxu0 0.0
    %3414 = vmatpush1.msra.mxu0 %v3230
    %3415 = vmatprep.subr.mxu0 0.0
    %3416 = vmatpush2.msra.mxu0 0.0
    %3417 = vmatprep.subr.mxu0 0.0
    %3418 = vmatpush2.msra.mxu0 0.0
    %3419 = vmatprep.subr.mxu0 0.0
    %3420 = vmatpush2.msra.mxu0 0.0
    %3421 = vmatprep.subr.mxu0 0.0
    %3422 = vmatpush2.msra.mxu0 0.0
    %3423 = vmatprep.subr.mxu0 0.0
    %3424 = vmatpush2.msra.mxu0 0.0
    %3425 = vmatprep.subr.mxu0 0.0
    %3426 = vmatpush2.msra.mxu0 0.0
    %3427 = vmatprep.subr.mxu0 0.0
    %3428 = vmatpush2.msra.mxu0 0.0
    %3429 = vmatprep.subr.mxu0 0.0
    %3430 = vmatpush2.msra.mxu0 0.0
    %3431 = vmatprep.subr.mxu0 0.0
    %3432 = vmatpush2.msra.mxu0 0.0
    %3433 = vmatprep.subr.mxu0 0.0
    %3434 = vmatpush2.msra.mxu0 0.0
    %3435 = vmatprep.subr.mxu0 0.0
    %3436 = vmatpush2.msra.mxu0 0.0
    %3437 = vmatprep.subr.mxu0 0.0
    %3438 = vmatpush2.msra.mxu0 0.0
    %3439 = vmatprep.subr.mxu0 0.0
    %3440 = vmatpush2.msra.mxu0 0.0
    %3441 = vmatprep.subr.mxu0 0.0
    %3442 = vmatpush2.msra.mxu0 0.0
    %3443 = vmatprep.subr.mxu0 0.0
    %3444 = vmatpush2.msra.mxu0 0.0
    %3445 = vmatprep.subr.mxu0 0.0
    %3446 = vmatpush2.msra.mxu0 0.0
    %3447 = vmatprep.mubr.f32.mxu0 0.0
    %3448 = vmatmul.mubr.f32.gmra.mxu0 %v3381
    %v3449 = vpop.f32.mrf.mxu0
    %v3450 = vadd.f32 %v3304, %v3449
    %v3451 = vpop.f32.mrf.mxu0
    %3452 = vdwg.mxu0
    %v3454 = vsel %vm1182, %v3217, 0
    %3456 = vmatprep.subr.mxu0 0.0
    %3457 = vmatpush1.msra.mxu0 0.0
    %3458 = vmatprep.subr.mxu0 0.0
    %3459 = vmatpush1.msra.mxu0 0.0
    %3460 = vmatprep.subr.mxu0 0.0
    %3461 = vmatpush1.msra.mxu0 0.0
    %3462 = vmatprep.subr.mxu0 0.0
    %3463 = vmatpush1.msra.mxu0 0.0
    %3464 = vmatprep.subr.mxu0 0.0
    %3465 = vmatpush1.msra.mxu0 0.0
    %3466 = vmatprep.subr.mxu0 0.0
    %3467 = vmatpush1.msra.mxu0 0.0
    %3468 = vmatprep.subr.mxu0 0.0
    %3469 = vmatpush1.msra.mxu0 0.0
    %3470 = vmatprep.subr.mxu0 0.0
    %3471 = vmatpush1.msra.mxu0 0.0
    %3472 = vmatprep.subr.mxu0 0.0
    %3473 = vmatpush1.msra.mxu0 0.0
    %3474 = vmatprep.subr.mxu0 0.0
    %3475 = vmatpush1.msra.mxu0 0.0
    %3476 = vmatprep.subr.mxu0 0.0
    %3477 = vmatpush1.msra.mxu0 0.0
    %3478 = vmatprep.subr.mxu0 0.0
    %3479 = vmatpush1.msra.mxu0 0.0
    %3480 = vmatprep.subr.mxu0 0.0
    %3481 = vmatpush1.msra.mxu0 0.0
    %3482 = vmatprep.subr.mxu0 0.0
    %3483 = vmatpush1.msra.mxu0 0.0
    %3484 = vmatprep.subr.mxu0 0.0
    %3485 = vmatpush1.msra.mxu0 0.0
    %3486 = vmatprep.subr.mxu0 0.0
    %3487 = vmatpush1.msra.mxu0 %v3231
    %3488 = vmatprep.subr.mxu0 0.0
    %3489 = vmatpush2.msra.mxu0 0.0
    %3490 = vmatprep.subr.mxu0 0.0
    %3491 = vmatpush2.msra.mxu0 0.0
    %3492 = vmatprep.subr.mxu0 0.0
    %3493 = vmatpush2.msra.mxu0 0.0
    %3494 = vmatprep.subr.mxu0 0.0
    %3495 = vmatpush2.msra.mxu0 0.0
    %3496 = vmatprep.subr.mxu0 0.0
    %3497 = vmatpush2.msra.mxu0 0.0
    %3498 = vmatprep.subr.mxu0 0.0
    %3499 = vmatpush2.msra.mxu0 0.0
    %3500 = vmatprep.subr.mxu0 0.0
    %3501 = vmatpush2.msra.mxu0 0.0
    %3502 = vmatprep.subr.mxu0 0.0
    %3503 = vmatpush2.msra.mxu0 0.0
    %3504 = vmatprep.subr.mxu0 0.0
    %3505 = vmatpush2.msra.mxu0 0.0
    %3506 = vmatprep.subr.mxu0 0.0
    %3507 = vmatpush2.msra.mxu0 0.0
    %3508 = vmatprep.subr.mxu0 0.0
    %3509 = vmatpush2.msra.mxu0 0.0
    %3510 = vmatprep.subr.mxu0 0.0
    %3511 = vmatpush2.msra.mxu0 0.0
    %3512 = vmatprep.subr.mxu0 0.0
    %3513 = vmatpush2.msra.mxu0 0.0
    %3514 = vmatprep.subr.mxu0 0.0
    %3515 = vmatpush2.msra.mxu0 0.0
    %3516 = vmatprep.subr.mxu0 0.0
    %3517 = vmatpush2.msra.mxu0 0.0
    %3518 = vmatprep.subr.mxu0 0.0
    %3519 = vmatpush2.msra.mxu0 0.0
    %3520 = vmatprep.mubr.f32.mxu0 0.0
    %3521 = vmatmul.mubr.f32.gmra.mxu0 %v3454
    %v3522 = vpop.f32.mrf.mxu0
    %v3523 = vadd.f32 %v3377, %v3522
    %v3524 = vpop.f32.mrf.mxu0
    %3525 = vdwg.mxu0
    %v3526 = vsel %vm867, %v2520, 0.0
    %v3527 = vsel %vm867, %v2525, 0.0
    %v3529 = vsel %vm1182, %v3223, 0
    %3531 = vmatprep.subr.mxu0 0.0
    %3532 = vmatpush1.msra.mxu0 0.0
    %3533 = vmatprep.subr.mxu0 0.0
    %3534 = vmatpush1.msra.mxu0 0.0
    %3535 = vmatprep.subr.mxu0 0.0
    %3536 = vmatpush1.msra.mxu0 0.0
    %3537 = vmatprep.subr.mxu0 0.0
    %3538 = vmatpush1.msra.mxu0 0.0
    %3539 = vmatprep.subr.mxu0 0.0
    %3540 = vmatpush1.msra.mxu0 0.0
    %3541 = vmatprep.subr.mxu0 0.0
    %3542 = vmatpush1.msra.mxu0 0.0
    %3543 = vmatprep.subr.mxu0 0.0
    %3544 = vmatpush1.msra.mxu0 0.0
    %3545 = vmatprep.subr.mxu0 0.0
    %3546 = vmatpush1.msra.mxu0 0.0
    %3547 = vmatprep.subr.mxu0 0.0
    %3548 = vmatpush1.msra.mxu0 0.0
    %3549 = vmatprep.subr.mxu0 0.0
    %3550 = vmatpush1.msra.mxu0 0.0
    %3551 = vmatprep.subr.mxu0 0.0
    %3552 = vmatpush1.msra.mxu0 0.0
    %3553 = vmatprep.subr.mxu0 0.0
    %3554 = vmatpush1.msra.mxu0 0.0
    %3555 = vmatprep.subr.mxu0 0.0
    %3556 = vmatpush1.msra.mxu0 0.0
    %3557 = vmatprep.subr.mxu0 0.0
    %3558 = vmatpush1.msra.mxu0 0.0
    %3559 = vmatprep.subr.mxu0 0.0
    %3560 = vmatpush1.msra.mxu0 0.0
    %3561 = vmatprep.subr.mxu0 0.0
    %3562 = vmatpush1.msra.mxu0 %v3526
    %3563 = vmatprep.subr.mxu0 0.0
    %3564 = vmatpush2.msra.mxu0 0.0
    %3565 = vmatprep.subr.mxu0 0.0
    %3566 = vmatpush2.msra.mxu0 0.0
    %3567 = vmatprep.subr.mxu0 0.0
    %3568 = vmatpush2.msra.mxu0 0.0
    %3569 = vmatprep.subr.mxu0 0.0
    %3570 = vmatpush2.msra.mxu0 0.0
    %3571 = vmatprep.subr.mxu0 0.0
    %3572 = vmatpush2.msra.mxu0 0.0
    %3573 = vmatprep.subr.mxu0 0.0
    %3574 = vmatpush2.msra.mxu0 0.0
    %3575 = vmatprep.subr.mxu0 0.0
    %3576 = vmatpush2.msra.mxu0 0.0
    %3577 = vmatprep.subr.mxu0 0.0
    %3578 = vmatpush2.msra.mxu0 0.0
    %3579 = vmatprep.subr.mxu0 0.0
    %3580 = vmatpush2.msra.mxu0 0.0
    %3581 = vmatprep.subr.mxu0 0.0
    %3582 = vmatpush2.msra.mxu0 0.0
    %3583 = vmatprep.subr.mxu0 0.0
    %3584 = vmatpush2.msra.mxu0 0.0
    %3585 = vmatprep.subr.mxu0 0.0
    %3586 = vmatpush2.msra.mxu0 0.0
    %3587 = vmatprep.subr.mxu0 0.0
    %3588 = vmatpush2.msra.mxu0 0.0
    %3589 = vmatprep.subr.mxu0 0.0
    %3590 = vmatpush2.msra.mxu0 0.0
    %3591 = vmatprep.subr.mxu0 0.0
    %3592 = vmatpush2.msra.mxu0 0.0
    %3593 = vmatprep.subr.mxu0 0.0
    %3594 = vmatpush2.msra.mxu0 0.0
    %3595 = vmatprep.mubr.f32.mxu0 0.0
    %3596 = vmatmul.mubr.f32.gmra.mxu0 %v3529
    %v3597 = vpop.f32.mrf.mxu0
    %v3598 = vadd.f32 0.0, %v3597
    %v3599 = vpop.f32.mrf.mxu0
    %3600 = vdwg.mxu0
    %v3602 = vsel %vm1182, %v3225, 0
    %3604 = vmatprep.subr.mxu0 0.0
    %3605 = vmatpush1.msra.mxu0 0.0
    %3606 = vmatprep.subr.mxu0 0.0
    %3607 = vmatpush1.msra.mxu0 0.0
    %3608 = vmatprep.subr.mxu0 0.0
    %3609 = vmatpush1.msra.mxu0 0.0
    %3610 = vmatprep.subr.mxu0 0.0
    %3611 = vmatpush1.msra.mxu0 0.0
    %3612 = vmatprep.subr.mxu0 0.0
    %3613 = vmatpush1.msra.mxu0 0.0
    %3614 = vmatprep.subr.mxu0 0.0
    %3615 = vmatpush1.msra.mxu0 0.0
    %3616 = vmatprep.subr.mxu0 0.0
    %3617 = vmatpush1.msra.mxu0 0.0
    %3618 = vmatprep.subr.mxu0 0.0
    %3619 = vmatpush1.msra.mxu0 0.0
    %3620 = vmatprep.subr.mxu0 0.0
    %3621 = vmatpush1.msra.mxu0 0.0
    %3622 = vmatprep.subr.mxu0 0.0
    %3623 = vmatpush1.msra.mxu0 0.0
    %3624 = vmatprep.subr.mxu0 0.0
    %3625 = vmatpush1.msra.mxu0 0.0
    %3626 = vmatprep.subr.mxu0 0.0
    %3627 = vmatpush1.msra.mxu0 0.0
    %3628 = vmatprep.subr.mxu0 0.0
    %3629 = vmatpush1.msra.mxu0 0.0
    %3630 = vmatprep.subr.mxu0 0.0
    %3631 = vmatpush1.msra.mxu0 0.0
    %3632 = vmatprep.subr.mxu0 0.0
    %3633 = vmatpush1.msra.mxu0 0.0
    %3634 = vmatprep.subr.mxu0 0.0
    %3635 = vmatpush1.msra.mxu0 %v3527
    %3636 = vmatprep.subr.mxu0 0.0
    %3637 = vmatpush2.msra.mxu0 0.0
    %3638 = vmatprep.subr.mxu0 0.0
    %3639 = vmatpush2.msra.mxu0 0.0
    %3640 = vmatprep.subr.mxu0 0.0
    %3641 = vmatpush2.msra.mxu0 0.0
    %3642 = vmatprep.subr.mxu0 0.0
    %3643 = vmatpush2.msra.mxu0 0.0
    %3644 = vmatprep.subr.mxu0 0.0
    %3645 = vmatpush2.msra.mxu0 0.0
    %3646 = vmatprep.subr.mxu0 0.0
    %3647 = vmatpush2.msra.mxu0 0.0
    %3648 = vmatprep.subr.mxu0 0.0
    %3649 = vmatpush2.msra.mxu0 0.0
    %3650 = vmatprep.subr.mxu0 0.0
    %3651 = vmatpush2.msra.mxu0 0.0
    %3652 = vmatprep.subr.mxu0 0.0
    %3653 = vmatpush2.msra.mxu0 0.0
    %3654 = vmatprep.subr.mxu0 0.0
    %3655 = vmatpush2.msra.mxu0 0.0
    %3656 = vmatprep.subr.mxu0 0.0
    %3657 = vmatpush2.msra.mxu0 0.0
    %3658 = vmatprep.subr.mxu0 0.0
    %3659 = vmatpush2.msra.mxu0 0.0
    %3660 = vmatprep.subr.mxu0 0.0
    %3661 = vmatpush2.msra.mxu0 0.0
    %3662 = vmatprep.subr.mxu0 0.0
    %3663 = vmatpush2.msra.mxu0 0.0
    %3664 = vmatprep.subr.mxu0 0.0
    %3665 = vmatpush2.msra.mxu0 0.0
    %3666 = vmatprep.subr.mxu0 0.0
    %3667 = vmatpush2.msra.mxu0 0.0
    %3668 = vmatprep.mubr.f32.mxu0 0.0
    %3669 = vmatmul.mubr.f32.gmra.mxu0 %v3602
    %v3670 = vpop.f32.mrf.mxu0
    %v3671 = vadd.f32 0.0, %v3670
    %v3672 = vpop.f32.mrf.mxu0
    %3673 = vdwg.mxu0
    %v3674 = vadd.f32 %v3450, %v3598
    %v3675 = vadd.f32 %v3523, %v3671
    %v3676 = vsel %vm1017, %v2520, 0.0
    %v3677 = vsel %vm1017, %v2525, 0.0
    %v3679 = vsel %vm1182, %v3227, 0
    %3681 = vmatprep.subr.mxu0 0.0
    %3682 = vmatpush1.msra.mxu0 0.0
    %3683 = vmatprep.subr.mxu0 0.0
    %3684 = vmatpush1.msra.mxu0 0.0
    %3685 = vmatprep.subr.mxu0 0.0
    %3686 = vmatpush1.msra.mxu0 0.0
    %3687 = vmatprep.subr.mxu0 0.0
    %3688 = vmatpush1.msra.mxu0 0.0
    %3689 = vmatprep.subr.mxu0 0.0
    %3690 = vmatpush1.msra.mxu0 0.0
    %3691 = vmatprep.subr.mxu0 0.0
    %3692 = vmatpush1.msra.mxu0 0.0
    %3693 = vmatprep.subr.mxu0 0.0
    %3694 = vmatpush1.msra.mxu0 0.0
    %3695 = vmatprep.subr.mxu0 0.0
    %3696 = vmatpush1.msra.mxu0 0.0
    %3697 = vmatprep.subr.mxu0 0.0
    %3698 = vmatpush1.msra.mxu0 0.0
    %3699 = vmatprep.subr.mxu0 0.0
    %3700 = vmatpush1.msra.mxu0 0.0
    %3701 = vmatprep.subr.mxu0 0.0
    %3702 = vmatpush1.msra.mxu0 0.0
    %3703 = vmatprep.subr.mxu0 0.0
    %3704 = vmatpush1.msra.mxu0 0.0
    %3705 = vmatprep.subr.mxu0 0.0
    %3706 = vmatpush1.msra.mxu0 0.0
    %3707 = vmatprep.subr.mxu0 0.0
    %3708 = vmatpush1.msra.mxu0 0.0
    %3709 = vmatprep.subr.mxu0 0.0
    %3710 = vmatpush1.msra.mxu0 0.0
    %3711 = vmatprep.subr.mxu0 0.0
    %3712 = vmatpush1.msra.mxu0 %v3676
    %3713 = vmatprep.subr.mxu0 0.0
    %3714 = vmatpush2.msra.mxu0 0.0
    %3715 = vmatprep.subr.mxu0 0.0
    %3716 = vmatpush2.msra.mxu0 0.0
    %3717 = vmatprep.subr.mxu0 0.0
    %3718 = vmatpush2.msra.mxu0 0.0
    %3719 = vmatprep.subr.mxu0 0.0
    %3720 = vmatpush2.msra.mxu0 0.0
    %3721 = vmatprep.subr.mxu0 0.0
    %3722 = vmatpush2.msra.mxu0 0.0
    %3723 = vmatprep.subr.mxu0 0.0
    %3724 = vmatpush2.msra.mxu0 0.0
    %3725 = vmatprep.subr.mxu0 0.0
    %3726 = vmatpush2.msra.mxu0 0.0
    %3727 = vmatprep.subr.mxu0 0.0
    %3728 = vmatpush2.msra.mxu0 0.0
    %3729 = vmatprep.subr.mxu0 0.0
    %3730 = vmatpush2.msra.mxu0 0.0
    %3731 = vmatprep.subr.mxu0 0.0
    %3732 = vmatpush2.msra.mxu0 0.0
    %3733 = vmatprep.subr.mxu0 0.0
    %3734 = vmatpush2.msra.mxu0 0.0
    %3735 = vmatprep.subr.mxu0 0.0
    %3736 = vmatpush2.msra.mxu0 0.0
    %3737 = vmatprep.subr.mxu0 0.0
    %3738 = vmatpush2.msra.mxu0 0.0
    %3739 = vmatprep.subr.mxu0 0.0
    %3740 = vmatpush2.msra.mxu0 0.0
    %3741 = vmatprep.subr.mxu0 0.0
    %3742 = vmatpush2.msra.mxu0 0.0
    %3743 = vmatprep.subr.mxu0 0.0
    %3744 = vmatpush2.msra.mxu0 0.0
    %3745 = vmatprep.mubr.f32.mxu0 0.0
    %3746 = vmatmul.mubr.f32.gmra.mxu0 %v3679
    %v3747 = vpop.f32.mrf.mxu0
    %v3748 = vadd.f32 0.0, %v3747
    %v3749 = vpop.f32.mrf.mxu0
    %3750 = vdwg.mxu0
    %v3752 = vsel %vm1182, %v3229, 0
    %3754 = vmatprep.subr.mxu0 0.0
    %3755 = vmatpush1.msra.mxu0 0.0
    %3756 = vmatprep.subr.mxu0 0.0
    %3757 = vmatpush1.msra.mxu0 0.0
    %3758 = vmatprep.subr.mxu0 0.0
    %3759 = vmatpush1.msra.mxu0 0.0
    %3760 = vmatprep.subr.mxu0 0.0
    %3761 = vmatpush1.msra.mxu0 0.0
    %3762 = vmatprep.subr.mxu0 0.0
    %3763 = vmatpush1.msra.mxu0 0.0
    %3764 = vmatprep.subr.mxu0 0.0
    %3765 = vmatpush1.msra.mxu0 0.0
    %3766 = vmatprep.subr.mxu0 0.0
    %3767 = vmatpush1.msra.mxu0 0.0
    %3768 = vmatprep.subr.mxu0 0.0
    %3769 = vmatpush1.msra.mxu0 0.0
    %3770 = vmatprep.subr.mxu0 0.0
    %3771 = vmatpush1.msra.mxu0 0.0
    %3772 = vmatprep.subr.mxu0 0.0
    %3773 = vmatpush1.msra.mxu0 0.0
    %3774 = vmatprep.subr.mxu0 0.0
    %3775 = vmatpush1.msra.mxu0 0.0
    %3776 = vmatprep.subr.mxu0 0.0
    %3777 = vmatpush1.msra.mxu0 0.0
    %3778 = vmatprep.subr.mxu0 0.0
    %3779 = vmatpush1.msra.mxu0 0.0
    %3780 = vmatprep.subr.mxu0 0.0
    %3781 = vmatpush1.msra.mxu0 0.0
    %3782 = vmatprep.subr.mxu0 0.0
    %3783 = vmatpush1.msra.mxu0 0.0
    %3784 = vmatprep.subr.mxu0 0.0
    %3785 = vmatpush1.msra.mxu0 %v3677
    %3786 = vmatprep.subr.mxu0 0.0
    %3787 = vmatpush2.msra.mxu0 0.0
    %3788 = vmatprep.subr.mxu0 0.0
    %3789 = vmatpush2.msra.mxu0 0.0
    %3790 = vmatprep.subr.mxu0 0.0
    %3791 = vmatpush2.msra.mxu0 0.0
    %3792 = vmatprep.subr.mxu0 0.0
    %3793 = vmatpush2.msra.mxu0 0.0
    %3794 = vmatprep.subr.mxu0 0.0
    %3795 = vmatpush2.msra.mxu0 0.0
    %3796 = vmatprep.subr.mxu0 0.0
    %3797 = vmatpush2.msra.mxu0 0.0
    %3798 = vmatprep.subr.mxu0 0.0
    %3799 = vmatpush2.msra.mxu0 0.0
    %3800 = vmatprep.subr.mxu0 0.0
    %3801 = vmatpush2.msra.mxu0 0.0
    %3802 = vmatprep.subr.mxu0 0.0
    %3803 = vmatpush2.msra.mxu0 0.0
    %3804 = vmatprep.subr.mxu0 0.0
    %3805 = vmatpush2.msra.mxu0 0.0
    %3806 = vmatprep.subr.mxu0 0.0
    %3807 = vmatpush2.msra.mxu0 0.0
    %3808 = vmatprep.subr.mxu0 0.0
    %3809 = vmatpush2.msra.mxu0 0.0
    %3810 = vmatprep.subr.mxu0 0.0
    %3811 = vmatpush2.msra.mxu0 0.0
    %3812 = vmatprep.subr.mxu0 0.0
    %3813 = vmatpush2.msra.mxu0 0.0
    %3814 = vmatprep.subr.mxu0 0.0
    %3815 = vmatpush2.msra.mxu0 0.0
    %3816 = vmatprep.subr.mxu0 0.0
    %3817 = vmatpush2.msra.mxu0 0.0
    %3818 = vmatprep.mubr.f32.mxu0 0.0
    %3819 = vmatmul.mubr.f32.gmra.mxu0 %v3752
    %v3820 = vpop.f32.mrf.mxu0
    %v3821 = vadd.f32 0.0, %v3820
    %v3822 = vpop.f32.mrf.mxu0
    %3823 = vdwg.mxu0
    %v3824 = vadd.f32 %v3674, %v3748
    %v3825 = vadd.f32 %v3675, %v3821
    %s3826 = scalar_lea.vmem [#allocation13], 32
    %v3827 = vld [vmem:[%s3826] sm:$0xff]
    %v3828 = vld [vmem:[%s3826 + $0x8] sm:$0xff]
    %v3829 = vld [vmem:[%s3826 + $0x10] sm:$0xff]
    %v3830 = vld [vmem:[%s3826 + $0x18] sm:$0xff]
    %s3831 = scalar_lea.vmem %s13, 1
    %v3832 = vld [vmem:[%s3831] sm:$0x1]
    %v3834 = vlaneseq
    %v3835 = vshrl.u32 %v3834, 7
    %v3836 = vsub.s32 0, %v3835
    %v3837 = vrot.slane %v3832, %v3836
    %v3840 = vsel %vm252, %v3824, 0
    %v3843 = vsel %vm252, %v3825, 0
    %3845 = vmatprep.subr.mxu0 0.0
    %3846 = vmatpush1.msra.mxu0 0.0
    %3847 = vmatprep.subr.mxu0 0.0
    %3848 = vmatpush1.msra.mxu0 0.0
    %3849 = vmatprep.subr.mxu0 0.0
    %3850 = vmatpush1.msra.mxu0 0.0
    %3851 = vmatprep.subr.mxu0 0.0
    %3852 = vmatpush1.msra.mxu0 0.0
    %3853 = vmatprep.subr.mxu0 0.0
    %3854 = vmatpush1.msra.mxu0 0.0
    %3855 = vmatprep.subr.mxu0 0.0
    %3856 = vmatpush1.msra.mxu0 0.0
    %3857 = vmatprep.subr.mxu0 0.0
    %3858 = vmatpush1.msra.mxu0 0.0
    %3859 = vmatprep.subr.mxu0 0.0
    %3860 = vmatpush1.msra.mxu0 0.0
    %3861 = vmatprep.subr.mxu0 0.0
    %3862 = vmatpush1.msra.mxu0 0.0
    %3863 = vmatprep.subr.mxu0 0.0
    %3864 = vmatpush1.msra.mxu0 0.0
    %3865 = vmatprep.subr.mxu0 0.0
    %3866 = vmatpush1.msra.mxu0 0.0
    %3867 = vmatprep.subr.mxu0 0.0
    %3868 = vmatpush1.msra.mxu0 0.0
    %3869 = vmatprep.subr.mxu0 0.0
    %3870 = vmatpush1.msra.mxu0 %v3830
    %3871 = vmatprep.subr.mxu0 0.0
    %3872 = vmatpush1.msra.mxu0 %v3829
    %3873 = vmatprep.subr.mxu0 0.0
    %3874 = vmatpush1.msra.mxu0 %v3828
    %3875 = vmatprep.subr.mxu0 0.0
    %3876 = vmatpush1.msra.mxu0 %v3827
    %3877 = vmatprep.subr.mxu0 0.0
    %3878 = vmatpush2.msra.mxu0 0.0
    %3879 = vmatprep.subr.mxu0 0.0
    %3880 = vmatpush2.msra.mxu0 0.0
    %3881 = vmatprep.subr.mxu0 0.0
    %3882 = vmatpush2.msra.mxu0 0.0
    %3883 = vmatprep.subr.mxu0 0.0
    %3884 = vmatpush2.msra.mxu0 0.0
    %3885 = vmatprep.subr.mxu0 0.0
    %3886 = vmatpush2.msra.mxu0 0.0
    %3887 = vmatprep.subr.mxu0 0.0
    %3888 = vmatpush2.msra.mxu0 0.0
    %3889 = vmatprep.subr.mxu0 0.0
    %3890 = vmatpush2.msra.mxu0 0.0
    %3891 = vmatprep.subr.mxu0 0.0
    %3892 = vmatpush2.msra.mxu0 0.0
    %3893 = vmatprep.subr.mxu0 0.0
    %3894 = vmatpush2.msra.mxu0 0.0
    %3895 = vmatprep.subr.mxu0 0.0
    %3896 = vmatpush2.msra.mxu0 0.0
    %3897 = vmatprep.subr.mxu0 0.0
    %3898 = vmatpush2.msra.mxu0 0.0
    %3899 = vmatprep.subr.mxu0 0.0
    %3900 = vmatpush2.msra.mxu0 0.0
    %3901 = vmatprep.subr.mxu0 0.0
    %3902 = vmatpush2.msra.mxu0 0.0
    %3903 = vmatprep.subr.mxu0 0.0
    %3904 = vmatpush2.msra.mxu0 0.0
    %3905 = vmatprep.subr.mxu0 0.0
    %3906 = vmatpush2.msra.mxu0 0.0
    %3907 = vmatprep.subr.mxu0 0.0
    %3908 = vmatpush2.msra.mxu0 0.0
    %3909 = vmatprep.mubr.f32.mxu0 0.0
    %3910 = vmatmul.mubr.f32.gmra.mxu0 %v3840
    %v3911 = vpop.f32.mrf.mxu0
    %v3912 = vadd.f32 %v3837, %v3911
    %v3913 = vpop.f32.mrf.mxu0
    %3914 = vmatprep.mubr.f32.mxu0 0.0
    %3915 = vmatmul.mubr.f32.gmra.mxu0 %v3843
    %v3916 = vpop.f32.mrf.mxu0
    %v3917 = vadd.f32 %v3837, %v3916
    %v3918 = vpop.f32.mrf.mxu0
    %3919 = vdwg.mxu0
    %v3920 = vadd.f32 %v2256, %v3912
    %v3921 = vadd.f32 %v2257, %v3917
    %s3922 = scalar_lea.vmem %s14, 1
    %v3923 = vld [vmem:[%s3922] sm:$0x1]
    %s3924 = scalar_lea.vmem %s15, 1
    %v3925 = vld [vmem:[%s3924] sm:$0x1]
    %v3926 = vsel %vm252, %v3920, 0.0
    %3927 = vadd.xlane.f32.xlu0 %v3926
    %v3928 = vpop.xlane.xlu0 %3927
    %v3929 = vsel %vm252, %v3921, 0.0
    %3930 = vadd.xlane.f32.xlu0 %v3929
    %v3931 = vpop.xlane.xlu0 %3930
    %v3932 = vmul.f32 %v3928, %v259
    %v3933 = vmul.f32 %v3931, %v259
    %v3934 = vsub.f32 %v3920, %v3932
    %v3935 = vsub.f32 %v3921, %v3933
    %v3936 = vmul.f32 %v3934, %v3934
    %v3937 = vmul.f32 %v3935, %v3935
    %v3938 = vsel %vm252, %v3936, 0.0
    %3939 = vadd.xlane.f32.xlu0 %v3938
    %v3940 = vpop.xlane.xlu0 %3939
    %v3941 = vsel %vm252, %v3937, 0.0
    %3942 = vadd.xlane.f32.xlu0 %v3941
    %v3943 = vpop.xlane.xlu0 %3942
    %v3944 = vmul.f32 %v3940, %v259
    %v3945 = vmul.f32 %v3943, %v259
    %v3946 = vadd.f32 %v3944, 1e-12
    %v3947 = vadd.f32 %v3945, 1e-12
    %v3948 = vrsqrt.pop %v3946
    %v3949 = vrsqrt.pop %v3947
    %v3950 = vmul.f32 %v3934, %v3948
    %v3951 = vmul.f32 %v3935, %v3949
    %v3953 = vlaneseq
    %v3954 = vshrl.u32 %v3953, 7
    %v3955 = vsub.s32 0, %v3954
    %v3956 = vrot.slane %v3923, %v3955
    %v3958 = vmul.f32 %v3950, %v3956
    %v3959 = vmul.f32 %v3951, %v3956
    %v3961 = vlaneseq
    %v3962 = vshrl.u32 %v3961, 7
    %v3963 = vsub.s32 0, %v3962
    %v3964 = vrot.slane %v3925, %v3963
    %v3966 = vadd.f32 %v3958, %v3964
    %v3967 = vadd.f32 %v3959, %v3964
    %s3968 = scalar_lea.vmem [#allocation14], 32
    %v3969 = vld [vmem:[%s3968] sm:$0xff]
    %v3970 = vld [vmem:[%s3968 + $0x8] sm:$0xff]
    %v3971 = vld [vmem:[%s3968 + $0x10] sm:$0xff]
    %v3972 = vld [vmem:[%s3968 + $0x18] sm:$0xff]
    %s3973 = scalar_lea.vmem %s17, 1
    %v3974 = vld [vmem:[%s3973] sm:$0x1]
    %v3976 = vlaneseq
    %v3977 = vshrl.u32 %v3976, 7
    %v3978 = vsub.s32 0, %v3977
    %v3979 = vrot.slane %v3974, %v3978
    %v3982 = vsel %vm252, %v3966, 0
    %v3985 = vsel %vm252, %v3967, 0
    %3987 = vmatprep.subr.mxu0 0.0
    %3988 = vmatpush1.msra.mxu0 0.0
    %3989 = vmatprep.subr.mxu0 0.0
    %3990 = vmatpush1.msra.mxu0 0.0
    %3991 = vmatprep.subr.mxu0 0.0
    %3992 = vmatpush1.msra.mxu0 0.0
    %3993 = vmatprep.subr.mxu0 0.0
    %3994 = vmatpush1.msra.mxu0 0.0
    %3995 = vmatprep.subr.mxu0 0.0
    %3996 = vmatpush1.msra.mxu0 0.0
    %3997 = vmatprep.subr.mxu0 0.0
    %3998 = vmatpush1.msra.mxu0 0.0
    %3999 = vmatprep.subr.mxu0 0.0
    %4000 = vmatpush1.msra.mxu0 0.0
    %4001 = vmatprep.subr.mxu0 0.0
    %4002 = vmatpush1.msra.mxu0 0.0
    %4003 = vmatprep.subr.mxu0 0.0
    %4004 = vmatpush1.msra.mxu0 0.0
    %4005 = vmatprep.subr.mxu0 0.0
    %4006 = vmatpush1.msra.mxu0 0.0
    %4007 = vmatprep.subr.mxu0 0.0
    %4008 = vmatpush1.msra.mxu0 0.0
    %4009 = vmatprep.subr.mxu0 0.0
    %4010 = vmatpush1.msra.mxu0 0.0
    %4011 = vmatprep.subr.mxu0 0.0
    %4012 = vmatpush1.msra.mxu0 %v3972
    %4013 = vmatprep.subr.mxu0 0.0
    %4014 = vmatpush1.msra.mxu0 %v3971
    %4015 = vmatprep.subr.mxu0 0.0
    %4016 = vmatpush1.msra.mxu0 %v3970
    %4017 = vmatprep.subr.mxu0 0.0
    %4018 = vmatpush1.msra.mxu0 %v3969
    %4019 = vmatprep.subr.mxu0 0.0
    %4020 = vmatpush2.msra.mxu0 0.0
    %4021 = vmatprep.subr.mxu0 0.0
    %4022 = vmatpush2.msra.mxu0 0.0
    %4023 = vmatprep.subr.mxu0 0.0
    %4024 = vmatpush2.msra.mxu0 0.0
    %4025 = vmatprep.subr.mxu0 0.0
    %4026 = vmatpush2.msra.mxu0 0.0
    %4027 = vmatprep.subr.mxu0 0.0
    %4028 = vmatpush2.msra.mxu0 0.0
    %4029 = vmatprep.subr.mxu0 0.0
    %4030 = vmatpush2.msra.mxu0 0.0
    %4031 = vmatprep.subr.mxu0 0.0
    %4032 = vmatpush2.msra.mxu0 0.0
    %4033 = vmatprep.subr.mxu0 0.0
    %4034 = vmatpush2.msra.mxu0 0.0
    %4035 = vmatprep.subr.mxu0 0.0
    %4036 = vmatpush2.msra.mxu0 0.0
    %4037 = vmatprep.subr.mxu0 0.0
    %4038 = vmatpush2.msra.mxu0 0.0
    %4039 = vmatprep.subr.mxu0 0.0
    %4040 = vmatpush2.msra.mxu0 0.0
    %4041 = vmatprep.subr.mxu0 0.0
    %4042 = vmatpush2.msra.mxu0 0.0
    %4043 = vmatprep.subr.mxu0 0.0
    %4044 = vmatpush2.msra.mxu0 0.0
    %4045 = vmatprep.subr.mxu0 0.0
    %4046 = vmatpush2.msra.mxu0 0.0
    %4047 = vmatprep.subr.mxu0 0.0
    %4048 = vmatpush2.msra.mxu0 0.0
    %4049 = vmatprep.subr.mxu0 0.0
    %4050 = vmatpush2.msra.mxu0 0.0
    %4051 = vmatprep.mubr.f32.mxu0 0.0
    %4052 = vmatmul.mubr.f32.gmra.mxu0 %v3982
    %v4053 = vpop.f32.mrf.mxu0
    %v4054 = vadd.f32 %v3979, %v4053
    %v4055 = vpop.f32.mrf.mxu0
    %4056 = vmatprep.mubr.f32.mxu0 0.0
    %4057 = vmatmul.mubr.f32.gmra.mxu0 %v3985
    %v4058 = vpop.f32.mrf.mxu0
    %v4059 = vadd.f32 %v3979, %v4058
    %v4060 = vpop.f32.mrf.mxu0
    %4061 = vdwg.mxu0
    %v4062 = vmul.f32 %v4054, 0.5
    %v4063 = vmul.f32 %v4059, 0.5
    %v4064 = vmul.f32 %v4054, 0.044715
    %v4065 = vmul.f32 %v4059, 0.044715
    %v4066 = vmul.f32 %v4064, %v4054
    %v4067 = vmul.f32 %v4065, %v4059
    %v4068 = vmul.f32 %v4066, %v4054
    %v4069 = vmul.f32 %v4067, %v4059
    %v4070 = vadd.f32 %v4054, %v4068
    %v4071 = vadd.f32 %v4059, %v4069
    %v4072 = vmul.f32 %v4070, 0.7978846
    %v4073 = vmul.f32 %v4071, 0.7978846
    %v4074 = vtanh.pop %v4072
    %v4075 = vtanh.pop %v4073
    %v4076 = vadd.f32 %v4074, 1.0
    %v4077 = vadd.f32 %v4075, 1.0
    %v4078 = vmul.f32 %v4062, %v4076
    %v4079 = vmul.f32 %v4063, %v4077
    %s4080 = scalar_lea.vmem %s18, 64
    %v4081 = vld [vmem:[%s4080] sm:$0xff]
    %v4082 = vld [vmem:[%s4080 + $0x8] sm:$0xff]
    %v4083 = vld [vmem:[%s4080 + $0x10] sm:$0xff]
    %v4084 = vld [vmem:[%s4080 + $0x18] sm:$0xff]
    %v4085 = vld [vmem:[%s4080 + $0x20] sm:$0xff]
    %v4086 = vld [vmem:[%s4080 + $0x28] sm:$0xff]
    %v4087 = vld [vmem:[%s4080 + $0x30] sm:$0xff]
    %v4088 = vld [vmem:[%s4080 + $0x38] sm:$0xff]
    %s4089 = scalar_lea.vmem %s19, 1
    %v4090 = vld [vmem:[%s4089] sm:$0x1]
    %v4092 = vlaneseq
    %v4093 = vshrl.u32 %v4092, 7
    %v4094 = vsub.s32 0, %v4093
    %v4095 = vrot.slane %v4090, %v4094
    %v4098 = vsel %vm2130, %v4078, 0
    %v4101 = vsel %vm2130, %v4079, 0
    %4103 = vmatprep.subr.mxu0 0.0
    %4104 = vmatpush1.msra.mxu0 0.0
    %4105 = vmatprep.subr.mxu0 0.0
    %4106 = vmatpush1.msra.mxu0 0.0
    %4107 = vmatprep.subr.mxu0 0.0
    %4108 = vmatpush1.msra.mxu0 0.0
    %4109 = vmatprep.subr.mxu0 0.0
    %4110 = vmatpush1.msra.mxu0 0.0
    %4111 = vmatprep.subr.mxu0 0.0
    %4112 = vmatpush1.msra.mxu0 0.0
    %4113 = vmatprep.subr.mxu0 0.0
    %4114 = vmatpush1.msra.mxu0 0.0
    %4115 = vmatprep.subr.mxu0 0.0
    %4116 = vmatpush1.msra.mxu0 0.0
    %4117 = vmatprep.subr.mxu0 0.0
    %4118 = vmatpush1.msra.mxu0 0.0
    %4119 = vmatprep.subr.mxu0 0.0
    %4120 = vmatpush1.msra.mxu0 %v4088
    %4121 = vmatprep.subr.mxu0 0.0
    %4122 = vmatpush1.msra.mxu0 %v4087
    %4123 = vmatprep.subr.mxu0 0.0
    %4124 = vmatpush1.msra.mxu0 %v4086
    %4125 = vmatprep.subr.mxu0 0.0
    %4126 = vmatpush1.msra.mxu0 %v4085
    %4127 = vmatprep.subr.mxu0 0.0
    %4128 = vmatpush1.msra.mxu0 %v4084
    %4129 = vmatprep.subr.mxu0 0.0
    %4130 = vmatpush1.msra.mxu0 %v4083
    %4131 = vmatprep.subr.mxu0 0.0
    %4132 = vmatpush1.msra.mxu0 %v4082
    %4133 = vmatprep.subr.mxu0 0.0
    %4134 = vmatpush1.msra.mxu0 %v4081
    %4135 = vmatprep.subr.mxu0 0.0
    %4136 = vmatpush2.msra.mxu0 0.0
    %4137 = vmatprep.subr.mxu0 0.0
    %4138 = vmatpush2.msra.mxu0 0.0
    %4139 = vmatprep.subr.mxu0 0.0
    %4140 = vmatpush2.msra.mxu0 0.0
    %4141 = vmatprep.subr.mxu0 0.0
    %4142 = vmatpush2.msra.mxu0 0.0
    %4143 = vmatprep.subr.mxu0 0.0
    %4144 = vmatpush2.msra.mxu0 0.0
    %4145 = vmatprep.subr.mxu0 0.0
    %4146 = vmatpush2.msra.mxu0 0.0
    %4147 = vmatprep.subr.mxu0 0.0
    %4148 = vmatpush2.msra.mxu0 0.0
    %4149 = vmatprep.subr.mxu0 0.0
    %4150 = vmatpush2.msra.mxu0 0.0
    %4151 = vmatprep.subr.mxu0 0.0
    %4152 = vmatpush2.msra.mxu0 0.0
    %4153 = vmatprep.subr.mxu0 0.0
    %4154 = vmatpush2.msra.mxu0 0.0
    %4155 = vmatprep.subr.mxu0 0.0
    %4156 = vmatpush2.msra.mxu0 0.0
    %4157 = vmatprep.subr.mxu0 0.0
    %4158 = vmatpush2.msra.mxu0 0.0
    %4159 = vmatprep.subr.mxu0 0.0
    %4160 = vmatpush2.msra.mxu0 0.0
    %4161 = vmatprep.subr.mxu0 0.0
    %4162 = vmatpush2.msra.mxu0 0.0
    %4163 = vmatprep.subr.mxu0 0.0
    %4164 = vmatpush2.msra.mxu0 0.0
    %4165 = vmatprep.subr.mxu0 0.0
    %4166 = vmatpush2.msra.mxu0 0.0
    %4167 = vmatprep.mubr.f32.mxu0 0.0
    %4168 = vmatmul.mubr.f32.gmra.mxu0 %v4098
    %v4169 = vpop.f32.mrf.mxu0
    %v4170 = vadd.f32 %v4095, %v4169
    %v4171 = vpop.f32.mrf.mxu0
    %4172 = vmatprep.mubr.f32.mxu0 0.0
    %4173 = vmatmul.mubr.f32.gmra.mxu0 %v4101
    %v4174 = vpop.f32.mrf.mxu0
    %v4175 = vadd.f32 %v4095, %v4174
    %v4176 = vpop.f32.mrf.mxu0
    %4177 = vdwg.mxu0
    %v4178 = vadd.f32 %v3966, %v4170
    %v4179 = vadd.f32 %v3967, %v4175
    %s4180 = scalar_lea.vmem %s20, 1
    %v4181 = vld [vmem:[%s4180] sm:$0x1]
    %s4182 = scalar_lea.vmem %s21, 1
    %v4183 = vld [vmem:[%s4182] sm:$0x1]
    %v4184 = vsel %vm252, %v4178, 0.0
    %4185 = vadd.xlane.f32.xlu0 %v4184
    %v4186 = vpop.xlane.xlu0 %4185
    %v4187 = vsel %vm252, %v4179, 0.0
    %4188 = vadd.xlane.f32.xlu0 %v4187
    %v4189 = vpop.xlane.xlu0 %4188
    %v4190 = vmul.f32 %v4186, %v259
    %v4191 = vmul.f32 %v4189, %v259
    %v4192 = vsub.f32 %v4178, %v4190
    %v4193 = vsub.f32 %v4179, %v4191
    %v4194 = vmul.f32 %v4192, %v4192
    %v4195 = vmul.f32 %v4193, %v4193
    %v4196 = vsel %vm252, %v4194, 0.0
    %4197 = vadd.xlane.f32.xlu0 %v4196
    %v4198 = vpop.xlane.xlu0 %4197
    %v4199 = vsel %vm252, %v4195, 0.0
    %4200 = vadd.xlane.f32.xlu0 %v4199
    %v4201 = vpop.xlane.xlu0 %4200
    %v4202 = vmul.f32 %v4198, %v259
    %v4203 = vmul.f32 %v4201, %v259
    %v4204 = vadd.f32 %v4202, 1e-12
    %v4205 = vadd.f32 %v4203, 1e-12
    %v4206 = vrsqrt.pop %v4204
    %v4207 = vrsqrt.pop %v4205
    %v4208 = vmul.f32 %v4192, %v4206
    %v4209 = vmul.f32 %v4193, %v4207
    %v4211 = vlaneseq
    %v4212 = vshrl.u32 %v4211, 7
    %v4213 = vsub.s32 0, %v4212
    %v4214 = vrot.slane %v4181, %v4213
    %v4216 = vmul.f32 %v4208, %v4214
    %v4217 = vmul.f32 %v4209, %v4214
    %v4219 = vlaneseq
    %v4220 = vshrl.u32 %v4219, 7
    %v4221 = vsub.s32 0, %v4220
    %v4222 = vrot.slane %v4183, %v4221
    %v4224 = vadd.f32 %v4216, %v4222
    %v4225 = vadd.f32 %v4217, %v4222
    %4226 = vst.msk [vmem:[#allocation16] sm:$0xff] %vm252, %v4224
    %4227 = vst.msk [vmem:[#allocation16 + $0x8] sm:$0xff] %vm252, %v4225
    // Predicated region
    $region122: #{tpu_custom_call.1} parent=1 // pred_check
      _
    $region123: #{tpu_custom_call.1} parent=1 // pred_check_branch
      %4229 = sbr.rel (0) target = $region125
    $region124: #{tpu_custom_call.1} parent=1 // pred_region
      %s4231 = ssub.s32 256, 256
      %4232 = vsyncadd [#allocation4], %s4231
      %s4233 = sshll.u32 [#allocation16], 4
      %s4234 = int_to_ptr.vmem [resolvable:$true] %s4233
      %4239 = dma.vmem_to_hbm [thread:$0]  %s4234, 256, %s22, [#allocation4], 128, 128, 8
    $region125: #{tpu_custom_call.1} parent=1 // pred_fallthru
      _
    // Predicated region
    $region126: #{tpu_custom_call.1} parent=1 // pred_check
      _
    $region127: #{tpu_custom_call.1} parent=1 // pred_check_branch
      %4241 = sbr.rel (0) target = $region129
    $region128: #{tpu_custom_call.1} parent=1 // pred_region
      %4242 = dma.done [#allocation4], 256
    $region129: #{tpu_custom_call.1} parent=1 // pred_fallthru
      _
    %4243 = vsyncpa [#allocation3], 1
    %4244 = vsyncpa [#allocation6], 1
    %4245 = vsyncpa [#allocation9], 1
    %4246 = vsyncpa [#allocation12], 1
    %4247 = vsyncpa [#allocation15], 1
    %4248 = vsyncpa [#allocation4], 1

</llo_original>
